<compile_context>
chip_gen: v6e
topology: v6e:2x2x1
jax: 0.10.0
libtpu: 0.0.40
codegen_flags: <defaults>
</compile_context>

<pallas_src>
import numpy as np
import jax
import jax.numpy as jnp
from jax.experimental import pallas as pl
from jax.experimental.pallas import tpu as pltpu

EPS = 1e-5


# --------------------------------------------------------------------------
# Pallas kernel
# --------------------------------------------------------------------------
def make_bottleneck_kernel(stride: int, downsample: bool):
    def kernel(*refs):
        if downsample:
            (x_ref, xs_ref, w1_ref, s1_ref, b1_ref, w2_ref, s2_ref, b2_ref,
             w3_ref, s3_ref, b3_ref, wsc_ref, ssc_ref, bsc_ref,
             o_ref, pad_ref, patch_ref) = refs
        else:
            (x_ref, w1_ref, s1_ref, b1_ref, w2_ref, s2_ref, b2_ref,
             w3_ref, s3_ref, b3_ref, o_ref, pad_ref, patch_ref) = refs

        _, H, W, Cin = x_ref.shape
        _, Ho, Wo, PE = o_ref.shape
        P = w1_ref.shape[1]
        HW, HoWo = H * W, Ho * Wo

        # ---- conv1x1 reduce -> BN -> ReLU (bf16 MXU, f32 accumulate) ----
        x2d = x_ref[...].reshape(HW, Cin)                       # bf16
        t1 = jnp.dot(x2d, w1_ref[...], preferred_element_type=jnp.float32)
        t1 = jnp.maximum(t1 * s1_ref[...] + b1_ref[...], 0.0)   # (HW, P) f32

        # ---- conv3x3 (stride, pad=1) via padded scratch + im2col patch ----
        pad_ref[...] = jnp.zeros_like(pad_ref)
        if stride == 1:
            # scratch: (H+2, W+2, P), interior at offset 1
            pad_ref[1:H + 1, 1:W + 1, :] = t1.reshape(H, W, P)
            for dy in range(3):
                for dx in range(3):
                    t = dy * 3 + dx
                    tap = pad_ref[dy:dy + Ho, dx:dx + Wo, :]        # (Ho, Wo, P)
                    patch_ref[:, t * P:(t + 1) * P] = tap.reshape(HoWo, P)
        else:
            # stride == 2: scratch is (H//2+2, 2, W//2+2, 2, P) with the t1
            # interior placed at an even padded offset (2), so each tap is a
            # contiguous (pair-range, parity) slice -- no strided loads.
            pad_ref[1:1 + H // 2, :, 1:1 + W // 2, :, :] = (
                t1.reshape(H // 2, 2, W // 2, 2, P))
            for dy in range(3):
                for dx in range(3):
                    t = dy * 3 + dx
                    a, pr = (dy + 1) // 2, (dy + 1) % 2
                    b, pc = (dx + 1) // 2, (dx + 1) % 2
                    tap = pad_ref[a:a + Ho, pr:pr + 1,
                                  b:b + Wo, pc:pc + 1, :]           # (Ho,1,Wo,1,P)
                    patch_ref[:, t * P:(t + 1) * P] = tap.reshape(HoWo, P)

        patch = patch_ref[...].astype(jnp.bfloat16)             # (HoWo, 9P)
        t2 = jnp.dot(patch, w2_ref[...], preferred_element_type=jnp.float32)
        t2 = jnp.maximum(t2 * s2_ref[...] + b2_ref[...], 0.0)   # (HoWo, P)

        # ---- conv1x1 expand -> BN ----
        t3 = jnp.dot(t2.astype(jnp.bfloat16), w3_ref[...],
                     preferred_element_type=jnp.float32)
        t3 = t3 * s3_ref[...] + b3_ref[...]                     # (HoWo, PE)

        # ---- shortcut ----
        if downsample:
            # xs was strided-sliced by XLA in the wrapper.
            xs2d = xs_ref[...].reshape(HoWo, Cin)
            res = jnp.dot(xs2d, wsc_ref[...],
                          preferred_element_type=jnp.float32)
            res = res * ssc_ref[...] + bsc_ref[...]
        else:
            res = x2d.astype(jnp.float32)                       # identity

        o_ref[...] = jnp.maximum(t3 + res, 0.0).reshape(1, Ho, Wo, PE)

    return kernel


def bottleneck_pallas(x_nhwc, params, *, stride, downsample):
    """x_nhwc: (N, H, W, Cin) bfloat16.  Returns (N, Ho, Wo, P*E) float32."""
    N, H, W, Cin = x_nhwc.shape
    P = params["w1"].shape[1]
    PE = params["w3"].shape[1]

    if stride == 1:
        Ho, Wo = H, W
    else:
        assert stride == 2 and H % 2 == 0 and W % 2 == 0, \
            "stride-2 path requires even spatial dims"
        Ho, Wo = H // 2, W // 2
    if not downsample:
        assert stride == 1 and Cin == PE, \
            "identity shortcut requires stride==1 and in_channel == place*expansion"

    # (3,3,P,P) HWIO -> (9P, P); row order (ky, kx, cin) matches tap packing.
    w2_packed = params["w2"].reshape(9 * P, P)

    def const_spec(a):
        nd = a.ndim
        # Block index never changes -> effectively resident constants.
        return pl.BlockSpec(a.shape, lambda n, _nd=nd: (0,) * _nd)

    ins = [x_nhwc]
    in_specs = [pl.BlockSpec((1, H, W, Cin), lambda n: (n, 0, 0, 0))]
    if downsample:
        xs = x_nhwc[:, ::stride, ::stride, :]   # strided slice done by XLA
        ins.append(xs)
        in_specs.append(pl.BlockSpec((1, Ho, Wo, Cin), lambda n: (n, 0, 0, 0)))

    consts = [params["w1"], params["s1"], params["b1"],
              w2_packed, params["s2"], params["b2"],
              params["w3"], params["s3"], params["b3"]]
    if downsample:
        consts += [params["wsc"], params["ssc"], params["bsc"]]
    ins += consts
    in_specs += [const_spec(a) for a in consts]

    if stride == 1:
        pad_shape = (H + 2, W + 2, P)
    else:
        pad_shape = (H // 2 + 2, 2, W // 2 + 2, 2, P)

    return pl.pallas_call(
        make_bottleneck_kernel(stride, downsample),
        out_shape=jax.ShapeDtypeStruct((N, Ho, Wo, PE), jnp.float32),
        grid_spec=pltpu.PrefetchScalarGridSpec(
            num_scalar_prefetch=0,
            grid=(N,),
            in_specs=in_specs,
            out_specs=pl.BlockSpec((1, Ho, Wo, PE), lambda n: (n, 0, 0, 0)),
            scratch_shapes=[pltpu.VMEM(pad_shape, jnp.float32),
                            pltpu.VMEM((Ho * Wo, 9 * P), jnp.float32)],
        ),
        compiler_params=pltpu.CompilerParams(
            dimension_semantics=("parallel",),
            vmem_limit_bytes=64 * 1024 * 1024),
    )(*ins)


# --------------------------------------------------------------------------
# Glue: parameter construction and pure-JAX reference
# --------------------------------------------------------------------------
def init_bn(key, C):
    k1, k2, k3, k4 = jax.random.split(key, 4)
    gamma = 1.0 + 0.1 * jax.random.normal(k1, (C,), jnp.float32)
    beta = 0.1 * jax.random.normal(k2, (C,), jnp.float32)
    mean = 0.1 * jax.random.normal(k3, (C,), jnp.float32)
    var = jnp.abs(jax.random.normal(k4, (C,), jnp.float32)) + 0.5
    scale = gamma / jnp.sqrt(var + EPS)
    bias = beta - mean * scale
    return scale.reshape(1, C), bias.reshape(1, C)


def make_params(key, Cin, P, E):
    PE = P * E
    ks = jax.random.split(key, 8)
    bf16 = jnp.bfloat16
    p = {}
    p["w1"] = (jax.random.normal(ks[0], (Cin, P), jnp.float32)
               / np.sqrt(Cin)).astype(bf16)
    p["w2"] = (jax.random.normal(ks[1], (3, 3, P, P), jnp.float32)     # HWIO
               / np.sqrt(9 * P)).astype(bf16)
    p["w3"] = (jax.random.normal(ks[2], (P, PE), jnp.float32)
               / np.sqrt(P)).astype(bf16)
    p["wsc"] = (jax.random.normal(ks[3], (Cin, PE), jnp.float32)
                / np.sqrt(Cin)).astype(bf16)
    p["s1"], p["b1"] = init_bn(ks[4], P)
    p["s2"], p["b2"] = init_bn(ks[5], P)
    p["s3"], p["b3"] = init_bn(ks[6], PE)
    p["ssc"], p["bsc"] = init_bn(ks[7], PE)
    return p


def ref_forward(x_nchw, p, *, stride, downsample):
    def conv(x, w_oihw, s, pad):
        return jax.lax.conv_general_dilated(
            x, w_oihw, (s, s), ((pad, pad), (pad, pad)),
            dimension_numbers=("NCHW", "OIHW", "NCHW"))

    def bn(y, scale, bias):
        return y * scale[0][None, :, None, None] + bias[0][None, :, None, None]

    f32 = jnp.float32
    w1 = p["w1"].astype(f32).T[:, :, None, None]
    w2 = jnp.transpose(p["w2"].astype(f32), (3, 2, 0, 1))   # HWIO -> OIHW
    w3 = p["w3"].astype(f32).T[:, :, None, None]

    y = jax.nn.relu(bn(conv(x_nchw, w1, 1, 0), p["s1"], p["b1"]))
    y = jax.nn.relu(bn(conv(y, w2, stride, 1), p["s2"], p["b2"]))
    y = bn(conv(y, w3, 1, 0), p["s3"], p["b3"])
    if downsample:
        wsc = p["wsc"].astype(f32).T[:, :, None, None]
        res = bn(conv(x_nchw, wsc, stride, 0), p["ssc"], p["bsc"])
    else:
        res = x_nchw
    return jax.nn.relu(y + res)


def run_case(key, *, N, Cin, P, E, H, W, stride, downsample):
    kx, kp = jax.random.split(key)
    # bf16 input so kernel and reference share the same input quantization.
    x_nchw = jax.random.normal(kx, (N, Cin, H, W), jnp.float32).astype(jnp.bfloat16)
    params = make_params(kp, Cin, P, E)

    x_nhwc = jnp.transpose(x_nchw, (0, 2, 3, 1))
    out_nhwc = bottleneck_pallas(x_nhwc, params,
                                 stride=stride, downsample=downsample)
    out = jnp.transpose(out_nhwc, (0, 3, 1, 2))
    out = jax.block_until_ready(out)

    ref = ref_forward(x_nchw.astype(jnp.float32), params,
                      stride=stride, downsample=downsample)
    Ho = H if stride == 1 else H // 2
    Wo = W if stride == 1 else W // 2
    assert out.shape == ref.shape == (N, P * E, Ho, Wo), (out.shape, ref.shape)
    err = float(jnp.max(jnp.abs(out - ref)))
    assert jnp.allclose(out, ref, atol=2e-2, rtol=2e-2), f"max abs err = {err}"
    return out


if __name__ == "__main__":
    key = jax.random.PRNGKey(0)
    k1, k2 = jax.random.split(key)
    # downsample=True path (projection shortcut, stride 2); PE = 128 -> lane-dense output
    run_case(k1, N=2, Cin=32, P=32, E=4, H=16, W=16, stride=2, downsample=True)
    # downsample=False path (identity shortcut, stride 1, Cin == P*E = 128)
    run_case(k2, N=2, Cin=128, P=32, E=4, H=8, W=8, stride=1, downsample=False)
    print("KERNEL_OK")
</pallas_src>

<mosaic_0001>
module attributes {stable_mosaic.version = 11 : i64} {
  func.func @kernel(%arg0: i32, %arg1: memref<1x16x16x32xbf16, #tpu.memory_space<vmem>>, %arg2: memref<1x8x8x32xbf16, #tpu.memory_space<vmem>>, %arg3: memref<32x32xbf16, #tpu.memory_space<vmem>>, %arg4: memref<1x32xf32, #tpu.memory_space<vmem>>, %arg5: memref<1x32xf32, #tpu.memory_space<vmem>>, %arg6: memref<288x32xbf16, #tpu.memory_space<vmem>>, %arg7: memref<1x32xf32, #tpu.memory_space<vmem>>, %arg8: memref<1x32xf32, #tpu.memory_space<vmem>>, %arg9: memref<32x128xbf16, #tpu.memory_space<vmem>>, %arg10: memref<1x128xf32, #tpu.memory_space<vmem>>, %arg11: memref<1x128xf32, #tpu.memory_space<vmem>>, %arg12: memref<32x128xbf16, #tpu.memory_space<vmem>>, %arg13: memref<1x128xf32, #tpu.memory_space<vmem>>, %arg14: memref<1x128xf32, #tpu.memory_space<vmem>>, %arg15: memref<1x8x8x128xf32, #tpu.memory_space<vmem>>, %arg16: memref<10x2x10x2x32xf32, #tpu.memory_space<vmem>>, %arg17: memref<64x288xf32, #tpu.memory_space<vmem>>) attributes {dimension_semantics = [#tpu.dimension_semantics<parallel>], iteration_bounds = array<i64: 2>, scalar_prefetch = 0 : i64, scratch_operands = 2 : i64, tpu.core_type = #tpu.core_type<tc>, window_params = [{transform_indices = @transform_0, window_bounds = array<i64: 1, 16, 16, 32>}, {transform_indices = @transform_1, window_bounds = array<i64: 1, 8, 8, 32>}, {pipeline_mode = #tpu.pipeline_mode<synchronous>, transform_indices = @transform_2, window_bounds = array<i64: 32, 32>}, {pipeline_mode = #tpu.pipeline_mode<synchronous>, transform_indices = @transform_3, window_bounds = array<i64: 1, 32>}, {pipeline_mode = #tpu.pipeline_mode<synchronous>, transform_indices = @transform_4, window_bounds = array<i64: 1, 32>}, {pipeline_mode = #tpu.pipeline_mode<synchronous>, transform_indices = @transform_5, window_bounds = array<i64: 288, 32>}, {pipeline_mode = #tpu.pipeline_mode<synchronous>, transform_indices = @transform_6, window_bounds = array<i64: 1, 32>}, {pipeline_mode = #tpu.pipeline_mode<synchronous>, transform_indices = @transform_7, window_bounds = array<i64: 1, 32>}, {pipeline_mode = #tpu.pipeline_mode<synchronous>, transform_indices = @transform_8, window_bounds = array<i64: 32, 128>}, {pipeline_mode = #tpu.pipeline_mode<synchronous>, transform_indices = @transform_9, window_bounds = array<i64: 1, 128>}, {pipeline_mode = #tpu.pipeline_mode<synchronous>, transform_indices = @transform_10, window_bounds = array<i64: 1, 128>}, {pipeline_mode = #tpu.pipeline_mode<synchronous>, transform_indices = @transform_11, window_bounds = array<i64: 32, 128>}, {pipeline_mode = #tpu.pipeline_mode<synchronous>, transform_indices = @transform_12, window_bounds = array<i64: 1, 128>}, {pipeline_mode = #tpu.pipeline_mode<synchronous>, transform_indices = @transform_13, window_bounds = array<i64: 1, 128>}, {transform_indices = @transform_14, window_bounds = array<i64: 1, 8, 8, 128>}]} {
    %c0 = arith.constant 0 : index
    %c0_0 = arith.constant 0 : index
    %c0_1 = arith.constant 0 : index
    %c0_2 = arith.constant 0 : index
    %0 = vector.load %arg1[%c0, %c0_0, %c0_1, %c0_2] : memref<1x16x16x32xbf16, #tpu.memory_space<vmem>>, vector<1x16x16x32xbf16>
    %1 = vector.shape_cast %0 : vector<1x16x16x32xbf16> to vector<256x32xbf16>
    %c0_3 = arith.constant 0 : index
    %c0_4 = arith.constant 0 : index
    %2 = vector.load %arg3[%c0_3, %c0_4] : memref<32x32xbf16, #tpu.memory_space<vmem>>, vector<32x32xbf16>
    %cst = arith.constant dense<0.000000e+00> : vector<256x32xf32>
    %3 = tpu.matmul %1, %2, %cst {dimension_numbers = #tpu.dot_dimension_numbers<[1], [0], [0], [1], [0, 0, 1, 1], [], []>} : vector<256x32xbf16>, vector<32x32xbf16>, vector<256x32xf32> -> vector<256x32xf32>
    %c0_5 = arith.constant 0 : index
    %c0_6 = arith.constant 0 : index
    %4 = vector.load %arg4[%c0_5, %c0_6] : memref<1x32xf32, #tpu.memory_space<vmem>>, vector<1x32xf32>
    %5 = vector.broadcast %4 : vector<1x32xf32> to vector<256x32xf32>
    %6 = arith.mulf %3, %5 : vector<256x32xf32>
    %c0_7 = arith.constant 0 : index
    %c0_8 = arith.constant 0 : index
    %7 = vector.load %arg5[%c0_7, %c0_8] : memref<1x32xf32, #tpu.memory_space<vmem>>, vector<1x32xf32>
    %8 = vector.broadcast %7 : vector<1x32xf32> to vector<256x32xf32>
    %9 = arith.addf %6, %8 : vector<256x32xf32>
    %cst_9 = arith.constant 0.000000e+00 : f32
    %10 = vector.broadcast %cst_9 : f32 to vector<256x32xf32>
    %11 = arith.maximumf %9, %10 : vector<256x32xf32>
    %cst_10 = arith.constant 0.000000e+00 : f32
    %12 = vector.broadcast %cst_10 : f32 to vector<10x2x10x2x32xf32>
    %c0_11 = arith.constant 0 : index
    %c0_12 = arith.constant 0 : index
    %c0_13 = arith.constant 0 : index
    %c0_14 = arith.constant 0 : index
    %c0_15 = arith.constant 0 : index
    %13 = vector.load %arg16[%c0_11, %c0_12, %c0_13, %c0_14, %c0_15] : memref<10x2x10x2x32xf32, #tpu.memory_space<vmem>>, vector<10x2x10x2x32xf32>
    tpu.vector_store %arg16[%c0_11, %c0_12, %c0_13, %c0_14, %c0_15], %12 {strides = array<i32>} : memref<10x2x10x2x32xf32, #tpu.memory_space<vmem>>, vector<10x2x10x2x32xf32>,
    %14 = vector.shape_cast %11 : vector<256x32xf32> to vector<8x2x8x2x32xf32>
    %c1 = arith.constant 1 : index
    %c0_16 = arith.constant 0 : index
    %c1_17 = arith.constant 1 : index
    %c0_18 = arith.constant 0 : index
    %c0_19 = arith.constant 0 : index
    %15 = vector.load %arg16[%c1, %c0_16, %c1_17, %c0_18, %c0_19] : memref<10x2x10x2x32xf32, #tpu.memory_space<vmem>>, vector<8x2x8x2x32xf32>
    tpu.vector_store %arg16[%c1, %c0_16, %c1_17, %c0_18, %c0_19], %14 {strides = array<i32>} : memref<10x2x10x2x32xf32, #tpu.memory_space<vmem>>, vector<8x2x8x2x32xf32>,
    %c0_20 = arith.constant 0 : index
    %c1_21 = arith.constant 1 : index
    %c0_22 = arith.constant 0 : index
    %c1_23 = arith.constant 1 : index
    %c0_24 = arith.constant 0 : index
    %16 = vector.load %arg16[%c0_20, %c1_21, %c0_22, %c1_23, %c0_24] : memref<10x2x10x2x32xf32, #tpu.memory_space<vmem>>, vector<8x1x8x1x32xf32>
    %17 = vector.shape_cast %16 : vector<8x1x8x1x32xf32> to vector<64x32xf32>
    %c0_25 = arith.constant 0 : index
    %c0_26 = arith.constant 0 : index
    %18 = vector.load %arg17[%c0_25, %c0_26] : memref<64x288xf32, #tpu.memory_space<vmem>>, vector<64x32xf32>
    tpu.vector_store %arg17[%c0_25, %c0_26], %17 {strides = array<i32>} : memref<64x288xf32, #tpu.memory_space<vmem>>, vector<64x32xf32>,
    %c0_27 = arith.constant 0 : index
    %c1_28 = arith.constant 1 : index
    %c1_29 = arith.constant 1 : index
    %c0_30 = arith.constant 0 : index
    %c0_31 = arith.constant 0 : index
    %19 = vector.load %arg16[%c0_27, %c1_28, %c1_29, %c0_30, %c0_31] : memref<10x2x10x2x32xf32, #tpu.memory_space<vmem>>, vector<8x1x8x1x32xf32>
    %20 = vector.shape_cast %19 : vector<8x1x8x1x32xf32> to vector<64x32xf32>
    %c0_32 = arith.constant 0 : index
    %c32 = arith.constant 32 : index
    %21 = vector.load %arg17[%c0_32, %c32] : memref<64x288xf32, #tpu.memory_space<vmem>>, vector<64x32xf32>
    tpu.vector_store %arg17[%c0_32, %c32], %20 {strides = array<i32>} : memref<64x288xf32, #tpu.memory_space<vmem>>, vector<64x32xf32>,
    %c0_33 = arith.constant 0 : index
    %c1_34 = arith.constant 1 : index
    %c1_35 = arith.constant 1 : index
    %c1_36 = arith.constant 1 : index
    %c0_37 = arith.constant 0 : index
    %22 = vector.load %arg16[%c0_33, %c1_34, %c1_35, %c1_36, %c0_37] : memref<10x2x10x2x32xf32, #tpu.memory_space<vmem>>, vector<8x1x8x1x32xf32>
    %23 = vector.shape_cast %22 : vector<8x1x8x1x32xf32> to vector<64x32xf32>
    %c0_38 = arith.constant 0 : index
    %c64 = arith.constant 64 : index
    %24 = vector.load %arg17[%c0_38, %c64] : memref<64x288xf32, #tpu.memory_space<vmem>>, vector<64x32xf32>
    tpu.vector_store %arg17[%c0_38, %c64], %23 {strides = array<i32>} : memref<64x288xf32, #tpu.memory_space<vmem>>, vector<64x32xf32>,
    %c1_39 = arith.constant 1 : index
    %c0_40 = arith.constant 0 : index
    %c0_41 = arith.constant 0 : index
    %c1_42 = arith.constant 1 : index
    %c0_43 = arith.constant 0 : index
    %25 = vector.load %arg16[%c1_39, %c0_40, %c0_41, %c1_42, %c0_43] : memref<10x2x10x2x32xf32, #tpu.memory_space<vmem>>, vector<8x1x8x1x32xf32>
    %26 = vector.shape_cast %25 : vector<8x1x8x1x32xf32> to vector<64x32xf32>
    %c0_44 = arith.constant 0 : index
    %c96 = arith.constant 96 : index
    %27 = vector.load %arg17[%c0_44, %c96] : memref<64x288xf32, #tpu.memory_space<vmem>>, vector<64x32xf32>
    tpu.vector_store %arg17[%c0_44, %c96], %26 {strides = array<i32>} : memref<64x288xf32, #tpu.memory_space<vmem>>, vector<64x32xf32>,
    %c1_45 = arith.constant 1 : index
    %c0_46 = arith.constant 0 : index
    %c1_47 = arith.constant 1 : index
    %c0_48 = arith.constant 0 : index
    %c0_49 = arith.constant 0 : index
    %28 = vector.load %arg16[%c1_45, %c0_46, %c1_47, %c0_48, %c0_49] : memref<10x2x10x2x32xf32, #tpu.memory_space<vmem>>, vector<8x1x8x1x32xf32>
    %29 = vector.shape_cast %28 : vector<8x1x8x1x32xf32> to vector<64x32xf32>
    %c0_50 = arith.constant 0 : index
    %c128 = arith.constant 128 : index
    %30 = vector.load %arg17[%c0_50, %c128] : memref<64x288xf32, #tpu.memory_space<vmem>>, vector<64x32xf32>
    tpu.vector_store %arg17[%c0_50, %c128], %29 {strides = array<i32>} : memref<64x288xf32, #tpu.memory_space<vmem>>, vector<64x32xf32>,
    %c1_51 = arith.constant 1 : index
    %c0_52 = arith.constant 0 : index
    %c1_53 = arith.constant 1 : index
    %c1_54 = arith.constant 1 : index
    %c0_55 = arith.constant 0 : index
    %31 = vector.load %arg16[%c1_51, %c0_52, %c1_53, %c1_54, %c0_55] : memref<10x2x10x2x32xf32, #tpu.memory_space<vmem>>, vector<8x1x8x1x32xf32>
    %32 = vector.shape_cast %31 : vector<8x1x8x1x32xf32> to vector<64x32xf32>
    %c0_56 = arith.constant 0 : index
    %c160 = arith.constant 160 : index
    %33 = vector.load %arg17[%c0_56, %c160] : memref<64x288xf32, #tpu.memory_space<vmem>>, vector<64x32xf32>
    tpu.vector_store %arg17[%c0_56, %c160], %32 {strides = array<i32>} : memref<64x288xf32, #tpu.memory_space<vmem>>, vector<64x32xf32>,
    %c1_57 = arith.constant 1 : index
    %c1_58 = arith.constant 1 : index
    %c0_59 = arith.constant 0 : index
    %c1_60 = arith.constant 1 : index
    %c0_61 = arith.constant 0 : index
    %34 = vector.load %arg16[%c1_57, %c1_58, %c0_59, %c1_60, %c0_61] : memref<10x2x10x2x32xf32, #tpu.memory_space<vmem>>, vector<8x1x8x1x32xf32>
    %35 = vector.shape_cast %34 : vector<8x1x8x1x32xf32> to vector<64x32xf32>
    %c0_62 = arith.constant 0 : index
    %c192 = arith.constant 192 : index
    %36 = vector.load %arg17[%c0_62, %c192] : memref<64x288xf32, #tpu.memory_space<vmem>>, vector<64x32xf32>
    tpu.vector_store %arg17[%c0_62, %c192], %35 {strides = array<i32>} : memref<64x288xf32, #tpu.memory_space<vmem>>, vector<64x32xf32>,
    %c1_63 = arith.constant 1 : index
    %c1_64 = arith.constant 1 : index
    %c1_65 = arith.constant 1 : index
    %c0_66 = arith.constant 0 : index
    %c0_67 = arith.constant 0 : index
    %37 = vector.load %arg16[%c1_63, %c1_64, %c1_65, %c0_66, %c0_67] : memref<10x2x10x2x32xf32, #tpu.memory_space<vmem>>, vector<8x1x8x1x32xf32>
    %38 = vector.shape_cast %37 : vector<8x1x8x1x32xf32> to vector<64x32xf32>
    %c0_68 = arith.constant 0 : index
    %c224 = arith.constant 224 : index
    %39 = vector.load %arg17[%c0_68, %c224] : memref<64x288xf32, #tpu.memory_space<vmem>>, vector<64x32xf32>
    tpu.vector_store %arg17[%c0_68, %c224], %38 {strides = array<i32>} : memref<64x288xf32, #tpu.memory_space<vmem>>, vector<64x32xf32>,
    %c1_69 = arith.constant 1 : index
    %c1_70 = arith.constant 1 : index
    %c1_71 = arith.constant 1 : index
    %c1_72 = arith.constant 1 : index
    %c0_73 = arith.constant 0 : index
    %40 = vector.load %arg16[%c1_69, %c1_70, %c1_71, %c1_72, %c0_73] : memref<10x2x10x2x32xf32, #tpu.memory_space<vmem>>, vector<8x1x8x1x32xf32>
    %41 = vector.shape_cast %40 : vector<8x1x8x1x32xf32> to vector<64x32xf32>
    %c0_74 = arith.constant 0 : index
    %c256 = arith.constant 256 : index
    %42 = vector.load %arg17[%c0_74, %c256] : memref<64x288xf32, #tpu.memory_space<vmem>>, vector<64x32xf32>
    tpu.vector_store %arg17[%c0_74, %c256], %41 {strides = array<i32>} : memref<64x288xf32, #tpu.memory_space<vmem>>, vector<64x32xf32>,
    %c0_75 = arith.constant 0 : index
    %c0_76 = arith.constant 0 : index
    %43 = vector.load %arg17[%c0_75, %c0_76] : memref<64x288xf32, #tpu.memory_space<vmem>>, vector<64x288xf32>
    %44 = arith.truncf %43 : vector<64x288xf32> to vector<64x288xbf16>
    %c0_77 = arith.constant 0 : index
    %c0_78 = arith.constant 0 : index
    %45 = vector.load %arg6[%c0_77, %c0_78] : memref<288x32xbf16, #tpu.memory_space<vmem>>, vector<288x32xbf16>
    %cst_79 = arith.constant dense<0.000000e+00> : vector<64x32xf32>
    %46 = tpu.matmul %44, %45, %cst_79 {dimension_numbers = #tpu.dot_dimension_numbers<[1], [0], [0], [1], [0, 0, 1, 1], [], []>} : vector<64x288xbf16>, vector<288x32xbf16>, vector<64x32xf32> -> vector<64x32xf32>
    %c0_80 = arith.constant 0 : index
    %c0_81 = arith.constant 0 : index
    %47 = vector.load %arg7[%c0_80, %c0_81] : memref<1x32xf32, #tpu.memory_space<vmem>>, vector<1x32xf32>
    %48 = vector.broadcast %47 : vector<1x32xf32> to vector<64x32xf32>
    %49 = arith.mulf %46, %48 : vector<64x32xf32>
    %c0_82 = arith.constant 0 : index
    %c0_83 = arith.constant 0 : index
    %50 = vector.load %arg8[%c0_82, %c0_83] : memref<1x32xf32, #tpu.memory_space<vmem>>, vector<1x32xf32>
    %51 = vector.broadcast %50 : vector<1x32xf32> to vector<64x32xf32>
    %52 = arith.addf %49, %51 : vector<64x32xf32>
    %cst_84 = arith.constant 0.000000e+00 : f32
    %53 = vector.broadcast %cst_84 : f32 to vector<64x32xf32>
    %54 = arith.maximumf %52, %53 : vector<64x32xf32>
    %55 = arith.truncf %54 : vector<64x32xf32> to vector<64x32xbf16>
    %c0_85 = arith.constant 0 : index
    %c0_86 = arith.constant 0 : index
    %56 = vector.load %arg9[%c0_85, %c0_86] : memref<32x128xbf16, #tpu.memory_space<vmem>>, vector<32x128xbf16>
    %cst_87 = arith.constant dense<0.000000e+00> : vector<64x128xf32>
    %57 = tpu.matmul %55, %56, %cst_87 {dimension_numbers = #tpu.dot_dimension_numbers<[1], [0], [0], [1], [0, 0, 1, 1], [], []>} : vector<64x32xbf16>, vector<32x128xbf16>, vector<64x128xf32> -> vector<64x128xf32>
    %c0_88 = arith.constant 0 : index
    %c0_89 = arith.constant 0 : index
    %58 = vector.load %arg10[%c0_88, %c0_89] : memref<1x128xf32, #tpu.memory_space<vmem>>, vector<1x128xf32>
    %59 = vector.broadcast %58 : vector<1x128xf32> to vector<64x128xf32>
    %60 = arith.mulf %57, %59 : vector<64x128xf32>
    %c0_90 = arith.constant 0 : index
    %c0_91 = arith.constant 0 : index
    %61 = vector.load %arg11[%c0_90, %c0_91] : memref<1x128xf32, #tpu.memory_space<vmem>>, vector<1x128xf32>
    %62 = vector.broadcast %61 : vector<1x128xf32> to vector<64x128xf32>
    %63 = arith.addf %60, %62 : vector<64x128xf32>
    %c0_92 = arith.constant 0 : index
    %c0_93 = arith.constant 0 : index
    %c0_94 = arith.constant 0 : index
    %c0_95 = arith.constant 0 : index
    %64 = vector.load %arg2[%c0_92, %c0_93, %c0_94, %c0_95] : memref<1x8x8x32xbf16, #tpu.memory_space<vmem>>, vector<1x8x8x32xbf16>
    %65 = vector.shape_cast %64 : vector<1x8x8x32xbf16> to vector<64x32xbf16>
    %c0_96 = arith.constant 0 : index
    %c0_97 = arith.constant 0 : index
    %66 = vector.load %arg12[%c0_96, %c0_97] : memref<32x128xbf16, #tpu.memory_space<vmem>>, vector<32x128xbf16>
    %cst_98 = arith.constant dense<0.000000e+00> : vector<64x128xf32>
    %67 = tpu.matmul %65, %66, %cst_98 {dimension_numbers = #tpu.dot_dimension_numbers<[1], [0], [0], [1], [0, 0, 1, 1], [], []>} : vector<64x32xbf16>, vector<32x128xbf16>, vector<64x128xf32> -> vector<64x128xf32>
    %c0_99 = arith.constant 0 : index
    %c0_100 = arith.constant 0 : index
    %68 = vector.load %arg13[%c0_99, %c0_100] : memref<1x128xf32, #tpu.memory_space<vmem>>, vector<1x128xf32>
    %69 = vector.broadcast %68 : vector<1x128xf32> to vector<64x128xf32>
    %70 = arith.mulf %67, %69 : vector<64x128xf32>
    %c0_101 = arith.constant 0 : index
    %c0_102 = arith.constant 0 : index
    %71 = vector.load %arg14[%c0_101, %c0_102] : memref<1x128xf32, #tpu.memory_space<vmem>>, vector<1x128xf32>
    %72 = vector.broadcast %71 : vector<1x128xf32> to vector<64x128xf32>
    %73 = arith.addf %70, %72 : vector<64x128xf32>
    %74 = arith.addf %63, %73 : vector<64x128xf32>
    %cst_103 = arith.constant 0.000000e+00 : f32
    %75 = vector.broadcast %cst_103 : f32 to vector<64x128xf32>
    %76 = arith.maximumf %74, %75 : vector<64x128xf32>
    %77 = vector.shape_cast %76 : vector<64x128xf32> to vector<1x8x8x128xf32>
    %c0_104 = arith.constant 0 : index
    %c0_105 = arith.constant 0 : index
    %c0_106 = arith.constant 0 : index
    %c0_107 = arith.constant 0 : index
    %78 = vector.load %arg15[%c0_104, %c0_105, %c0_106, %c0_107] : memref<1x8x8x128xf32, #tpu.memory_space<vmem>>, vector<1x8x8x128xf32>
    tpu.vector_store %arg15[%c0_104, %c0_105, %c0_106, %c0_107], %77 {strides = array<i32>} : memref<1x8x8x128xf32, #tpu.memory_space<vmem>>, vector<1x8x8x128xf32>,
    return
  }
  func.func @transform_0(%arg0: i32) -> (i32, i32, i32, i32) {
    %c0_i32 = arith.constant 0 : i32
    %c0_i32_0 = arith.constant 0 : i32
    %c0_i32_1 = arith.constant 0 : i32
    %c0_i32_2 = arith.constant 0 : i32
    return %arg0, %c0_i32, %c0_i32_0, %c0_i32_1 : i32, i32, i32, i32
  }
  func.func @transform_1(%arg0: i32) -> (i32, i32, i32, i32) {
    %c0_i32 = arith.constant 0 : i32
    %c0_i32_0 = arith.constant 0 : i32
    %c0_i32_1 = arith.constant 0 : i32
    %c0_i32_2 = arith.constant 0 : i32
    return %arg0, %c0_i32, %c0_i32_0, %c0_i32_1 : i32, i32, i32, i32
  }
  func.func @transform_2(%arg0: i32) -> (i32, i32) {
    %c0_i32 = arith.constant 0 : i32
    %c0_i32_0 = arith.constant 0 : i32
    %c0_i32_1 = arith.constant 0 : i32
    return %c0_i32, %c0_i32_0 : i32, i32
  }
  func.func @transform_3(%arg0: i32) -> (i32, i32) {
    %c0_i32 = arith.constant 0 : i32
    %c0_i32_0 = arith.constant 0 : i32
    %c0_i32_1 = arith.constant 0 : i32
    return %c0_i32, %c0_i32_0 : i32, i32
  }
  func.func @transform_4(%arg0: i32) -> (i32, i32) {
    %c0_i32 = arith.constant 0 : i32
    %c0_i32_0 = arith.constant 0 : i32
    %c0_i32_1 = arith.constant 0 : i32
    return %c0_i32, %c0_i32_0 : i32, i32
  }
  func.func @transform_5(%arg0: i32) -> (i32, i32) {
    %c0_i32 = arith.constant 0 : i32
    %c0_i32_0 = arith.constant 0 : i32
    %c0_i32_1 = arith.constant 0 : i32
    return %c0_i32, %c0_i32_0 : i32, i32
  }
  func.func @transform_6(%arg0: i32) -> (i32, i32) {
    %c0_i32 = arith.constant 0 : i32
    %c0_i32_0 = arith.constant 0 : i32
    %c0_i32_1 = arith.constant 0 : i32
    return %c0_i32, %c0_i32_0 : i32, i32
  }
  func.func @transform_7(%arg0: i32) -> (i32, i32) {
    %c0_i32 = arith.constant 0 : i32
    %c0_i32_0 = arith.constant 0 : i32
    %c0_i32_1 = arith.constant 0 : i32
    return %c0_i32, %c0_i32_0 : i32, i32
  }
  func.func @transform_8(%arg0: i32) -> (i32, i32) {
    %c0_i32 = arith.constant 0 : i32
    %c0_i32_0 = arith.constant 0 : i32
    %c0_i32_1 = arith.constant 0 : i32
    return %c0_i32, %c0_i32_0 : i32, i32
  }
  func.func @transform_9(%arg0: i32) -> (i32, i32) {
    %c0_i32 = arith.constant 0 : i32
    %c0_i32_0 = arith.constant 0 : i32
    %c0_i32_1 = arith.constant 0 : i32
    return %c0_i32, %c0_i32_0 : i32, i32
  }
  func.func @transform_10(%arg0: i32) -> (i32, i32) {
    %c0_i32 = arith.constant 0 : i32
    %c0_i32_0 = arith.constant 0 : i32
    %c0_i32_1 = arith.constant 0 : i32
    return %c0_i32, %c0_i32_0 : i32, i32
  }
  func.func @transform_11(%arg0: i32) -> (i32, i32) {
    %c0_i32 = arith.constant 0 : i32
    %c0_i32_0 = arith.constant 0 : i32
    %c0_i32_1 = arith.constant 0 : i32
    return %c0_i32, %c0_i32_0 : i32, i32
  }
  func.func @transform_12(%arg0: i32) -> (i32, i32) {
    %c0_i32 = arith.constant 0 : i32
    %c0_i32_0 = arith.constant 0 : i32
    %c0_i32_1 = arith.constant 0 : i32
    return %c0_i32, %c0_i32_0 : i32, i32
  }
  func.func @transform_13(%arg0: i32) -> (i32, i32) {
    %c0_i32 = arith.constant 0 : i32
    %c0_i32_0 = arith.constant 0 : i32
    %c0_i32_1 = arith.constant 0 : i32
    return %c0_i32, %c0_i32_0 : i32, i32
  }
  func.func @transform_14(%arg0: i32) -> (i32, i32, i32, i32) {
    %c0_i32 = arith.constant 0 : i32
    %c0_i32_0 = arith.constant 0 : i32
    %c0_i32_1 = arith.constant 0 : i32
    %c0_i32_2 = arith.constant 0 : i32
    return %arg0, %c0_i32, %c0_i32_0, %c0_i32_1 : i32, i32, i32, i32
  }
}

</mosaic_0001>

<llo_original>
// kernel: tpu_custom_call.1
$region0: #{tpu_custom_call.1}
  #allocation0 [shape = 'u32[]', space=smem, size = 0x4, offset = 0x4, fixed_abs, tag = 'smem constant byte address 0x4 - core index']
  #allocation1 [shape = 'u32[144,128]{1,0:T(1,128)}', space=vmem, size = 0x12000, scoped, tag = 'internal scratch']
  #allocation2 [shape = 'f32[10,2,10,2,32]{4,3,2,1,0:T(2,128)}', space=vmem, size = 0x32000, scoped, tag = 'scratch operand']
  #allocation3 [shape = 'f32[64,288]{1,0:T(8,128)}', space=vmem, size = 0x18000, scoped, tag = 'scratch operand']
  %s0 = inlined_call_operand.hbm [shape: bf16[2,16,16,32], index: 0, kind: input, shape index: {}]
  %s1 = inlined_call_operand.vmem [shape: bf16[2,8,8,32], index: 1, kind: input, shape index: {}]
  %s2 = inlined_call_operand.vmem [shape: bf16[32,32], index: 2, kind: input, shape index: {}]
  %s3 = inlined_call_operand.vmem [shape: f32[1,32], index: 3, kind: input, shape index: {}]
  %s4 = inlined_call_operand.vmem [shape: f32[1,32], index: 4, kind: input, shape index: {}]
  %s5 = inlined_call_operand.vmem [shape: bf16[288,32], index: 5, kind: input, shape index: {}]
  %s6 = inlined_call_operand.vmem [shape: f32[1,32], index: 6, kind: input, shape index: {}]
  %s7 = inlined_call_operand.vmem [shape: f32[1,32], index: 7, kind: input, shape index: {}]
  %s8 = inlined_call_operand.vmem [shape: bf16[32,128], index: 8, kind: input, shape index: {}]
  %s9 = inlined_call_operand.vmem [shape: f32[1,128], index: 9, kind: input, shape index: {}]
  %s10 = inlined_call_operand.vmem [shape: f32[1,128], index: 10, kind: input, shape index: {}]
  %s11 = inlined_call_operand.vmem [shape: bf16[32,128], index: 11, kind: input, shape index: {}]
  %s12 = inlined_call_operand.vmem [shape: f32[1,128], index: 12, kind: input, shape index: {}]
  %s13 = inlined_call_operand.vmem [shape: f32[1,128], index: 13, kind: input, shape index: {}]
  %s14 = inlined_call_operand.hbm [shape: f32[2,8,8,128], index: 14, kind: output, shape index: {}]
  %s15 = sld [smem:[#allocation0]]
  $region93: #{tpu_custom_call.1} parent=0
    _
  %s17 = ssub.s32 1, %s15
  %s18 = scalar_select 0, %s17, %s15
  $region1: #{tpu_custom_call.1} parent=0
    #allocation4 [shape = 'u8[131072]{0}', space=vmem, size = 0x20000, scoped, tag = 'input window, operand 0']
    #allocation5 [shape = 's32[2]{0}', space=sflag, size = 0x8, scoped, tag = 'scoped memory for tpu_custom_call.1']
    #allocation6 [shape = 's32[2]{0}', space=sflag, size = 0x8, scoped, tag = 'scoped memory for tpu_custom_call.1']
    #allocation7 [shape = 'u8[65536]{0}', space=vmem, size = 0x10000, scoped, tag = 'output window, operand 0']
    %19 = vsyncpa [#allocation5], 0
    %s20 = scalar_lea.sflag [#allocation5], 1
    %21 = vsyncpa %s20, 0
    %22 = vsyncpa [#allocation6], 0
    %s23 = scalar_lea.sflag [#allocation6], 1
    %24 = vsyncpa %s23, 0
    loop: start=0, step=1, limit=4
    $region2: #{tpu_custom_call.1} parent=1 // loop_pre_header
      _
    $region3: #{tpu_custom_call.1} parent=1 // loop_header
      %s26 = sphi 0, %s30
      %p27 = scmp.ge.s32.totalorder %s26, 4
      %s36 = sphi 0, %s38
      %s39 = sphi 0, %s36
      %s40 = sphi 0, %s39
      %s56 = sphi 0, %s40
      %s62 = sphi 0, %s64
      %s65 = sphi 0, %s62
      %s66 = sphi 0, %s65
      %s82 = sphi 0, %s66
      %s86 = sphi 0, %s86
      %s88 = sphi 0, %s86
      %s89 = sphi 0, %s88
      %s103 = sphi 0, %s89
      %s107 = sphi 0, %s107
      %s109 = sphi 0, %s107
      %s110 = sphi 0, %s109
      %s124 = sphi 0, %s110
      %s128 = sphi 0, %s128
      %s130 = sphi 0, %s128
      %s131 = sphi 0, %s130
      %s145 = sphi 0, %s131
      %s149 = sphi 0, %s149
      %s151 = sphi 0, %s149
      %s152 = sphi 0, %s151
      %s166 = sphi 0, %s152
      %s170 = sphi 0, %s170
      %s172 = sphi 0, %s170
      %s173 = sphi 0, %s172
      %s187 = sphi 0, %s173
      %s191 = sphi 0, %s191
      %s193 = sphi 0, %s191
      %s194 = sphi 0, %s193
      %s208 = sphi 0, %s194
      %s212 = sphi 0, %s212
      %s214 = sphi 0, %s212
      %s215 = sphi 0, %s214
      %s229 = sphi 0, %s215
      %s233 = sphi 0, %s233
      %s235 = sphi 0, %s233
      %s236 = sphi 0, %s235
      %s250 = sphi 0, %s236
      %s254 = sphi 0, %s254
      %s256 = sphi 0, %s254
      %s257 = sphi 0, %s256
      %s271 = sphi 0, %s257
      %s275 = sphi 0, %s275
      %s277 = sphi 0, %s275
      %s278 = sphi 0, %s277
      %s292 = sphi 0, %s278
      %s296 = sphi 0, %s296
      %s298 = sphi 0, %s296
      %s299 = sphi 0, %s298
      %s313 = sphi 0, %s299
      %s317 = sphi 0, %s317
      %s319 = sphi 0, %s317
      %s320 = sphi 0, %s319
      %s334 = sphi 0, %s320
      %s340 = sphi 0, %s342
      %s343 = sphi 0, %s340
      %s344 = sphi 0, %s343
      %s360 = sphi 0, %s344
    $region4: #{tpu_custom_call.1} parent=1 // loop_header_branch
      %29 = sbr.rel (%p27) target = $region8
    $region5: #{tpu_custom_call.1} parent=1 // loop_body
      %s31 = ssub.s32 %s26, 1
      %s32 = ssub.s32 %s26, 2
      %s33 = sadd.s32 %s26, 1
      %s34 = ssub.s32 %s26, %s33
      %p35 = scmp.eq.s32.totalorder %s34, 0
      %s37 = sadd.s32 %s36, 1
      %s38 = scalar_select %p35, %s36, %s37
      %p41 = pneg %p35
      %p42 = scmp.eq.s32.totalorder %s26, 1
      %p43 = por %p41, %p42
      %p44 = scmp.ne.s32.totalorder %s36, %s39
      %p45 = scmp.eq.s32.totalorder %s26, 0
      %p46 = por %p44, %p45
      %p47 = scmp.ne.s32.totalorder %s36, %s39
      %p48 = scmp.eq.s32.totalorder %s31, 1
      %p49 = por %p47, %p48
      %p50 = scmp.ne.s32.totalorder %s39, %s40
      %p51 = scmp.eq.s32.totalorder %s31, 0
      %p52 = por %p50, %p51
      %p53 = scmp.ne.s32.totalorder %s39, %s40
      %p54 = scmp.eq.s32.totalorder %s32, 1
      %p55 = por %p53, %p54
      %p57 = scmp.ne.s32.totalorder %s40, %s56
      %p58 = scmp.eq.s32.totalorder %s32, 0
      %p59 = por %p57, %p58
      %s60 = ssub.s32 %s26, %s33
      %p61 = scmp.eq.s32.totalorder %s60, 0
      %s63 = sadd.s32 %s62, 1
      %s64 = scalar_select %p61, %s62, %s63
      %p67 = pneg %p61
      %p68 = scmp.eq.s32.totalorder %s26, 1
      %p69 = por %p67, %p68
      %p70 = scmp.ne.s32.totalorder %s62, %s65
      %p71 = scmp.eq.s32.totalorder %s26, 0
      %p72 = por %p70, %p71
      %p73 = scmp.ne.s32.totalorder %s62, %s65
      %p74 = scmp.eq.s32.totalorder %s31, 1
      %p75 = por %p73, %p74
      %p76 = scmp.ne.s32.totalorder %s65, %s66
      %p77 = scmp.eq.s32.totalorder %s31, 0
      %p78 = por %p76, %p77
      %p79 = scmp.ne.s32.totalorder %s65, %s66
      %p80 = scmp.eq.s32.totalorder %s32, 1
      %p81 = por %p79, %p80
      %p83 = scmp.ne.s32.totalorder %s66, %s82
      %p84 = scmp.eq.s32.totalorder %s32, 0
      %p85 = por %p83, %p84
      %s87 = sadd.s32 %s86, 1
      %p90 = scmp.eq.s32.totalorder %s26, 1
      %p91 = scmp.ne.s32.totalorder %s86, %s88
      %p92 = scmp.eq.s32.totalorder %s26, 0
      %p93 = por %p91, %p92
      %p94 = scmp.ne.s32.totalorder %s86, %s88
      %p95 = scmp.eq.s32.totalorder %s31, 1
      %p96 = por %p94, %p95
      %p97 = scmp.ne.s32.totalorder %s88, %s89
      %p98 = scmp.eq.s32.totalorder %s31, 0
      %p99 = por %p97, %p98
      %p100 = scmp.ne.s32.totalorder %s88, %s89
      %p101 = scmp.eq.s32.totalorder %s32, 1
      %p102 = por %p100, %p101
      %p104 = scmp.ne.s32.totalorder %s89, %s103
      %p105 = scmp.eq.s32.totalorder %s32, 0
      %p106 = por %p104, %p105
      %s108 = sadd.s32 %s107, 1
      %p111 = scmp.eq.s32.totalorder %s26, 1
      %p112 = scmp.ne.s32.totalorder %s107, %s109
      %p113 = scmp.eq.s32.totalorder %s26, 0
      %p114 = por %p112, %p113
      %p115 = scmp.ne.s32.totalorder %s107, %s109
      %p116 = scmp.eq.s32.totalorder %s31, 1
      %p117 = por %p115, %p116
      %p118 = scmp.ne.s32.totalorder %s109, %s110
      %p119 = scmp.eq.s32.totalorder %s31, 0
      %p120 = por %p118, %p119
      %p121 = scmp.ne.s32.totalorder %s109, %s110
      %p122 = scmp.eq.s32.totalorder %s32, 1
      %p123 = por %p121, %p122
      %p125 = scmp.ne.s32.totalorder %s110, %s124
      %p126 = scmp.eq.s32.totalorder %s32, 0
      %p127 = por %p125, %p126
      %s129 = sadd.s32 %s128, 1
      %p132 = scmp.eq.s32.totalorder %s26, 1
      %p133 = scmp.ne.s32.totalorder %s128, %s130
      %p134 = scmp.eq.s32.totalorder %s26, 0
      %p135 = por %p133, %p134
      %p136 = scmp.ne.s32.totalorder %s128, %s130
      %p137 = scmp.eq.s32.totalorder %s31, 1
      %p138 = por %p136, %p137
      %p139 = scmp.ne.s32.totalorder %s130, %s131
      %p140 = scmp.eq.s32.totalorder %s31, 0
      %p141 = por %p139, %p140
      %p142 = scmp.ne.s32.totalorder %s130, %s131
      %p143 = scmp.eq.s32.totalorder %s32, 1
      %p144 = por %p142, %p143
      %p146 = scmp.ne.s32.totalorder %s131, %s145
      %p147 = scmp.eq.s32.totalorder %s32, 0
      %p148 = por %p146, %p147
      %s150 = sadd.s32 %s149, 1
      %p153 = scmp.eq.s32.totalorder %s26, 1
      %p154 = scmp.ne.s32.totalorder %s149, %s151
      %p155 = scmp.eq.s32.totalorder %s26, 0
      %p156 = por %p154, %p155
      %p157 = scmp.ne.s32.totalorder %s149, %s151
      %p158 = scmp.eq.s32.totalorder %s31, 1
      %p159 = por %p157, %p158
      %p160 = scmp.ne.s32.totalorder %s151, %s152
      %p161 = scmp.eq.s32.totalorder %s31, 0
      %p162 = por %p160, %p161
      %p163 = scmp.ne.s32.totalorder %s151, %s152
      %p164 = scmp.eq.s32.totalorder %s32, 1
      %p165 = por %p163, %p164
      %p167 = scmp.ne.s32.totalorder %s152, %s166
      %p168 = scmp.eq.s32.totalorder %s32, 0
      %p169 = por %p167, %p168
      %s171 = sadd.s32 %s170, 1
      %p174 = scmp.eq.s32.totalorder %s26, 1
      %p175 = scmp.ne.s32.totalorder %s170, %s172
      %p176 = scmp.eq.s32.totalorder %s26, 0
      %p177 = por %p175, %p176
      %p178 = scmp.ne.s32.totalorder %s170, %s172
      %p179 = scmp.eq.s32.totalorder %s31, 1
      %p180 = por %p178, %p179
      %p181 = scmp.ne.s32.totalorder %s172, %s173
      %p182 = scmp.eq.s32.totalorder %s31, 0
      %p183 = por %p181, %p182
      %p184 = scmp.ne.s32.totalorder %s172, %s173
      %p185 = scmp.eq.s32.totalorder %s32, 1
      %p186 = por %p184, %p185
      %p188 = scmp.ne.s32.totalorder %s173, %s187
      %p189 = scmp.eq.s32.totalorder %s32, 0
      %p190 = por %p188, %p189
      %s192 = sadd.s32 %s191, 1
      %p195 = scmp.eq.s32.totalorder %s26, 1
      %p196 = scmp.ne.s32.totalorder %s191, %s193
      %p197 = scmp.eq.s32.totalorder %s26, 0
      %p198 = por %p196, %p197
      %p199 = scmp.ne.s32.totalorder %s191, %s193
      %p200 = scmp.eq.s32.totalorder %s31, 1
      %p201 = por %p199, %p200
      %p202 = scmp.ne.s32.totalorder %s193, %s194
      %p203 = scmp.eq.s32.totalorder %s31, 0
      %p204 = por %p202, %p203
      %p205 = scmp.ne.s32.totalorder %s193, %s194
      %p206 = scmp.eq.s32.totalorder %s32, 1
      %p207 = por %p205, %p206
      %p209 = scmp.ne.s32.totalorder %s194, %s208
      %p210 = scmp.eq.s32.totalorder %s32, 0
      %p211 = por %p209, %p210
      %s213 = sadd.s32 %s212, 1
      %p216 = scmp.eq.s32.totalorder %s26, 1
      %p217 = scmp.ne.s32.totalorder %s212, %s214
      %p218 = scmp.eq.s32.totalorder %s26, 0
      %p219 = por %p217, %p218
      %p220 = scmp.ne.s32.totalorder %s212, %s214
      %p221 = scmp.eq.s32.totalorder %s31, 1
      %p222 = por %p220, %p221
      %p223 = scmp.ne.s32.totalorder %s214, %s215
      %p224 = scmp.eq.s32.totalorder %s31, 0
      %p225 = por %p223, %p224
      %p226 = scmp.ne.s32.totalorder %s214, %s215
      %p227 = scmp.eq.s32.totalorder %s32, 1
      %p228 = por %p226, %p227
      %p230 = scmp.ne.s32.totalorder %s215, %s229
      %p231 = scmp.eq.s32.totalorder %s32, 0
      %p232 = por %p230, %p231
      %s234 = sadd.s32 %s233, 1
      %p237 = scmp.eq.s32.totalorder %s26, 1
      %p238 = scmp.ne.s32.totalorder %s233, %s235
      %p239 = scmp.eq.s32.totalorder %s26, 0
      %p240 = por %p238, %p239
      %p241 = scmp.ne.s32.totalorder %s233, %s235
      %p242 = scmp.eq.s32.totalorder %s31, 1
      %p243 = por %p241, %p242
      %p244 = scmp.ne.s32.totalorder %s235, %s236
      %p245 = scmp.eq.s32.totalorder %s31, 0
      %p246 = por %p244, %p245
      %p247 = scmp.ne.s32.totalorder %s235, %s236
      %p248 = scmp.eq.s32.totalorder %s32, 1
      %p249 = por %p247, %p248
      %p251 = scmp.ne.s32.totalorder %s236, %s250
      %p252 = scmp.eq.s32.totalorder %s32, 0
      %p253 = por %p251, %p252
      %s255 = sadd.s32 %s254, 1
      %p258 = scmp.eq.s32.totalorder %s26, 1
      %p259 = scmp.ne.s32.totalorder %s254, %s256
      %p260 = scmp.eq.s32.totalorder %s26, 0
      %p261 = por %p259, %p260
      %p262 = scmp.ne.s32.totalorder %s254, %s256
      %p263 = scmp.eq.s32.totalorder %s31, 1
      %p264 = por %p262, %p263
      %p265 = scmp.ne.s32.totalorder %s256, %s257
      %p266 = scmp.eq.s32.totalorder %s31, 0
      %p267 = por %p265, %p266
      %p268 = scmp.ne.s32.totalorder %s256, %s257
      %p269 = scmp.eq.s32.totalorder %s32, 1
      %p270 = por %p268, %p269
      %p272 = scmp.ne.s32.totalorder %s257, %s271
      %p273 = scmp.eq.s32.totalorder %s32, 0
      %p274 = por %p272, %p273
      %s276 = sadd.s32 %s275, 1
      %p279 = scmp.eq.s32.totalorder %s26, 1
      %p280 = scmp.ne.s32.totalorder %s275, %s277
      %p281 = scmp.eq.s32.totalorder %s26, 0
      %p282 = por %p280, %p281
      %p283 = scmp.ne.s32.totalorder %s275, %s277
      %p284 = scmp.eq.s32.totalorder %s31, 1
      %p285 = por %p283, %p284
      %p286 = scmp.ne.s32.totalorder %s277, %s278
      %p287 = scmp.eq.s32.totalorder %s31, 0
      %p288 = por %p286, %p287
      %p289 = scmp.ne.s32.totalorder %s277, %s278
      %p290 = scmp.eq.s32.totalorder %s32, 1
      %p291 = por %p289, %p290
      %p293 = scmp.ne.s32.totalorder %s278, %s292
      %p294 = scmp.eq.s32.totalorder %s32, 0
      %p295 = por %p293, %p294
      %s297 = sadd.s32 %s296, 1
      %p300 = scmp.eq.s32.totalorder %s26, 1
      %p301 = scmp.ne.s32.totalorder %s296, %s298
      %p302 = scmp.eq.s32.totalorder %s26, 0
      %p303 = por %p301, %p302
      %p304 = scmp.ne.s32.totalorder %s296, %s298
      %p305 = scmp.eq.s32.totalorder %s31, 1
      %p306 = por %p304, %p305
      %p307 = scmp.ne.s32.totalorder %s298, %s299
      %p308 = scmp.eq.s32.totalorder %s31, 0
      %p309 = por %p307, %p308
      %p310 = scmp.ne.s32.totalorder %s298, %s299
      %p311 = scmp.eq.s32.totalorder %s32, 1
      %p312 = por %p310, %p311
      %p314 = scmp.ne.s32.totalorder %s299, %s313
      %p315 = scmp.eq.s32.totalorder %s32, 0
      %p316 = por %p314, %p315
      %s318 = sadd.s32 %s317, 1
      %p321 = scmp.eq.s32.totalorder %s26, 1
      %p322 = scmp.ne.s32.totalorder %s317, %s319
      %p323 = scmp.eq.s32.totalorder %s26, 0
      %p324 = por %p322, %p323
      %p325 = scmp.ne.s32.totalorder %s317, %s319
      %p326 = scmp.eq.s32.totalorder %s31, 1
      %p327 = por %p325, %p326
      %p328 = scmp.ne.s32.totalorder %s319, %s320
      %p329 = scmp.eq.s32.totalorder %s31, 0
      %p330 = por %p328, %p329
      %p331 = scmp.ne.s32.totalorder %s319, %s320
      %p332 = scmp.eq.s32.totalorder %s32, 1
      %p333 = por %p331, %p332
      %p335 = scmp.ne.s32.totalorder %s320, %s334
      %p336 = scmp.eq.s32.totalorder %s32, 0
      %p337 = por %p335, %p336
      %s338 = ssub.s32 %s26, %s33
      %p339 = scmp.eq.s32.totalorder %s338, 0
      %s341 = sadd.s32 %s340, 1
      %s342 = scalar_select %p339, %s340, %s341
      %p345 = pneg %p339
      %p346 = scmp.eq.s32.totalorder %s26, 1
      %p347 = por %p345, %p346
      %p348 = scmp.ne.s32.totalorder %s340, %s343
      %p349 = scmp.eq.s32.totalorder %s26, 0
      %p350 = por %p348, %p349
      %p351 = scmp.ne.s32.totalorder %s340, %s343
      %p352 = scmp.eq.s32.totalorder %s31, 1
      %p353 = por %p351, %p352
      %p354 = scmp.ne.s32.totalorder %s343, %s344
      %p355 = scmp.eq.s32.totalorder %s31, 0
      %p356 = por %p354, %p355
      %p357 = scmp.ne.s32.totalorder %s343, %s344
      %p358 = scmp.eq.s32.totalorder %s32, 1
      %p359 = por %p357, %p358
      %p361 = scmp.ne.s32.totalorder %s344, %s360
      %p362 = scmp.eq.s32.totalorder %s32, 0
      %p363 = por %p361, %p362
      %p364 = scmp.le.s32.totalorder 1, %s26
      %p365 = scmp.lt.s32.totalorder %s26, 3
      %p366 = pnand %p364, %p365
      %p367 = pneg %p366
      // Predicated region
      $region9: #{tpu_custom_call.1} parent=5 // pred_check
        _
      $region10: #{tpu_custom_call.1} parent=5 // pred_check_branch
        %369 = sbr.rel (%p366) target = $region12
      $region11: #{tpu_custom_call.1} parent=5 // pred_region
        %s370 = ssub.s32 %s26, 1
        // Predicated region
        $region13: #{tpu_custom_call.1} parent=11 // pred_check
          %p371 = pneg %p99
        $region14: #{tpu_custom_call.1} parent=11 // pred_check_branch
          %373 = sbr.rel (%p371) target = $region16
        $region15: #{tpu_custom_call.1} parent=11 // pred_region
          _
        $region16: #{tpu_custom_call.1} parent=11 // pred_fallthru
          _
        // Predicated region
        $region17: #{tpu_custom_call.1} parent=11 // pred_check
          %p374 = pneg %p120
        $region18: #{tpu_custom_call.1} parent=11 // pred_check_branch
          %376 = sbr.rel (%p374) target = $region20
        $region19: #{tpu_custom_call.1} parent=11 // pred_region
          _
        $region20: #{tpu_custom_call.1} parent=11 // pred_fallthru
          _
        // Predicated region
        $region21: #{tpu_custom_call.1} parent=11 // pred_check
          %p377 = pneg %p141
        $region22: #{tpu_custom_call.1} parent=11 // pred_check_branch
          %379 = sbr.rel (%p377) target = $region24
        $region23: #{tpu_custom_call.1} parent=11 // pred_region
          _
        $region24: #{tpu_custom_call.1} parent=11 // pred_fallthru
          _
        // Predicated region
        $region25: #{tpu_custom_call.1} parent=11 // pred_check
          %p380 = pneg %p162
        $region26: #{tpu_custom_call.1} parent=11 // pred_check_branch
          %382 = sbr.rel (%p380) target = $region28
        $region27: #{tpu_custom_call.1} parent=11 // pred_region
          _
        $region28: #{tpu_custom_call.1} parent=11 // pred_fallthru
          _
        // Predicated region
        $region29: #{tpu_custom_call.1} parent=11 // pred_check
          %p383 = pneg %p183
        $region30: #{tpu_custom_call.1} parent=11 // pred_check_branch
          %385 = sbr.rel (%p383) target = $region32
        $region31: #{tpu_custom_call.1} parent=11 // pred_region
          _
        $region32: #{tpu_custom_call.1} parent=11 // pred_fallthru
          _
        // Predicated region
        $region33: #{tpu_custom_call.1} parent=11 // pred_check
          %p386 = pneg %p204
        $region34: #{tpu_custom_call.1} parent=11 // pred_check_branch
          %388 = sbr.rel (%p386) target = $region36
        $region35: #{tpu_custom_call.1} parent=11 // pred_region
          _
        $region36: #{tpu_custom_call.1} parent=11 // pred_fallthru
          _
        // Predicated region
        $region37: #{tpu_custom_call.1} parent=11 // pred_check
          %p389 = pneg %p225
        $region38: #{tpu_custom_call.1} parent=11 // pred_check_branch
          %391 = sbr.rel (%p389) target = $region40
        $region39: #{tpu_custom_call.1} parent=11 // pred_region
          _
        $region40: #{tpu_custom_call.1} parent=11 // pred_fallthru
          _
        // Predicated region
        $region41: #{tpu_custom_call.1} parent=11 // pred_check
          %p392 = pneg %p246
        $region42: #{tpu_custom_call.1} parent=11 // pred_check_branch
          %394 = sbr.rel (%p392) target = $region44
        $region43: #{tpu_custom_call.1} parent=11 // pred_region
          _
        $region44: #{tpu_custom_call.1} parent=11 // pred_fallthru
          _
        // Predicated region
        $region45: #{tpu_custom_call.1} parent=11 // pred_check
          %p395 = pneg %p267
        $region46: #{tpu_custom_call.1} parent=11 // pred_check_branch
          %397 = sbr.rel (%p395) target = $region48
        $region47: #{tpu_custom_call.1} parent=11 // pred_region
          _
        $region48: #{tpu_custom_call.1} parent=11 // pred_fallthru
          _
        // Predicated region
        $region49: #{tpu_custom_call.1} parent=11 // pred_check
          %p398 = pneg %p288
        $region50: #{tpu_custom_call.1} parent=11 // pred_check_branch
          %400 = sbr.rel (%p398) target = $region52
        $region51: #{tpu_custom_call.1} parent=11 // pred_region
          _
        $region52: #{tpu_custom_call.1} parent=11 // pred_fallthru
          _
        // Predicated region
        $region53: #{tpu_custom_call.1} parent=11 // pred_check
          %p401 = pneg %p309
        $region54: #{tpu_custom_call.1} parent=11 // pred_check_branch
          %403 = sbr.rel (%p401) target = $region56
        $region55: #{tpu_custom_call.1} parent=11 // pred_region
          _
        $region56: #{tpu_custom_call.1} parent=11 // pred_fallthru
          _
        // Predicated region
        $region57: #{tpu_custom_call.1} parent=11 // pred_check
          %p404 = pneg %p330
        $region58: #{tpu_custom_call.1} parent=11 // pred_check_branch
          %406 = sbr.rel (%p404) target = $region60
        $region59: #{tpu_custom_call.1} parent=11 // pred_region
          _
        $region60: #{tpu_custom_call.1} parent=11 // pred_fallthru
          _
      $region12: #{tpu_custom_call.1} parent=5 // pred_fallthru
        _
      %p407 = scmp.lt.s32.totalorder %s26, 2
      // Predicated region
      $region61: #{tpu_custom_call.1} parent=5 // pred_check
        %p408 = pneg %p407
      $region62: #{tpu_custom_call.1} parent=5 // pred_check_branch
        %410 = sbr.rel (%p408) target = $region64
      $region63: #{tpu_custom_call.1} parent=5 // pred_region
        // Predicated region
        $region65: #{tpu_custom_call.1} parent=63 // pred_check
          %p411 = pneg %p46
        $region66: #{tpu_custom_call.1} parent=63 // pred_check_branch
          %413 = sbr.rel (%p411) target = $region68
        $region67: #{tpu_custom_call.1} parent=63 // pred_region
          %s414 = sand.u32 %s36, 1
          %s415 = scalar_lea.sflag [#allocation5], %s414
          %s416 = sand.u32 %s36, 1
          %s417 = smul.addr %s416, 128
          %s418 = scalar_lea.vmem [#allocation4], %s417
          %s420 = ssub.s32 2048, 2048
          %421 = vsyncadd %s415, %s420
          %s422 = smul.addr %s26, 32
          %s423 = smul.addr %s422, 64
          %s424 = scalar_lea.hbm %s0, %s423
          %s425 = sshll.u32 %s418, 4
          %s426 = int_to_ptr.vmem [resolvable:$true] %s425
          %431 = dma.hbm_to_vmem [thread:$0]  %s424, 2048, %s426, %s415, 64, 64, 4
        $region68: #{tpu_custom_call.1} parent=63 // pred_fallthru
          _
        // Predicated region
        $region69: #{tpu_custom_call.1} parent=63 // pred_check
          %p432 = pneg %p72
        $region70: #{tpu_custom_call.1} parent=63 // pred_check_branch
          %434 = sbr.rel (%p432) target = $region72
        $region71: #{tpu_custom_call.1} parent=63 // pred_region
          %p435 = scmp.lt.s32.totalorder %s26, 1
          %s436 = scalar_select %p435, %s26, 1
          %s437 = smul.addr %s436, 8
          %s438 = smul.addr %s437, 4
          %s439 = scalar_lea.vmem %s1, %s438
        $region72: #{tpu_custom_call.1} parent=63 // pred_fallthru
          _
      $region64: #{tpu_custom_call.1} parent=5 // pred_fallthru
        _
      %p440 = scmp.le.s32.totalorder 1, %s26
      %p441 = scmp.lt.s32.totalorder %s26, 3
      %p442 = pnand %p440, %p441
      %p443 = pneg %p442
      // Predicated region
      $region73: #{tpu_custom_call.1} parent=5 // pred_check
        _
      $region74: #{tpu_custom_call.1} parent=5 // pred_check_branch
        %445 = sbr.rel (%p442) target = $region76
      $region75: #{tpu_custom_call.1} parent=5 // pred_region
        %s446 = ssub.s32 %s26, 1
        %s447 = sand.u32 %s39, 1
        %s448 = scalar_lea.sflag [#allocation5], %s447
        %s449 = sand.u32 %s39, 1
        %s450 = smul.addr %s449, 128
        %s451 = scalar_lea.vmem [#allocation4], %s450
        // Predicated region
        $region77: #{tpu_custom_call.1} parent=75 // pred_check
          %p452 = pneg %p52
        $region78: #{tpu_custom_call.1} parent=75 // pred_check_branch
          %454 = sbr.rel (%p452) target = $region80
        $region79: #{tpu_custom_call.1} parent=75 // pred_region
          %455 = dma.done %s448, 2048
        $region80: #{tpu_custom_call.1} parent=75 // pred_fallthru
          _
        %s456 = sand.u32 %s39, 1
        %s457 = scalar_lea.sflag [#allocation5], %s456
        %s458 = sand.u32 %s39, 1
        %s459 = smul.addr %s458, 128
        %s460 = scalar_lea.vmem [#allocation4], %s459
        %p461 = pneg %p52
        %p462 = pneg %p49
        %p463 = scmp.lt.s32.totalorder %s31, 1
        %s464 = scalar_select %p463, %s31, 1
        %s465 = smul.addr %s464, 8
        %s466 = smul.addr %s465, 4
        %s467 = scalar_lea.vmem %s1, %s466
        %p468 = pneg %p78
        %p469 = pneg %p75
        %p470 = pneg %p99
        %p471 = pneg %p96
        %p472 = pneg %p120
        %p473 = pneg %p117
        %p474 = pneg %p141
        %p475 = pneg %p138
        %p476 = pneg %p162
        %p477 = pneg %p159
        %p478 = pneg %p183
        %p479 = pneg %p180
        %p480 = pneg %p204
        %p481 = pneg %p201
        %p482 = pneg %p225
        %p483 = pneg %p222
        %p484 = pneg %p246
        %p485 = pneg %p243
        %p486 = pneg %p267
        %p487 = pneg %p264
        %p488 = pneg %p288
        %p489 = pneg %p285
        %p490 = pneg %p309
        %p491 = pneg %p306
        %p492 = pneg %p330
        %p493 = pneg %p327
        %p494 = pneg %p356
        %p495 = pneg %p353
        %s496 = sand.u32 %s343, 1
        %s497 = scalar_lea.sflag [#allocation6], %s496
        %s498 = sand.u32 %s343, 1
        %s499 = smul.addr %s498, 64
        %s500 = scalar_lea.vmem [#allocation7], %s499
        %p501 = scmp.lt.s32.totalorder %s31, 1
        %s502 = scalar_select %p501, %s31, 1
        %s503 = smul.addr %s502, 8
        %s504 = smul.addr %s503, 4
        %s505 = scalar_lea.vmem %s1, %s504
        %v507 = vld [vmem:[%s451] sm:$0xf]
        %v508 = vld [vmem:[%s451 + $0x4] sm:$0xf]
        %v509 = vld [vmem:[%s451 + $0x8] sm:$0xf]
        %v510 = vld [vmem:[%s451 + $0xc] sm:$0xf]
        %v511 = vld [vmem:[%s451 + $0x10] sm:$0xf]
        %v512 = vld [vmem:[%s451 + $0x14] sm:$0xf]
        %v513 = vld [vmem:[%s451 + $0x18] sm:$0xf]
        %v514 = vld [vmem:[%s451 + $0x1c] sm:$0xf]
        %v515 = vld [vmem:[%s451 + $0x20] sm:$0xf]
        %v516 = vld [vmem:[%s451 + $0x24] sm:$0xf]
        %v517 = vld [vmem:[%s451 + $0x28] sm:$0xf]
        %v518 = vld [vmem:[%s451 + $0x2c] sm:$0xf]
        %v519 = vld [vmem:[%s451 + $0x30] sm:$0xf]
        %v520 = vld [vmem:[%s451 + $0x34] sm:$0xf]
        %v521 = vld [vmem:[%s451 + $0x38] sm:$0xf]
        %v522 = vld [vmem:[%s451 + $0x3c] sm:$0xf]
        %v523 = vld [vmem:[%s451 + $0x40] sm:$0xf]
        %v524 = vld [vmem:[%s451 + $0x44] sm:$0xf]
        %v525 = vld [vmem:[%s451 + $0x48] sm:$0xf]
        %v526 = vld [vmem:[%s451 + $0x4c] sm:$0xf]
        %v527 = vld [vmem:[%s451 + $0x50] sm:$0xf]
        %v528 = vld [vmem:[%s451 + $0x54] sm:$0xf]
        %v529 = vld [vmem:[%s451 + $0x58] sm:$0xf]
        %v530 = vld [vmem:[%s451 + $0x5c] sm:$0xf]
        %v531 = vld [vmem:[%s451 + $0x60] sm:$0xf]
        %v532 = vld [vmem:[%s451 + $0x64] sm:$0xf]
        %v533 = vld [vmem:[%s451 + $0x68] sm:$0xf]
        %v534 = vld [vmem:[%s451 + $0x6c] sm:$0xf]
        %v535 = vld [vmem:[%s451 + $0x70] sm:$0xf]
        %v536 = vld [vmem:[%s451 + $0x74] sm:$0xf]
        %v537 = vld [vmem:[%s451 + $0x78] sm:$0xf]
        %v538 = vld [vmem:[%s451 + $0x7c] sm:$0xf]
        %v539 = vld [vmem:[%s2] sm:$0xf]
        %v540 = vld [vmem:[%s2 + $0x4] sm:$0xf]
        %v541 = vld [vmem:[%s2 + $0x8] sm:$0xf]
        %v542 = vld [vmem:[%s2 + $0xc] sm:$0xf]
        %v575 = vunpack.c.l.b16 %v507
        %v576 = vunpack.c.l.b16 %v508
        %v577 = vunpack.c.l.b16 %v509
        %v578 = vunpack.c.l.b16 %v510
        %v579 = vunpack.c.l.b16 %v511
        %v580 = vunpack.c.l.b16 %v512
        %v581 = vunpack.c.l.b16 %v513
        %v582 = vunpack.c.l.b16 %v514
        %v583 = vunpack.c.l.b16 %v515
        %v584 = vunpack.c.l.b16 %v516
        %v585 = vunpack.c.l.b16 %v517
        %v586 = vunpack.c.l.b16 %v518
        %v587 = vunpack.c.l.b16 %v519
        %v588 = vunpack.c.l.b16 %v520
        %v589 = vunpack.c.l.b16 %v521
        %v590 = vunpack.c.l.b16 %v522
        %v591 = vunpack.c.l.b16 %v523
        %v592 = vunpack.c.l.b16 %v524
        %v593 = vunpack.c.l.b16 %v525
        %v594 = vunpack.c.l.b16 %v526
        %v595 = vunpack.c.l.b16 %v527
        %v596 = vunpack.c.l.b16 %v528
        %v597 = vunpack.c.l.b16 %v529
        %v598 = vunpack.c.l.b16 %v530
        %v599 = vunpack.c.l.b16 %v531
        %v600 = vunpack.c.l.b16 %v532
        %v601 = vunpack.c.l.b16 %v533
        %v602 = vunpack.c.l.b16 %v534
        %v603 = vunpack.c.l.b16 %v535
        %v604 = vunpack.c.l.b16 %v536
        %v605 = vunpack.c.l.b16 %v537
        %v606 = vunpack.c.l.b16 %v538
        %v607 = vpack.c.b16 %v576, %v575
        %v608 = vpack.c.b16 %v578, %v577
        %v609 = vpack.c.b16 %v580, %v579
        %v610 = vpack.c.b16 %v582, %v581
        %v611 = vpack.c.b16 %v584, %v583
        %v612 = vpack.c.b16 %v586, %v585
        %v613 = vpack.c.b16 %v588, %v587
        %v614 = vpack.c.b16 %v590, %v589
        %v615 = vpack.c.b16 %v592, %v591
        %v616 = vpack.c.b16 %v594, %v593
        %v617 = vpack.c.b16 %v596, %v595
        %v618 = vpack.c.b16 %v598, %v597
        %v619 = vpack.c.b16 %v600, %v599
        %v620 = vpack.c.b16 %v602, %v601
        %v621 = vpack.c.b16 %v604, %v603
        %v622 = vpack.c.b16 %v606, %v605
        %v627 = vunpack.c.l.b16 %v539
        %v628 = vunpack.c.l.b16 %v540
        %v629 = vunpack.c.l.b16 %v541
        %v630 = vunpack.c.l.b16 %v542
        %v631 = vpack.c.b16 %v628, %v627
        %v632 = vpack.c.b16 %v630, %v629
        %vm635 = vcmask 261120
        %v637 = vsel %vm635, %v607, 0
        %v640 = vsel %vm635, %v608, 0
        %v643 = vsel %vm635, %v609, 0
        %v646 = vsel %vm635, %v610, 0
        %v649 = vsel %vm635, %v611, 0
        %v652 = vsel %vm635, %v612, 0
        %v655 = vsel %vm635, %v613, 0
        %v658 = vsel %vm635, %v614, 0
        %v661 = vsel %vm635, %v615, 0
        %v664 = vsel %vm635, %v616, 0
        %v667 = vsel %vm635, %v617, 0
        %v670 = vsel %vm635, %v618, 0
        %v673 = vsel %vm635, %v619, 0
        %v676 = vsel %vm635, %v620, 0
        %v679 = vsel %vm635, %v621, 0
        %v682 = vsel %vm635, %v622, 0
        %684 = vmatprep.subr.bf16.mxu0 0
        %685 = vmatpush1.bf16.msra.mxu0 0
        %686 = vmatprep.subr.bf16.mxu0 0
        %687 = vmatpush1.bf16.msra.mxu0 0
        %688 = vmatprep.subr.bf16.mxu0 0
        %689 = vmatpush1.bf16.msra.mxu0 0
        %690 = vmatprep.subr.bf16.mxu0 0
        %691 = vmatpush1.bf16.msra.mxu0 0
        %692 = vmatprep.subr.bf16.mxu0 0
        %693 = vmatpush1.bf16.msra.mxu0 0
        %694 = vmatprep.subr.bf16.mxu0 0
        %695 = vmatpush1.bf16.msra.mxu0 0
        %696 = vmatprep.subr.bf16.mxu0 0
        %697 = vmatpush1.bf16.msra.mxu0 %v632
        %698 = vmatprep.subr.bf16.mxu0 0
        %699 = vmatpush1.bf16.msra.mxu0 %v631
        %700 = vmatprep.subr.bf16.mxu0 0
        %701 = vmatpush2.bf16.msra.mxu0 0
        %702 = vmatprep.subr.bf16.mxu0 0
        %703 = vmatpush2.bf16.msra.mxu0 0
        %704 = vmatprep.subr.bf16.mxu0 0
        %705 = vmatpush2.bf16.msra.mxu0 0
        %706 = vmatprep.subr.bf16.mxu0 0
        %707 = vmatpush2.bf16.msra.mxu0 0
        %708 = vmatprep.subr.bf16.mxu0 0
        %709 = vmatpush2.bf16.msra.mxu0 0
        %710 = vmatprep.subr.bf16.mxu0 0
        %711 = vmatpush2.bf16.msra.mxu0 0
        %712 = vmatprep.subr.bf16.mxu0 0
        %713 = vmatpush2.bf16.msra.mxu0 0
        %714 = vmatprep.subr.bf16.mxu0 0
        %715 = vmatpush2.bf16.msra.mxu0 0
        %716 = vmatprep.mubr.bf16.mxu0 0
        %717 = vmatmul.mubr.bf16.gmra.mxu0 %v637
        %v718 = vpop.f32.mrf.mxu0
        %v719 = vadd.f32 0.0, %v718
        %v720 = vpop.f32.mrf.mxu0
        %v721 = vpop.f32.mrf.mxu0
        %v722 = vadd.f32 0.0, %v721
        %v723 = vpop.f32.mrf.mxu0
        %724 = vmatprep.mubr.bf16.mxu0 0
        %725 = vmatmul.mubr.bf16.gmra.mxu0 %v640
        %v726 = vpop.f32.mrf.mxu0
        %v727 = vadd.f32 0.0, %v726
        %v728 = vpop.f32.mrf.mxu0
        %v729 = vpop.f32.mrf.mxu0
        %v730 = vadd.f32 0.0, %v729
        %v731 = vpop.f32.mrf.mxu0
        %732 = vmatprep.mubr.bf16.mxu0 0
        %733 = vmatmul.mubr.bf16.gmra.mxu0 %v643
        %v734 = vpop.f32.mrf.mxu0
        %v735 = vadd.f32 0.0, %v734
        %v736 = vpop.f32.mrf.mxu0
        %v737 = vpop.f32.mrf.mxu0
        %v738 = vadd.f32 0.0, %v737
        %v739 = vpop.f32.mrf.mxu0
        %740 = vmatprep.mubr.bf16.mxu0 0
        %741 = vmatmul.mubr.bf16.gmra.mxu0 %v646
        %v742 = vpop.f32.mrf.mxu0
        %v743 = vadd.f32 0.0, %v742
        %v744 = vpop.f32.mrf.mxu0
        %v745 = vpop.f32.mrf.mxu0
        %v746 = vadd.f32 0.0, %v745
        %v747 = vpop.f32.mrf.mxu0
        %748 = vmatprep.mubr.bf16.mxu0 0
        %749 = vmatmul.mubr.bf16.gmra.mxu0 %v649
        %v750 = vpop.f32.mrf.mxu0
        %v751 = vadd.f32 0.0, %v750
        %v752 = vpop.f32.mrf.mxu0
        %v753 = vpop.f32.mrf.mxu0
        %v754 = vadd.f32 0.0, %v753
        %v755 = vpop.f32.mrf.mxu0
        %756 = vmatprep.mubr.bf16.mxu0 0
        %757 = vmatmul.mubr.bf16.gmra.mxu0 %v652
        %v758 = vpop.f32.mrf.mxu0
        %v759 = vadd.f32 0.0, %v758
        %v760 = vpop.f32.mrf.mxu0
        %v761 = vpop.f32.mrf.mxu0
        %v762 = vadd.f32 0.0, %v761
        %v763 = vpop.f32.mrf.mxu0
        %764 = vmatprep.mubr.bf16.mxu0 0
        %765 = vmatmul.mubr.bf16.gmra.mxu0 %v655
        %v766 = vpop.f32.mrf.mxu0
        %v767 = vadd.f32 0.0, %v766
        %v768 = vpop.f32.mrf.mxu0
        %v769 = vpop.f32.mrf.mxu0
        %v770 = vadd.f32 0.0, %v769
        %v771 = vpop.f32.mrf.mxu0
        %772 = vmatprep.mubr.bf16.mxu0 0
        %773 = vmatmul.mubr.bf16.gmra.mxu0 %v658
        %v774 = vpop.f32.mrf.mxu0
        %v775 = vadd.f32 0.0, %v774
        %v776 = vpop.f32.mrf.mxu0
        %v777 = vpop.f32.mrf.mxu0
        %v778 = vadd.f32 0.0, %v777
        %v779 = vpop.f32.mrf.mxu0
        %780 = vmatprep.mubr.bf16.mxu0 0
        %781 = vmatmul.mubr.bf16.gmra.mxu0 %v661
        %v782 = vpop.f32.mrf.mxu0
        %v783 = vadd.f32 0.0, %v782
        %v784 = vpop.f32.mrf.mxu0
        %v785 = vpop.f32.mrf.mxu0
        %v786 = vadd.f32 0.0, %v785
        %v787 = vpop.f32.mrf.mxu0
        %788 = vmatprep.mubr.bf16.mxu0 0
        %789 = vmatmul.mubr.bf16.gmra.mxu0 %v664
        %v790 = vpop.f32.mrf.mxu0
        %v791 = vadd.f32 0.0, %v790
        %v792 = vpop.f32.mrf.mxu0
        %v793 = vpop.f32.mrf.mxu0
        %v794 = vadd.f32 0.0, %v793
        %v795 = vpop.f32.mrf.mxu0
        %796 = vmatprep.mubr.bf16.mxu0 0
        %797 = vmatmul.mubr.bf16.gmra.mxu0 %v667
        %v798 = vpop.f32.mrf.mxu0
        %v799 = vadd.f32 0.0, %v798
        %v800 = vpop.f32.mrf.mxu0
        %v801 = vpop.f32.mrf.mxu0
        %v802 = vadd.f32 0.0, %v801
        %v803 = vpop.f32.mrf.mxu0
        %804 = vmatprep.mubr.bf16.mxu0 0
        %805 = vmatmul.mubr.bf16.gmra.mxu0 %v670
        %v806 = vpop.f32.mrf.mxu0
        %v807 = vadd.f32 0.0, %v806
        %v808 = vpop.f32.mrf.mxu0
        %v809 = vpop.f32.mrf.mxu0
        %v810 = vadd.f32 0.0, %v809
        %v811 = vpop.f32.mrf.mxu0
        %812 = vmatprep.mubr.bf16.mxu0 0
        %813 = vmatmul.mubr.bf16.gmra.mxu0 %v673
        %v814 = vpop.f32.mrf.mxu0
        %v815 = vadd.f32 0.0, %v814
        %v816 = vpop.f32.mrf.mxu0
        %v817 = vpop.f32.mrf.mxu0
        %v818 = vadd.f32 0.0, %v817
        %v819 = vpop.f32.mrf.mxu0
        %820 = vmatprep.mubr.bf16.mxu0 0
        %821 = vmatmul.mubr.bf16.gmra.mxu0 %v676
        %v822 = vpop.f32.mrf.mxu0
        %v823 = vadd.f32 0.0, %v822
        %v824 = vpop.f32.mrf.mxu0
        %v825 = vpop.f32.mrf.mxu0
        %v826 = vadd.f32 0.0, %v825
        %v827 = vpop.f32.mrf.mxu0
        %828 = vmatprep.mubr.bf16.mxu0 0
        %829 = vmatmul.mubr.bf16.gmra.mxu0 %v679
        %v830 = vpop.f32.mrf.mxu0
        %v831 = vadd.f32 0.0, %v830
        %v832 = vpop.f32.mrf.mxu0
        %v833 = vpop.f32.mrf.mxu0
        %v834 = vadd.f32 0.0, %v833
        %v835 = vpop.f32.mrf.mxu0
        %836 = vmatprep.mubr.bf16.mxu0 0
        %837 = vmatmul.mubr.bf16.gmra.mxu0 %v682
        %v838 = vpop.f32.mrf.mxu0
        %v839 = vadd.f32 0.0, %v838
        %v840 = vpop.f32.mrf.mxu0
        %v841 = vpop.f32.mrf.mxu0
        %v842 = vadd.f32 0.0, %v841
        %v843 = vpop.f32.mrf.mxu0
        %844 = vdwg.mxu0
        %v845 = vld [vmem:[%s3] sm:$0x1]
        %v847 = vlaneseq
        %v848 = vshrl.u32 %v847, 7
        %v849 = vsub.s32 0, %v848
        %v850 = vrot.slane %v845, %v849
        %v852 = vmul.f32 %v719, %v850
        %v853 = vmul.f32 %v722, %v850
        %v854 = vmul.f32 %v727, %v850
        %v855 = vmul.f32 %v730, %v850
        %v856 = vmul.f32 %v735, %v850
        %v857 = vmul.f32 %v738, %v850
        %v858 = vmul.f32 %v743, %v850
        %v859 = vmul.f32 %v746, %v850
        %v860 = vmul.f32 %v751, %v850
        %v861 = vmul.f32 %v754, %v850
        %v862 = vmul.f32 %v759, %v850
        %v863 = vmul.f32 %v762, %v850
        %v864 = vmul.f32 %v767, %v850
        %v865 = vmul.f32 %v770, %v850
        %v866 = vmul.f32 %v775, %v850
        %v867 = vmul.f32 %v778, %v850
        %v868 = vmul.f32 %v783, %v850
        %v869 = vmul.f32 %v786, %v850
        %v870 = vmul.f32 %v791, %v850
        %v871 = vmul.f32 %v794, %v850
        %v872 = vmul.f32 %v799, %v850
        %v873 = vmul.f32 %v802, %v850
        %v874 = vmul.f32 %v807, %v850
        %v875 = vmul.f32 %v810, %v850
        %v876 = vmul.f32 %v815, %v850
        %v877 = vmul.f32 %v818, %v850
        %v878 = vmul.f32 %v823, %v850
        %v879 = vmul.f32 %v826, %v850
        %v880 = vmul.f32 %v831, %v850
        %v881 = vmul.f32 %v834, %v850
        %v882 = vmul.f32 %v839, %v850
        %v883 = vmul.f32 %v842, %v850
        %v884 = vld [vmem:[%s4] sm:$0x1]
        %v886 = vlaneseq
        %v887 = vshrl.u32 %v886, 7
        %v888 = vsub.s32 0, %v887
        %v889 = vrot.slane %v884, %v888
        %v891 = vadd.f32 %v852, %v889
        %v892 = vadd.f32 %v853, %v889
        %v893 = vadd.f32 %v854, %v889
        %v894 = vadd.f32 %v855, %v889
        %v895 = vadd.f32 %v856, %v889
        %v896 = vadd.f32 %v857, %v889
        %v897 = vadd.f32 %v858, %v889
        %v898 = vadd.f32 %v859, %v889
        %v899 = vadd.f32 %v860, %v889
        %v900 = vadd.f32 %v861, %v889
        %v901 = vadd.f32 %v862, %v889
        %v902 = vadd.f32 %v863, %v889
        %v903 = vadd.f32 %v864, %v889
        %v904 = vadd.f32 %v865, %v889
        %v905 = vadd.f32 %v866, %v889
        %v906 = vadd.f32 %v867, %v889
        %v907 = vadd.f32 %v868, %v889
        %v908 = vadd.f32 %v869, %v889
        %v909 = vadd.f32 %v870, %v889
        %v910 = vadd.f32 %v871, %v889
        %v911 = vadd.f32 %v872, %v889
        %v912 = vadd.f32 %v873, %v889
        %v913 = vadd.f32 %v874, %v889
        %v914 = vadd.f32 %v875, %v889
        %v915 = vadd.f32 %v876, %v889
        %v916 = vadd.f32 %v877, %v889
        %v917 = vadd.f32 %v878, %v889
        %v918 = vadd.f32 %v879, %v889
        %v919 = vadd.f32 %v880, %v889
        %v920 = vadd.f32 %v881, %v889
        %v921 = vadd.f32 %v882, %v889
        %v922 = vadd.f32 %v883, %v889
        %v923 = vmax.f32 %v891, 0.0
        %v924 = vmax.f32 %v892, 0.0
        %v925 = vmax.f32 %v893, 0.0
        %v926 = vmax.f32 %v894, 0.0
        %v927 = vmax.f32 %v895, 0.0
        %v928 = vmax.f32 %v896, 0.0
        %v929 = vmax.f32 %v897, 0.0
        %v930 = vmax.f32 %v898, 0.0
        %v931 = vmax.f32 %v899, 0.0
        %v932 = vmax.f32 %v900, 0.0
        %v933 = vmax.f32 %v901, 0.0
        %v934 = vmax.f32 %v902, 0.0
        %v935 = vmax.f32 %v903, 0.0
        %v936 = vmax.f32 %v904, 0.0
        %v937 = vmax.f32 %v905, 0.0
        %v938 = vmax.f32 %v906, 0.0
        %v939 = vmax.f32 %v907, 0.0
        %v940 = vmax.f32 %v908, 0.0
        %v941 = vmax.f32 %v909, 0.0
        %v942 = vmax.f32 %v910, 0.0
        %v943 = vmax.f32 %v911, 0.0
        %v944 = vmax.f32 %v912, 0.0
        %v945 = vmax.f32 %v913, 0.0
        %v946 = vmax.f32 %v914, 0.0
        %v947 = vmax.f32 %v915, 0.0
        %v948 = vmax.f32 %v916, 0.0
        %v949 = vmax.f32 %v917, 0.0
        %v950 = vmax.f32 %v918, 0.0
        %v951 = vmax.f32 %v919, 0.0
        %v952 = vmax.f32 %v920, 0.0
        %v953 = vmax.f32 %v921, 0.0
        %v954 = vmax.f32 %v922, 0.0
        %vm955 = vcmask 254976
        %956 = vst.msk [vmem:[#allocation2] sm:$0x3] %vm955, 0.0
        %957 = vst.msk [vmem:[#allocation2 + $0x2] sm:$0x3] %vm955, 0.0
        %958 = vst.msk [vmem:[#allocation2 + $0x4] sm:$0x3] %vm955, 0.0
        %959 = vst.msk [vmem:[#allocation2 + $0x6] sm:$0x3] %vm955, 0.0
        %960 = vst.msk [vmem:[#allocation2 + $0x8] sm:$0x3] %vm955, 0.0
        %961 = vst.msk [vmem:[#allocation2 + $0xa] sm:$0x3] %vm955, 0.0
        %962 = vst.msk [vmem:[#allocation2 + $0xc] sm:$0x3] %vm955, 0.0
        %963 = vst.msk [vmem:[#allocation2 + $0xe] sm:$0x3] %vm955, 0.0
        %964 = vst.msk [vmem:[#allocation2 + $0x10] sm:$0x3] %vm955, 0.0
        %965 = vst.msk [vmem:[#allocation2 + $0x12] sm:$0x3] %vm955, 0.0
        %966 = vst.msk [vmem:[#allocation2 + $0x14] sm:$0x3] %vm955, 0.0
        %967 = vst.msk [vmem:[#allocation2 + $0x16] sm:$0x3] %vm955, 0.0
        %968 = vst.msk [vmem:[#allocation2 + $0x18] sm:$0x3] %vm955, 0.0
        %969 = vst.msk [vmem:[#allocation2 + $0x1a] sm:$0x3] %vm955, 0.0
        %970 = vst.msk [vmem:[#allocation2 + $0x1c] sm:$0x3] %vm955, 0.0
        %971 = vst.msk [vmem:[#allocation2 + $0x1e] sm:$0x3] %vm955, 0.0
        %972 = vst.msk [vmem:[#allocation2 + $0x20] sm:$0x3] %vm955, 0.0
        %973 = vst.msk [vmem:[#allocation2 + $0x22] sm:$0x3] %vm955, 0.0
        %974 = vst.msk [vmem:[#allocation2 + $0x24] sm:$0x3] %vm955, 0.0
        %975 = vst.msk [vmem:[#allocation2 + $0x26] sm:$0x3] %vm955, 0.0
        %976 = vst.msk [vmem:[#allocation2 + $0x28] sm:$0x3] %vm955, 0.0
        %977 = vst.msk [vmem:[#allocation2 + $0x2a] sm:$0x3] %vm955, 0.0
        %978 = vst.msk [vmem:[#allocation2 + $0x2c] sm:$0x3] %vm955, 0.0
        %979 = vst.msk [vmem:[#allocation2 + $0x2e] sm:$0x3] %vm955, 0.0
        %980 = vst.msk [vmem:[#allocation2 + $0x30] sm:$0x3] %vm955, 0.0
        %981 = vst.msk [vmem:[#allocation2 + $0x32] sm:$0x3] %vm955, 0.0
        %982 = vst.msk [vmem:[#allocation2 + $0x34] sm:$0x3] %vm955, 0.0
        %983 = vst.msk [vmem:[#allocation2 + $0x36] sm:$0x3] %vm955, 0.0
        %984 = vst.msk [vmem:[#allocation2 + $0x38] sm:$0x3] %vm955, 0.0
        %985 = vst.msk [vmem:[#allocation2 + $0x3a] sm:$0x3] %vm955, 0.0
        %986 = vst.msk [vmem:[#allocation2 + $0x3c] sm:$0x3] %vm955, 0.0
        %987 = vst.msk [vmem:[#allocation2 + $0x3e] sm:$0x3] %vm955, 0.0
        %988 = vst.msk [vmem:[#allocation2 + $0x40] sm:$0x3] %vm955, 0.0
        %989 = vst.msk [vmem:[#allocation2 + $0x42] sm:$0x3] %vm955, 0.0
        %990 = vst.msk [vmem:[#allocation2 + $0x44] sm:$0x3] %vm955, 0.0
        %991 = vst.msk [vmem:[#allocation2 + $0x46] sm:$0x3] %vm955, 0.0
        %992 = vst.msk [vmem:[#allocation2 + $0x48] sm:$0x3] %vm955, 0.0
        %993 = vst.msk [vmem:[#allocation2 + $0x4a] sm:$0x3] %vm955, 0.0
        %994 = vst.msk [vmem:[#allocation2 + $0x4c] sm:$0x3] %vm955, 0.0
        %995 = vst.msk [vmem:[#allocation2 + $0x4e] sm:$0x3] %vm955, 0.0
        %996 = vst.msk [vmem:[#allocation2 + $0x50] sm:$0x3] %vm955, 0.0
        %997 = vst.msk [vmem:[#allocation2 + $0x52] sm:$0x3] %vm955, 0.0
        %998 = vst.msk [vmem:[#allocation2 + $0x54] sm:$0x3] %vm955, 0.0
        %999 = vst.msk [vmem:[#allocation2 + $0x56] sm:$0x3] %vm955, 0.0
        %1000 = vst.msk [vmem:[#allocation2 + $0x58] sm:$0x3] %vm955, 0.0
        %1001 = vst.msk [vmem:[#allocation2 + $0x5a] sm:$0x3] %vm955, 0.0
        %1002 = vst.msk [vmem:[#allocation2 + $0x5c] sm:$0x3] %vm955, 0.0
        %1003 = vst.msk [vmem:[#allocation2 + $0x5e] sm:$0x3] %vm955, 0.0
        %1004 = vst.msk [vmem:[#allocation2 + $0x60] sm:$0x3] %vm955, 0.0
        %1005 = vst.msk [vmem:[#allocation2 + $0x62] sm:$0x3] %vm955, 0.0
        %1006 = vst.msk [vmem:[#allocation2 + $0x64] sm:$0x3] %vm955, 0.0
        %1007 = vst.msk [vmem:[#allocation2 + $0x66] sm:$0x3] %vm955, 0.0
        %1008 = vst.msk [vmem:[#allocation2 + $0x68] sm:$0x3] %vm955, 0.0
        %1009 = vst.msk [vmem:[#allocation2 + $0x6a] sm:$0x3] %vm955, 0.0
        %1010 = vst.msk [vmem:[#allocation2 + $0x6c] sm:$0x3] %vm955, 0.0
        %1011 = vst.msk [vmem:[#allocation2 + $0x6e] sm:$0x3] %vm955, 0.0
        %1012 = vst.msk [vmem:[#allocation2 + $0x70] sm:$0x3] %vm955, 0.0
        %1013 = vst.msk [vmem:[#allocation2 + $0x72] sm:$0x3] %vm955, 0.0
        %1014 = vst.msk [vmem:[#allocation2 + $0x74] sm:$0x3] %vm955, 0.0
        %1015 = vst.msk [vmem:[#allocation2 + $0x76] sm:$0x3] %vm955, 0.0
        %1016 = vst.msk [vmem:[#allocation2 + $0x78] sm:$0x3] %vm955, 0.0
        %1017 = vst.msk [vmem:[#allocation2 + $0x7a] sm:$0x3] %vm955, 0.0
        %1018 = vst.msk [vmem:[#allocation2 + $0x7c] sm:$0x3] %vm955, 0.0
        %1019 = vst.msk [vmem:[#allocation2 + $0x7e] sm:$0x3] %vm955, 0.0
        %1020 = vst.msk [vmem:[#allocation2 + $0x80] sm:$0x3] %vm955, 0.0
        %1021 = vst.msk [vmem:[#allocation2 + $0x82] sm:$0x3] %vm955, 0.0
        %1022 = vst.msk [vmem:[#allocation2 + $0x84] sm:$0x3] %vm955, 0.0
        %1023 = vst.msk [vmem:[#allocation2 + $0x86] sm:$0x3] %vm955, 0.0
        %1024 = vst.msk [vmem:[#allocation2 + $0x88] sm:$0x3] %vm955, 0.0
        %1025 = vst.msk [vmem:[#allocation2 + $0x8a] sm:$0x3] %vm955, 0.0
        %1026 = vst.msk [vmem:[#allocation2 + $0x8c] sm:$0x3] %vm955, 0.0
        %1027 = vst.msk [vmem:[#allocation2 + $0x8e] sm:$0x3] %vm955, 0.0
        %1028 = vst.msk [vmem:[#allocation2 + $0x90] sm:$0x3] %vm955, 0.0
        %1029 = vst.msk [vmem:[#allocation2 + $0x92] sm:$0x3] %vm955, 0.0
        %1030 = vst.msk [vmem:[#allocation2 + $0x94] sm:$0x3] %vm955, 0.0
        %1031 = vst.msk [vmem:[#allocation2 + $0x96] sm:$0x3] %vm955, 0.0
        %1032 = vst.msk [vmem:[#allocation2 + $0x98] sm:$0x3] %vm955, 0.0
        %1033 = vst.msk [vmem:[#allocation2 + $0x9a] sm:$0x3] %vm955, 0.0
        %1034 = vst.msk [vmem:[#allocation2 + $0x9c] sm:$0x3] %vm955, 0.0
        %1035 = vst.msk [vmem:[#allocation2 + $0x9e] sm:$0x3] %vm955, 0.0
        %1036 = vst.msk [vmem:[#allocation2 + $0xa0] sm:$0x3] %vm955, 0.0
        %1037 = vst.msk [vmem:[#allocation2 + $0xa2] sm:$0x3] %vm955, 0.0
        %1038 = vst.msk [vmem:[#allocation2 + $0xa4] sm:$0x3] %vm955, 0.0
        %1039 = vst.msk [vmem:[#allocation2 + $0xa6] sm:$0x3] %vm955, 0.0
        %1040 = vst.msk [vmem:[#allocation2 + $0xa8] sm:$0x3] %vm955, 0.0
        %1041 = vst.msk [vmem:[#allocation2 + $0xaa] sm:$0x3] %vm955, 0.0
        %1042 = vst.msk [vmem:[#allocation2 + $0xac] sm:$0x3] %vm955, 0.0
        %1043 = vst.msk [vmem:[#allocation2 + $0xae] sm:$0x3] %vm955, 0.0
        %1044 = vst.msk [vmem:[#allocation2 + $0xb0] sm:$0x3] %vm955, 0.0
        %1045 = vst.msk [vmem:[#allocation2 + $0xb2] sm:$0x3] %vm955, 0.0
        %1046 = vst.msk [vmem:[#allocation2 + $0xb4] sm:$0x3] %vm955, 0.0
        %1047 = vst.msk [vmem:[#allocation2 + $0xb6] sm:$0x3] %vm955, 0.0
        %1048 = vst.msk [vmem:[#allocation2 + $0xb8] sm:$0x3] %vm955, 0.0
        %1049 = vst.msk [vmem:[#allocation2 + $0xba] sm:$0x3] %vm955, 0.0
        %1050 = vst.msk [vmem:[#allocation2 + $0xbc] sm:$0x3] %vm955, 0.0
        %1051 = vst.msk [vmem:[#allocation2 + $0xbe] sm:$0x3] %vm955, 0.0
        %1052 = vst.msk [vmem:[#allocation2 + $0xc0] sm:$0x3] %vm955, 0.0
        %1053 = vst.msk [vmem:[#allocation2 + $0xc2] sm:$0x3] %vm955, 0.0
        %1054 = vst.msk [vmem:[#allocation2 + $0xc4] sm:$0x3] %vm955, 0.0
        %1055 = vst.msk [vmem:[#allocation2 + $0xc6] sm:$0x3] %vm955, 0.0
        %1056 = vst.msk [vmem:[#allocation2 + $0xc8] sm:$0x3] %vm955, 0.0
        %1057 = vst.msk [vmem:[#allocation2 + $0xca] sm:$0x3] %vm955, 0.0
        %1058 = vst.msk [vmem:[#allocation2 + $0xcc] sm:$0x3] %vm955, 0.0
        %1059 = vst.msk [vmem:[#allocation2 + $0xce] sm:$0x3] %vm955, 0.0
        %1060 = vst.msk [vmem:[#allocation2 + $0xd0] sm:$0x3] %vm955, 0.0
        %1061 = vst.msk [vmem:[#allocation2 + $0xd2] sm:$0x3] %vm955, 0.0
        %1062 = vst.msk [vmem:[#allocation2 + $0xd4] sm:$0x3] %vm955, 0.0
        %1063 = vst.msk [vmem:[#allocation2 + $0xd6] sm:$0x3] %vm955, 0.0
        %1064 = vst.msk [vmem:[#allocation2 + $0xd8] sm:$0x3] %vm955, 0.0
        %1065 = vst.msk [vmem:[#allocation2 + $0xda] sm:$0x3] %vm955, 0.0
        %1066 = vst.msk [vmem:[#allocation2 + $0xdc] sm:$0x3] %vm955, 0.0
        %1067 = vst.msk [vmem:[#allocation2 + $0xde] sm:$0x3] %vm955, 0.0
        %1068 = vst.msk [vmem:[#allocation2 + $0xe0] sm:$0x3] %vm955, 0.0
        %1069 = vst.msk [vmem:[#allocation2 + $0xe2] sm:$0x3] %vm955, 0.0
        %1070 = vst.msk [vmem:[#allocation2 + $0xe4] sm:$0x3] %vm955, 0.0
        %1071 = vst.msk [vmem:[#allocation2 + $0xe6] sm:$0x3] %vm955, 0.0
        %1072 = vst.msk [vmem:[#allocation2 + $0xe8] sm:$0x3] %vm955, 0.0
        %1073 = vst.msk [vmem:[#allocation2 + $0xea] sm:$0x3] %vm955, 0.0
        %1074 = vst.msk [vmem:[#allocation2 + $0xec] sm:$0x3] %vm955, 0.0
        %1075 = vst.msk [vmem:[#allocation2 + $0xee] sm:$0x3] %vm955, 0.0
        %1076 = vst.msk [vmem:[#allocation2 + $0xf0] sm:$0x3] %vm955, 0.0
        %1077 = vst.msk [vmem:[#allocation2 + $0xf2] sm:$0x3] %vm955, 0.0
        %1078 = vst.msk [vmem:[#allocation2 + $0xf4] sm:$0x3] %vm955, 0.0
        %1079 = vst.msk [vmem:[#allocation2 + $0xf6] sm:$0x3] %vm955, 0.0
        %1080 = vst.msk [vmem:[#allocation2 + $0xf8] sm:$0x3] %vm955, 0.0
        %1081 = vst.msk [vmem:[#allocation2 + $0xfa] sm:$0x3] %vm955, 0.0
        %1082 = vst.msk [vmem:[#allocation2 + $0xfc] sm:$0x3] %vm955, 0.0
        %1083 = vst.msk [vmem:[#allocation2 + $0xfe] sm:$0x3] %vm955, 0.0
        %1084 = vst.msk [vmem:[#allocation2 + $0x100] sm:$0x3] %vm955, 0.0
        %1085 = vst.msk [vmem:[#allocation2 + $0x102] sm:$0x3] %vm955, 0.0
        %1086 = vst.msk [vmem:[#allocation2 + $0x104] sm:$0x3] %vm955, 0.0
        %1087 = vst.msk [vmem:[#allocation2 + $0x106] sm:$0x3] %vm955, 0.0
        %1088 = vst.msk [vmem:[#allocation2 + $0x108] sm:$0x3] %vm955, 0.0
        %1089 = vst.msk [vmem:[#allocation2 + $0x10a] sm:$0x3] %vm955, 0.0
        %1090 = vst.msk [vmem:[#allocation2 + $0x10c] sm:$0x3] %vm955, 0.0
        %1091 = vst.msk [vmem:[#allocation2 + $0x10e] sm:$0x3] %vm955, 0.0
        %1092 = vst.msk [vmem:[#allocation2 + $0x110] sm:$0x3] %vm955, 0.0
        %1093 = vst.msk [vmem:[#allocation2 + $0x112] sm:$0x3] %vm955, 0.0
        %1094 = vst.msk [vmem:[#allocation2 + $0x114] sm:$0x3] %vm955, 0.0
        %1095 = vst.msk [vmem:[#allocation2 + $0x116] sm:$0x3] %vm955, 0.0
        %1096 = vst.msk [vmem:[#allocation2 + $0x118] sm:$0x3] %vm955, 0.0
        %1097 = vst.msk [vmem:[#allocation2 + $0x11a] sm:$0x3] %vm955, 0.0
        %1098 = vst.msk [vmem:[#allocation2 + $0x11c] sm:$0x3] %vm955, 0.0
        %1099 = vst.msk [vmem:[#allocation2 + $0x11e] sm:$0x3] %vm955, 0.0
        %1100 = vst.msk [vmem:[#allocation2 + $0x120] sm:$0x3] %vm955, 0.0
        %1101 = vst.msk [vmem:[#allocation2 + $0x122] sm:$0x3] %vm955, 0.0
        %1102 = vst.msk [vmem:[#allocation2 + $0x124] sm:$0x3] %vm955, 0.0
        %1103 = vst.msk [vmem:[#allocation2 + $0x126] sm:$0x3] %vm955, 0.0
        %1104 = vst.msk [vmem:[#allocation2 + $0x128] sm:$0x3] %vm955, 0.0
        %1105 = vst.msk [vmem:[#allocation2 + $0x12a] sm:$0x3] %vm955, 0.0
        %1106 = vst.msk [vmem:[#allocation2 + $0x12c] sm:$0x3] %vm955, 0.0
        %1107 = vst.msk [vmem:[#allocation2 + $0x12e] sm:$0x3] %vm955, 0.0
        %1108 = vst.msk [vmem:[#allocation2 + $0x130] sm:$0x3] %vm955, 0.0
        %1109 = vst.msk [vmem:[#allocation2 + $0x132] sm:$0x3] %vm955, 0.0
        %1110 = vst.msk [vmem:[#allocation2 + $0x134] sm:$0x3] %vm955, 0.0
        %1111 = vst.msk [vmem:[#allocation2 + $0x136] sm:$0x3] %vm955, 0.0
        %1112 = vst.msk [vmem:[#allocation2 + $0x138] sm:$0x3] %vm955, 0.0
        %1113 = vst.msk [vmem:[#allocation2 + $0x13a] sm:$0x3] %vm955, 0.0
        %1114 = vst.msk [vmem:[#allocation2 + $0x13c] sm:$0x3] %vm955, 0.0
        %1115 = vst.msk [vmem:[#allocation2 + $0x13e] sm:$0x3] %vm955, 0.0
        %1116 = vst.msk [vmem:[#allocation2 + $0x140] sm:$0x3] %vm955, 0.0
        %1117 = vst.msk [vmem:[#allocation2 + $0x142] sm:$0x3] %vm955, 0.0
        %1118 = vst.msk [vmem:[#allocation2 + $0x144] sm:$0x3] %vm955, 0.0
        %1119 = vst.msk [vmem:[#allocation2 + $0x146] sm:$0x3] %vm955, 0.0
        %1120 = vst.msk [vmem:[#allocation2 + $0x148] sm:$0x3] %vm955, 0.0
        %1121 = vst.msk [vmem:[#allocation2 + $0x14a] sm:$0x3] %vm955, 0.0
        %1122 = vst.msk [vmem:[#allocation2 + $0x14c] sm:$0x3] %vm955, 0.0
        %1123 = vst.msk [vmem:[#allocation2 + $0x14e] sm:$0x3] %vm955, 0.0
        %1124 = vst.msk [vmem:[#allocation2 + $0x150] sm:$0x3] %vm955, 0.0
        %1125 = vst.msk [vmem:[#allocation2 + $0x152] sm:$0x3] %vm955, 0.0
        %1126 = vst.msk [vmem:[#allocation2 + $0x154] sm:$0x3] %vm955, 0.0
        %1127 = vst.msk [vmem:[#allocation2 + $0x156] sm:$0x3] %vm955, 0.0
        %1128 = vst.msk [vmem:[#allocation2 + $0x158] sm:$0x3] %vm955, 0.0
        %1129 = vst.msk [vmem:[#allocation2 + $0x15a] sm:$0x3] %vm955, 0.0
        %1130 = vst.msk [vmem:[#allocation2 + $0x15c] sm:$0x3] %vm955, 0.0
        %1131 = vst.msk [vmem:[#allocation2 + $0x15e] sm:$0x3] %vm955, 0.0
        %1132 = vst.msk [vmem:[#allocation2 + $0x160] sm:$0x3] %vm955, 0.0
        %1133 = vst.msk [vmem:[#allocation2 + $0x162] sm:$0x3] %vm955, 0.0
        %1134 = vst.msk [vmem:[#allocation2 + $0x164] sm:$0x3] %vm955, 0.0
        %1135 = vst.msk [vmem:[#allocation2 + $0x166] sm:$0x3] %vm955, 0.0
        %1136 = vst.msk [vmem:[#allocation2 + $0x168] sm:$0x3] %vm955, 0.0
        %1137 = vst.msk [vmem:[#allocation2 + $0x16a] sm:$0x3] %vm955, 0.0
        %1138 = vst.msk [vmem:[#allocation2 + $0x16c] sm:$0x3] %vm955, 0.0
        %1139 = vst.msk [vmem:[#allocation2 + $0x16e] sm:$0x3] %vm955, 0.0
        %1140 = vst.msk [vmem:[#allocation2 + $0x170] sm:$0x3] %vm955, 0.0
        %1141 = vst.msk [vmem:[#allocation2 + $0x172] sm:$0x3] %vm955, 0.0
        %1142 = vst.msk [vmem:[#allocation2 + $0x174] sm:$0x3] %vm955, 0.0
        %1143 = vst.msk [vmem:[#allocation2 + $0x176] sm:$0x3] %vm955, 0.0
        %1144 = vst.msk [vmem:[#allocation2 + $0x178] sm:$0x3] %vm955, 0.0
        %1145 = vst.msk [vmem:[#allocation2 + $0x17a] sm:$0x3] %vm955, 0.0
        %1146 = vst.msk [vmem:[#allocation2 + $0x17c] sm:$0x3] %vm955, 0.0
        %1147 = vst.msk [vmem:[#allocation2 + $0x17e] sm:$0x3] %vm955, 0.0
        %1148 = vst.msk [vmem:[#allocation2 + $0x180] sm:$0x3] %vm955, 0.0
        %1149 = vst.msk [vmem:[#allocation2 + $0x182] sm:$0x3] %vm955, 0.0
        %1150 = vst.msk [vmem:[#allocation2 + $0x184] sm:$0x3] %vm955, 0.0
        %1151 = vst.msk [vmem:[#allocation2 + $0x186] sm:$0x3] %vm955, 0.0
        %1152 = vst.msk [vmem:[#allocation2 + $0x188] sm:$0x3] %vm955, 0.0
        %1153 = vst.msk [vmem:[#allocation2 + $0x18a] sm:$0x3] %vm955, 0.0
        %1154 = vst.msk [vmem:[#allocation2 + $0x18c] sm:$0x3] %vm955, 0.0
        %1155 = vst.msk [vmem:[#allocation2 + $0x18e] sm:$0x3] %vm955, 0.0
        %v1188 = vcombine.high %v923, %v923
        %v1190 = vunpack.c.l.s4 1983009808
        %v1191 = vunpack.c.0.s8 %v1190
        %v1192 = vlaneseq
        %v1193 = vshrl.u32 %v1192, 7
        %v1194 = vsub.s32 %v1191, %v1193
        %v1195 = vrot.slane %v923, %v1194
        %v1197 = vunpack.c.l.s4 1983009808
        %v1198 = vunpack.c.0.s8 %v1197
        %v1199 = vlaneseq
        %v1200 = vshrl.u32 %v1199, 7
        %v1201 = vsub.s32 %v1198, %v1200
        %v1202 = vrot.slane %v1188, %v1201
        %v1203 = vcombine.high %v1195, %v1195
        %v1204 = vcombine.high %v1202, %v1202
        %v1205 = vcombine.high %v924, %v924
        %v1207 = vunpack.c.l.s4 1983009808
        %v1208 = vunpack.c.0.s8 %v1207
        %v1209 = vlaneseq
        %v1210 = vshrl.u32 %v1209, 7
        %v1211 = vsub.s32 %v1208, %v1210
        %v1212 = vrot.slane %v924, %v1211
        %v1214 = vunpack.c.l.s4 1983009808
        %v1215 = vunpack.c.0.s8 %v1214
        %v1216 = vlaneseq
        %v1217 = vshrl.u32 %v1216, 7
        %v1218 = vsub.s32 %v1215, %v1217
        %v1219 = vrot.slane %v1205, %v1218
        %v1220 = vcombine.high %v1212, %v1212
        %v1221 = vcombine.high %v1219, %v1219
        %v1222 = vcombine.high %v925, %v925
        %v1224 = vunpack.c.l.s4 1983009808
        %v1225 = vunpack.c.0.s8 %v1224
        %v1226 = vlaneseq
        %v1227 = vshrl.u32 %v1226, 7
        %v1228 = vsub.s32 %v1225, %v1227
        %v1229 = vrot.slane %v925, %v1228
        %v1231 = vunpack.c.l.s4 1983009808
        %v1232 = vunpack.c.0.s8 %v1231
        %v1233 = vlaneseq
        %v1234 = vshrl.u32 %v1233, 7
        %v1235 = vsub.s32 %v1232, %v1234
        %v1236 = vrot.slane %v1222, %v1235
        %v1237 = vcombine.high %v1229, %v1229
        %v1238 = vcombine.high %v1236, %v1236
        %v1239 = vcombine.high %v926, %v926
        %v1241 = vunpack.c.l.s4 1983009808
        %v1242 = vunpack.c.0.s8 %v1241
        %v1243 = vlaneseq
        %v1244 = vshrl.u32 %v1243, 7
        %v1245 = vsub.s32 %v1242, %v1244
        %v1246 = vrot.slane %v926, %v1245
        %v1248 = vunpack.c.l.s4 1983009808
        %v1249 = vunpack.c.0.s8 %v1248
        %v1250 = vlaneseq
        %v1251 = vshrl.u32 %v1250, 7
        %v1252 = vsub.s32 %v1249, %v1251
        %v1253 = vrot.slane %v1239, %v1252
        %v1254 = vcombine.high %v1246, %v1246
        %v1255 = vcombine.high %v1253, %v1253
        %v1256 = vcombine.high %v927, %v927
        %v1258 = vunpack.c.l.s4 1983009808
        %v1259 = vunpack.c.0.s8 %v1258
        %v1260 = vlaneseq
        %v1261 = vshrl.u32 %v1260, 7
        %v1262 = vsub.s32 %v1259, %v1261
        %v1263 = vrot.slane %v927, %v1262
        %v1265 = vunpack.c.l.s4 1983009808
        %v1266 = vunpack.c.0.s8 %v1265
        %v1267 = vlaneseq
        %v1268 = vshrl.u32 %v1267, 7
        %v1269 = vsub.s32 %v1266, %v1268
        %v1270 = vrot.slane %v1256, %v1269
        %v1271 = vcombine.high %v1263, %v1263
        %v1272 = vcombine.high %v1270, %v1270
        %v1273 = vcombine.high %v928, %v928
        %v1275 = vunpack.c.l.s4 1983009808
        %v1276 = vunpack.c.0.s8 %v1275
        %v1277 = vlaneseq
        %v1278 = vshrl.u32 %v1277, 7
        %v1279 = vsub.s32 %v1276, %v1278
        %v1280 = vrot.slane %v928, %v1279
        %v1282 = vunpack.c.l.s4 1983009808
        %v1283 = vunpack.c.0.s8 %v1282
        %v1284 = vlaneseq
        %v1285 = vshrl.u32 %v1284, 7
        %v1286 = vsub.s32 %v1283, %v1285
        %v1287 = vrot.slane %v1273, %v1286
        %v1288 = vcombine.high %v1280, %v1280
        %v1289 = vcombine.high %v1287, %v1287
        %v1290 = vcombine.high %v929, %v929
        %v1292 = vunpack.c.l.s4 1983009808
        %v1293 = vunpack.c.0.s8 %v1292
        %v1294 = vlaneseq
        %v1295 = vshrl.u32 %v1294, 7
        %v1296 = vsub.s32 %v1293, %v1295
        %v1297 = vrot.slane %v929, %v1296
        %v1299 = vunpack.c.l.s4 1983009808
        %v1300 = vunpack.c.0.s8 %v1299
        %v1301 = vlaneseq
        %v1302 = vshrl.u32 %v1301, 7
        %v1303 = vsub.s32 %v1300, %v1302
        %v1304 = vrot.slane %v1290, %v1303
        %v1305 = vcombine.high %v1297, %v1297
        %v1306 = vcombine.high %v1304, %v1304
        %v1307 = vcombine.high %v930, %v930
        %v1309 = vunpack.c.l.s4 1983009808
        %v1310 = vunpack.c.0.s8 %v1309
        %v1311 = vlaneseq
        %v1312 = vshrl.u32 %v1311, 7
        %v1313 = vsub.s32 %v1310, %v1312
        %v1314 = vrot.slane %v930, %v1313
        %v1316 = vunpack.c.l.s4 1983009808
        %v1317 = vunpack.c.0.s8 %v1316
        %v1318 = vlaneseq
        %v1319 = vshrl.u32 %v1318, 7
        %v1320 = vsub.s32 %v1317, %v1319
        %v1321 = vrot.slane %v1307, %v1320
        %v1322 = vcombine.high %v1314, %v1314
        %v1323 = vcombine.high %v1321, %v1321
        %v1324 = vcombine.high %v931, %v931
        %v1326 = vunpack.c.l.s4 1983009808
        %v1327 = vunpack.c.0.s8 %v1326
        %v1328 = vlaneseq
        %v1329 = vshrl.u32 %v1328, 7
        %v1330 = vsub.s32 %v1327, %v1329
        %v1331 = vrot.slane %v931, %v1330
        %v1333 = vunpack.c.l.s4 1983009808
        %v1334 = vunpack.c.0.s8 %v1333
        %v1335 = vlaneseq
        %v1336 = vshrl.u32 %v1335, 7
        %v1337 = vsub.s32 %v1334, %v1336
        %v1338 = vrot.slane %v1324, %v1337
        %v1339 = vcombine.high %v1331, %v1331
        %v1340 = vcombine.high %v1338, %v1338
        %v1341 = vcombine.high %v932, %v932
        %v1343 = vunpack.c.l.s4 1983009808
        %v1344 = vunpack.c.0.s8 %v1343
        %v1345 = vlaneseq
        %v1346 = vshrl.u32 %v1345, 7
        %v1347 = vsub.s32 %v1344, %v1346
        %v1348 = vrot.slane %v932, %v1347
        %v1350 = vunpack.c.l.s4 1983009808
        %v1351 = vunpack.c.0.s8 %v1350
        %v1352 = vlaneseq
        %v1353 = vshrl.u32 %v1352, 7
        %v1354 = vsub.s32 %v1351, %v1353
        %v1355 = vrot.slane %v1341, %v1354
        %v1356 = vcombine.high %v1348, %v1348
        %v1357 = vcombine.high %v1355, %v1355
        %v1358 = vcombine.high %v933, %v933
        %v1360 = vunpack.c.l.s4 1983009808
        %v1361 = vunpack.c.0.s8 %v1360
        %v1362 = vlaneseq
        %v1363 = vshrl.u32 %v1362, 7
        %v1364 = vsub.s32 %v1361, %v1363
        %v1365 = vrot.slane %v933, %v1364
        %v1367 = vunpack.c.l.s4 1983009808
        %v1368 = vunpack.c.0.s8 %v1367
        %v1369 = vlaneseq
        %v1370 = vshrl.u32 %v1369, 7
        %v1371 = vsub.s32 %v1368, %v1370
        %v1372 = vrot.slane %v1358, %v1371
        %v1373 = vcombine.high %v1365, %v1365
        %v1374 = vcombine.high %v1372, %v1372
        %v1375 = vcombine.high %v934, %v934
        %v1377 = vunpack.c.l.s4 1983009808
        %v1378 = vunpack.c.0.s8 %v1377
        %v1379 = vlaneseq
        %v1380 = vshrl.u32 %v1379, 7
        %v1381 = vsub.s32 %v1378, %v1380
        %v1382 = vrot.slane %v934, %v1381
        %v1384 = vunpack.c.l.s4 1983009808
        %v1385 = vunpack.c.0.s8 %v1384
        %v1386 = vlaneseq
        %v1387 = vshrl.u32 %v1386, 7
        %v1388 = vsub.s32 %v1385, %v1387
        %v1389 = vrot.slane %v1375, %v1388
        %v1390 = vcombine.high %v1382, %v1382
        %v1391 = vcombine.high %v1389, %v1389
        %v1392 = vcombine.high %v935, %v935
        %v1394 = vunpack.c.l.s4 1983009808
        %v1395 = vunpack.c.0.s8 %v1394
        %v1396 = vlaneseq
        %v1397 = vshrl.u32 %v1396, 7
        %v1398 = vsub.s32 %v1395, %v1397
        %v1399 = vrot.slane %v935, %v1398
        %v1401 = vunpack.c.l.s4 1983009808
        %v1402 = vunpack.c.0.s8 %v1401
        %v1403 = vlaneseq
        %v1404 = vshrl.u32 %v1403, 7
        %v1405 = vsub.s32 %v1402, %v1404
        %v1406 = vrot.slane %v1392, %v1405
        %v1407 = vcombine.high %v1399, %v1399
        %v1408 = vcombine.high %v1406, %v1406
        %v1409 = vcombine.high %v936, %v936
        %v1411 = vunpack.c.l.s4 1983009808
        %v1412 = vunpack.c.0.s8 %v1411
        %v1413 = vlaneseq
        %v1414 = vshrl.u32 %v1413, 7
        %v1415 = vsub.s32 %v1412, %v1414
        %v1416 = vrot.slane %v936, %v1415
        %v1418 = vunpack.c.l.s4 1983009808
        %v1419 = vunpack.c.0.s8 %v1418
        %v1420 = vlaneseq
        %v1421 = vshrl.u32 %v1420, 7
        %v1422 = vsub.s32 %v1419, %v1421
        %v1423 = vrot.slane %v1409, %v1422
        %v1424 = vcombine.high %v1416, %v1416
        %v1425 = vcombine.high %v1423, %v1423
        %v1426 = vcombine.high %v937, %v937
        %v1428 = vunpack.c.l.s4 1983009808
        %v1429 = vunpack.c.0.s8 %v1428
        %v1430 = vlaneseq
        %v1431 = vshrl.u32 %v1430, 7
        %v1432 = vsub.s32 %v1429, %v1431
        %v1433 = vrot.slane %v937, %v1432
        %v1435 = vunpack.c.l.s4 1983009808
        %v1436 = vunpack.c.0.s8 %v1435
        %v1437 = vlaneseq
        %v1438 = vshrl.u32 %v1437, 7
        %v1439 = vsub.s32 %v1436, %v1438
        %v1440 = vrot.slane %v1426, %v1439
        %v1441 = vcombine.high %v1433, %v1433
        %v1442 = vcombine.high %v1440, %v1440
        %v1443 = vcombine.high %v938, %v938
        %v1445 = vunpack.c.l.s4 1983009808
        %v1446 = vunpack.c.0.s8 %v1445
        %v1447 = vlaneseq
        %v1448 = vshrl.u32 %v1447, 7
        %v1449 = vsub.s32 %v1446, %v1448
        %v1450 = vrot.slane %v938, %v1449
        %v1452 = vunpack.c.l.s4 1983009808
        %v1453 = vunpack.c.0.s8 %v1452
        %v1454 = vlaneseq
        %v1455 = vshrl.u32 %v1454, 7
        %v1456 = vsub.s32 %v1453, %v1455
        %v1457 = vrot.slane %v1443, %v1456
        %v1458 = vcombine.high %v1450, %v1450
        %v1459 = vcombine.high %v1457, %v1457
        %v1460 = vcombine.high %v939, %v939
        %v1462 = vunpack.c.l.s4 1983009808
        %v1463 = vunpack.c.0.s8 %v1462
        %v1464 = vlaneseq
        %v1465 = vshrl.u32 %v1464, 7
        %v1466 = vsub.s32 %v1463, %v1465
        %v1467 = vrot.slane %v939, %v1466
        %v1469 = vunpack.c.l.s4 1983009808
        %v1470 = vunpack.c.0.s8 %v1469
        %v1471 = vlaneseq
        %v1472 = vshrl.u32 %v1471, 7
        %v1473 = vsub.s32 %v1470, %v1472
        %v1474 = vrot.slane %v1460, %v1473
        %v1475 = vcombine.high %v1467, %v1467
        %v1476 = vcombine.high %v1474, %v1474
        %v1477 = vcombine.high %v940, %v940
        %v1479 = vunpack.c.l.s4 1983009808
        %v1480 = vunpack.c.0.s8 %v1479
        %v1481 = vlaneseq
        %v1482 = vshrl.u32 %v1481, 7
        %v1483 = vsub.s32 %v1480, %v1482
        %v1484 = vrot.slane %v940, %v1483
        %v1486 = vunpack.c.l.s4 1983009808
        %v1487 = vunpack.c.0.s8 %v1486
        %v1488 = vlaneseq
        %v1489 = vshrl.u32 %v1488, 7
        %v1490 = vsub.s32 %v1487, %v1489
        %v1491 = vrot.slane %v1477, %v1490
        %v1492 = vcombine.high %v1484, %v1484
        %v1493 = vcombine.high %v1491, %v1491
        %v1494 = vcombine.high %v941, %v941
        %v1496 = vunpack.c.l.s4 1983009808
        %v1497 = vunpack.c.0.s8 %v1496
        %v1498 = vlaneseq
        %v1499 = vshrl.u32 %v1498, 7
        %v1500 = vsub.s32 %v1497, %v1499
        %v1501 = vrot.slane %v941, %v1500
        %v1503 = vunpack.c.l.s4 1983009808
        %v1504 = vunpack.c.0.s8 %v1503
        %v1505 = vlaneseq
        %v1506 = vshrl.u32 %v1505, 7
        %v1507 = vsub.s32 %v1504, %v1506
        %v1508 = vrot.slane %v1494, %v1507
        %v1509 = vcombine.high %v1501, %v1501
        %v1510 = vcombine.high %v1508, %v1508
        %v1511 = vcombine.high %v942, %v942
        %v1513 = vunpack.c.l.s4 1983009808
        %v1514 = vunpack.c.0.s8 %v1513
        %v1515 = vlaneseq
        %v1516 = vshrl.u32 %v1515, 7
        %v1517 = vsub.s32 %v1514, %v1516
        %v1518 = vrot.slane %v942, %v1517
        %v1520 = vunpack.c.l.s4 1983009808
        %v1521 = vunpack.c.0.s8 %v1520
        %v1522 = vlaneseq
        %v1523 = vshrl.u32 %v1522, 7
        %v1524 = vsub.s32 %v1521, %v1523
        %v1525 = vrot.slane %v1511, %v1524
        %v1526 = vcombine.high %v1518, %v1518
        %v1527 = vcombine.high %v1525, %v1525
        %v1528 = vcombine.high %v943, %v943
        %v1530 = vunpack.c.l.s4 1983009808
        %v1531 = vunpack.c.0.s8 %v1530
        %v1532 = vlaneseq
        %v1533 = vshrl.u32 %v1532, 7
        %v1534 = vsub.s32 %v1531, %v1533
        %v1535 = vrot.slane %v943, %v1534
        %v1537 = vunpack.c.l.s4 1983009808
        %v1538 = vunpack.c.0.s8 %v1537
        %v1539 = vlaneseq
        %v1540 = vshrl.u32 %v1539, 7
        %v1541 = vsub.s32 %v1538, %v1540
        %v1542 = vrot.slane %v1528, %v1541
        %v1543 = vcombine.high %v1535, %v1535
        %v1544 = vcombine.high %v1542, %v1542
        %v1545 = vcombine.high %v944, %v944
        %v1547 = vunpack.c.l.s4 1983009808
        %v1548 = vunpack.c.0.s8 %v1547
        %v1549 = vlaneseq
        %v1550 = vshrl.u32 %v1549, 7
        %v1551 = vsub.s32 %v1548, %v1550
        %v1552 = vrot.slane %v944, %v1551
        %v1554 = vunpack.c.l.s4 1983009808
        %v1555 = vunpack.c.0.s8 %v1554
        %v1556 = vlaneseq
        %v1557 = vshrl.u32 %v1556, 7
        %v1558 = vsub.s32 %v1555, %v1557
        %v1559 = vrot.slane %v1545, %v1558
        %v1560 = vcombine.high %v1552, %v1552
        %v1561 = vcombine.high %v1559, %v1559
        %v1562 = vcombine.high %v945, %v945
        %v1564 = vunpack.c.l.s4 1983009808
        %v1565 = vunpack.c.0.s8 %v1564
        %v1566 = vlaneseq
        %v1567 = vshrl.u32 %v1566, 7
        %v1568 = vsub.s32 %v1565, %v1567
        %v1569 = vrot.slane %v945, %v1568
        %v1571 = vunpack.c.l.s4 1983009808
        %v1572 = vunpack.c.0.s8 %v1571
        %v1573 = vlaneseq
        %v1574 = vshrl.u32 %v1573, 7
        %v1575 = vsub.s32 %v1572, %v1574
        %v1576 = vrot.slane %v1562, %v1575
        %v1577 = vcombine.high %v1569, %v1569
        %v1578 = vcombine.high %v1576, %v1576
        %v1579 = vcombine.high %v946, %v946
        %v1581 = vunpack.c.l.s4 1983009808
        %v1582 = vunpack.c.0.s8 %v1581
        %v1583 = vlaneseq
        %v1584 = vshrl.u32 %v1583, 7
        %v1585 = vsub.s32 %v1582, %v1584
        %v1586 = vrot.slane %v946, %v1585
        %v1588 = vunpack.c.l.s4 1983009808
        %v1589 = vunpack.c.0.s8 %v1588
        %v1590 = vlaneseq
        %v1591 = vshrl.u32 %v1590, 7
        %v1592 = vsub.s32 %v1589, %v1591
        %v1593 = vrot.slane %v1579, %v1592
        %v1594 = vcombine.high %v1586, %v1586
        %v1595 = vcombine.high %v1593, %v1593
        %v1596 = vcombine.high %v947, %v947
        %v1598 = vunpack.c.l.s4 1983009808
        %v1599 = vunpack.c.0.s8 %v1598
        %v1600 = vlaneseq
        %v1601 = vshrl.u32 %v1600, 7
        %v1602 = vsub.s32 %v1599, %v1601
        %v1603 = vrot.slane %v947, %v1602
        %v1605 = vunpack.c.l.s4 1983009808
        %v1606 = vunpack.c.0.s8 %v1605
        %v1607 = vlaneseq
        %v1608 = vshrl.u32 %v1607, 7
        %v1609 = vsub.s32 %v1606, %v1608
        %v1610 = vrot.slane %v1596, %v1609
        %v1611 = vcombine.high %v1603, %v1603
        %v1612 = vcombine.high %v1610, %v1610
        %v1613 = vcombine.high %v948, %v948
        %v1615 = vunpack.c.l.s4 1983009808
        %v1616 = vunpack.c.0.s8 %v1615
        %v1617 = vlaneseq
        %v1618 = vshrl.u32 %v1617, 7
        %v1619 = vsub.s32 %v1616, %v1618
        %v1620 = vrot.slane %v948, %v1619
        %v1622 = vunpack.c.l.s4 1983009808
        %v1623 = vunpack.c.0.s8 %v1622
        %v1624 = vlaneseq
        %v1625 = vshrl.u32 %v1624, 7
        %v1626 = vsub.s32 %v1623, %v1625
        %v1627 = vrot.slane %v1613, %v1626
        %v1628 = vcombine.high %v1620, %v1620
        %v1629 = vcombine.high %v1627, %v1627
        %v1630 = vcombine.high %v949, %v949
        %v1632 = vunpack.c.l.s4 1983009808
        %v1633 = vunpack.c.0.s8 %v1632
        %v1634 = vlaneseq
        %v1635 = vshrl.u32 %v1634, 7
        %v1636 = vsub.s32 %v1633, %v1635
        %v1637 = vrot.slane %v949, %v1636
        %v1639 = vunpack.c.l.s4 1983009808
        %v1640 = vunpack.c.0.s8 %v1639
        %v1641 = vlaneseq
        %v1642 = vshrl.u32 %v1641, 7
        %v1643 = vsub.s32 %v1640, %v1642
        %v1644 = vrot.slane %v1630, %v1643
        %v1645 = vcombine.high %v1637, %v1637
        %v1646 = vcombine.high %v1644, %v1644
        %v1647 = vcombine.high %v950, %v950
        %v1649 = vunpack.c.l.s4 1983009808
        %v1650 = vunpack.c.0.s8 %v1649
        %v1651 = vlaneseq
        %v1652 = vshrl.u32 %v1651, 7
        %v1653 = vsub.s32 %v1650, %v1652
        %v1654 = vrot.slane %v950, %v1653
        %v1656 = vunpack.c.l.s4 1983009808
        %v1657 = vunpack.c.0.s8 %v1656
        %v1658 = vlaneseq
        %v1659 = vshrl.u32 %v1658, 7
        %v1660 = vsub.s32 %v1657, %v1659
        %v1661 = vrot.slane %v1647, %v1660
        %v1662 = vcombine.high %v1654, %v1654
        %v1663 = vcombine.high %v1661, %v1661
        %v1664 = vcombine.high %v951, %v951
        %v1666 = vunpack.c.l.s4 1983009808
        %v1667 = vunpack.c.0.s8 %v1666
        %v1668 = vlaneseq
        %v1669 = vshrl.u32 %v1668, 7
        %v1670 = vsub.s32 %v1667, %v1669
        %v1671 = vrot.slane %v951, %v1670
        %v1673 = vunpack.c.l.s4 1983009808
        %v1674 = vunpack.c.0.s8 %v1673
        %v1675 = vlaneseq
        %v1676 = vshrl.u32 %v1675, 7
        %v1677 = vsub.s32 %v1674, %v1676
        %v1678 = vrot.slane %v1664, %v1677
        %v1679 = vcombine.high %v1671, %v1671
        %v1680 = vcombine.high %v1678, %v1678
        %v1681 = vcombine.high %v952, %v952
        %v1683 = vunpack.c.l.s4 1983009808
        %v1684 = vunpack.c.0.s8 %v1683
        %v1685 = vlaneseq
        %v1686 = vshrl.u32 %v1685, 7
        %v1687 = vsub.s32 %v1684, %v1686
        %v1688 = vrot.slane %v952, %v1687
        %v1690 = vunpack.c.l.s4 1983009808
        %v1691 = vunpack.c.0.s8 %v1690
        %v1692 = vlaneseq
        %v1693 = vshrl.u32 %v1692, 7
        %v1694 = vsub.s32 %v1691, %v1693
        %v1695 = vrot.slane %v1681, %v1694
        %v1696 = vcombine.high %v1688, %v1688
        %v1697 = vcombine.high %v1695, %v1695
        %v1698 = vcombine.high %v953, %v953
        %v1700 = vunpack.c.l.s4 1983009808
        %v1701 = vunpack.c.0.s8 %v1700
        %v1702 = vlaneseq
        %v1703 = vshrl.u32 %v1702, 7
        %v1704 = vsub.s32 %v1701, %v1703
        %v1705 = vrot.slane %v953, %v1704
        %v1707 = vunpack.c.l.s4 1983009808
        %v1708 = vunpack.c.0.s8 %v1707
        %v1709 = vlaneseq
        %v1710 = vshrl.u32 %v1709, 7
        %v1711 = vsub.s32 %v1708, %v1710
        %v1712 = vrot.slane %v1698, %v1711
        %v1713 = vcombine.high %v1705, %v1705
        %v1714 = vcombine.high %v1712, %v1712
        %v1715 = vcombine.high %v954, %v954
        %v1717 = vunpack.c.l.s4 1983009808
        %v1718 = vunpack.c.0.s8 %v1717
        %v1719 = vlaneseq
        %v1720 = vshrl.u32 %v1719, 7
        %v1721 = vsub.s32 %v1718, %v1720
        %v1722 = vrot.slane %v954, %v1721
        %v1724 = vunpack.c.l.s4 1983009808
        %v1725 = vunpack.c.0.s8 %v1724
        %v1726 = vlaneseq
        %v1727 = vshrl.u32 %v1726, 7
        %v1728 = vsub.s32 %v1725, %v1727
        %v1729 = vrot.slane %v1715, %v1728
        %v1730 = vcombine.high %v1722, %v1722
        %v1731 = vcombine.high %v1729, %v1729
        %s1860 = scalar_lea.vmem [#allocation2], 42
        %1861 = vst.msk [vmem:[%s1860] sm:$0x3] %vm955, %v1195
        %1862 = vst.msk [vmem:[%s1860 + $0x2] sm:$0x3] %vm955, %v1203
        %1863 = vst.msk [vmem:[%s1860 + $0x4] sm:$0x3] %vm955, %v1202
        %1864 = vst.msk [vmem:[%s1860 + $0x6] sm:$0x3] %vm955, %v1204
        %1865 = vst.msk [vmem:[%s1860 + $0x8] sm:$0x3] %vm955, %v1212
        %1866 = vst.msk [vmem:[%s1860 + $0xa] sm:$0x3] %vm955, %v1220
        %1867 = vst.msk [vmem:[%s1860 + $0xc] sm:$0x3] %vm955, %v1219
        %1868 = vst.msk [vmem:[%s1860 + $0xe] sm:$0x3] %vm955, %v1221
        %1869 = vst.msk [vmem:[%s1860 + $0x14] sm:$0x3] %vm955, %v1229
        %1870 = vst.msk [vmem:[%s1860 + $0x16] sm:$0x3] %vm955, %v1237
        %1871 = vst.msk [vmem:[%s1860 + $0x18] sm:$0x3] %vm955, %v1236
        %1872 = vst.msk [vmem:[%s1860 + $0x1a] sm:$0x3] %vm955, %v1238
        %1873 = vst.msk [vmem:[%s1860 + $0x1c] sm:$0x3] %vm955, %v1246
        %1874 = vst.msk [vmem:[%s1860 + $0x1e] sm:$0x3] %vm955, %v1254
        %1875 = vst.msk [vmem:[%s1860 + $0x20] sm:$0x3] %vm955, %v1253
        %1876 = vst.msk [vmem:[%s1860 + $0x22] sm:$0x3] %vm955, %v1255
        %1877 = vst.msk [vmem:[%s1860 + $0x28] sm:$0x3] %vm955, %v1263
        %1878 = vst.msk [vmem:[%s1860 + $0x2a] sm:$0x3] %vm955, %v1271
        %1879 = vst.msk [vmem:[%s1860 + $0x2c] sm:$0x3] %vm955, %v1270
        %1880 = vst.msk [vmem:[%s1860 + $0x2e] sm:$0x3] %vm955, %v1272
        %1881 = vst.msk [vmem:[%s1860 + $0x30] sm:$0x3] %vm955, %v1280
        %1882 = vst.msk [vmem:[%s1860 + $0x32] sm:$0x3] %vm955, %v1288
        %1883 = vst.msk [vmem:[%s1860 + $0x34] sm:$0x3] %vm955, %v1287
        %1884 = vst.msk [vmem:[%s1860 + $0x36] sm:$0x3] %vm955, %v1289
        %1885 = vst.msk [vmem:[%s1860 + $0x3c] sm:$0x3] %vm955, %v1297
        %1886 = vst.msk [vmem:[%s1860 + $0x3e] sm:$0x3] %vm955, %v1305
        %1887 = vst.msk [vmem:[%s1860 + $0x40] sm:$0x3] %vm955, %v1304
        %1888 = vst.msk [vmem:[%s1860 + $0x42] sm:$0x3] %vm955, %v1306
        %1889 = vst.msk [vmem:[%s1860 + $0x44] sm:$0x3] %vm955, %v1314
        %1890 = vst.msk [vmem:[%s1860 + $0x46] sm:$0x3] %vm955, %v1322
        %1891 = vst.msk [vmem:[%s1860 + $0x48] sm:$0x3] %vm955, %v1321
        %1892 = vst.msk [vmem:[%s1860 + $0x4a] sm:$0x3] %vm955, %v1323
        %1893 = vst.msk [vmem:[%s1860 + $0x50] sm:$0x3] %vm955, %v1331
        %1894 = vst.msk [vmem:[%s1860 + $0x52] sm:$0x3] %vm955, %v1339
        %1895 = vst.msk [vmem:[%s1860 + $0x54] sm:$0x3] %vm955, %v1338
        %1896 = vst.msk [vmem:[%s1860 + $0x56] sm:$0x3] %vm955, %v1340
        %1897 = vst.msk [vmem:[%s1860 + $0x58] sm:$0x3] %vm955, %v1348
        %1898 = vst.msk [vmem:[%s1860 + $0x5a] sm:$0x3] %vm955, %v1356
        %1899 = vst.msk [vmem:[%s1860 + $0x5c] sm:$0x3] %vm955, %v1355
        %1900 = vst.msk [vmem:[%s1860 + $0x5e] sm:$0x3] %vm955, %v1357
        %1901 = vst.msk [vmem:[%s1860 + $0x64] sm:$0x3] %vm955, %v1365
        %1902 = vst.msk [vmem:[%s1860 + $0x66] sm:$0x3] %vm955, %v1373
        %1903 = vst.msk [vmem:[%s1860 + $0x68] sm:$0x3] %vm955, %v1372
        %1904 = vst.msk [vmem:[%s1860 + $0x6a] sm:$0x3] %vm955, %v1374
        %1905 = vst.msk [vmem:[%s1860 + $0x6c] sm:$0x3] %vm955, %v1382
        %1906 = vst.msk [vmem:[%s1860 + $0x6e] sm:$0x3] %vm955, %v1390
        %1907 = vst.msk [vmem:[%s1860 + $0x70] sm:$0x3] %vm955, %v1389
        %1908 = vst.msk [vmem:[%s1860 + $0x72] sm:$0x3] %vm955, %v1391
        %1909 = vst.msk [vmem:[%s1860 + $0x78] sm:$0x3] %vm955, %v1399
        %1910 = vst.msk [vmem:[%s1860 + $0x7a] sm:$0x3] %vm955, %v1407
        %1911 = vst.msk [vmem:[%s1860 + $0x7c] sm:$0x3] %vm955, %v1406
        %1912 = vst.msk [vmem:[%s1860 + $0x7e] sm:$0x3] %vm955, %v1408
        %1913 = vst.msk [vmem:[%s1860 + $0x80] sm:$0x3] %vm955, %v1416
        %1914 = vst.msk [vmem:[%s1860 + $0x82] sm:$0x3] %vm955, %v1424
        %1915 = vst.msk [vmem:[%s1860 + $0x84] sm:$0x3] %vm955, %v1423
        %1916 = vst.msk [vmem:[%s1860 + $0x86] sm:$0x3] %vm955, %v1425
        %1917 = vst.msk [vmem:[%s1860 + $0x8c] sm:$0x3] %vm955, %v1433
        %1918 = vst.msk [vmem:[%s1860 + $0x8e] sm:$0x3] %vm955, %v1441
        %1919 = vst.msk [vmem:[%s1860 + $0x90] sm:$0x3] %vm955, %v1440
        %1920 = vst.msk [vmem:[%s1860 + $0x92] sm:$0x3] %vm955, %v1442
        %1921 = vst.msk [vmem:[%s1860 + $0x94] sm:$0x3] %vm955, %v1450
        %1922 = vst.msk [vmem:[%s1860 + $0x96] sm:$0x3] %vm955, %v1458
        %1923 = vst.msk [vmem:[%s1860 + $0x98] sm:$0x3] %vm955, %v1457
        %1924 = vst.msk [vmem:[%s1860 + $0x9a] sm:$0x3] %vm955, %v1459
        %1925 = vst.msk [vmem:[%s1860 + $0xa0] sm:$0x3] %vm955, %v1467
        %1926 = vst.msk [vmem:[%s1860 + $0xa2] sm:$0x3] %vm955, %v1475
        %1927 = vst.msk [vmem:[%s1860 + $0xa4] sm:$0x3] %vm955, %v1474
        %1928 = vst.msk [vmem:[%s1860 + $0xa6] sm:$0x3] %vm955, %v1476
        %1929 = vst.msk [vmem:[%s1860 + $0xa8] sm:$0x3] %vm955, %v1484
        %1930 = vst.msk [vmem:[%s1860 + $0xaa] sm:$0x3] %vm955, %v1492
        %1931 = vst.msk [vmem:[%s1860 + $0xac] sm:$0x3] %vm955, %v1491
        %1932 = vst.msk [vmem:[%s1860 + $0xae] sm:$0x3] %vm955, %v1493
        %1933 = vst.msk [vmem:[%s1860 + $0xb4] sm:$0x3] %vm955, %v1501
        %1934 = vst.msk [vmem:[%s1860 + $0xb6] sm:$0x3] %vm955, %v1509
        %1935 = vst.msk [vmem:[%s1860 + $0xb8] sm:$0x3] %vm955, %v1508
        %1936 = vst.msk [vmem:[%s1860 + $0xba] sm:$0x3] %vm955, %v1510
        %1937 = vst.msk [vmem:[%s1860 + $0xbc] sm:$0x3] %vm955, %v1518
        %1938 = vst.msk [vmem:[%s1860 + $0xbe] sm:$0x3] %vm955, %v1526
        %1939 = vst.msk [vmem:[%s1860 + $0xc0] sm:$0x3] %vm955, %v1525
        %1940 = vst.msk [vmem:[%s1860 + $0xc2] sm:$0x3] %vm955, %v1527
        %1941 = vst.msk [vmem:[%s1860 + $0xc8] sm:$0x3] %vm955, %v1535
        %1942 = vst.msk [vmem:[%s1860 + $0xca] sm:$0x3] %vm955, %v1543
        %1943 = vst.msk [vmem:[%s1860 + $0xcc] sm:$0x3] %vm955, %v1542
        %1944 = vst.msk [vmem:[%s1860 + $0xce] sm:$0x3] %vm955, %v1544
        %1945 = vst.msk [vmem:[%s1860 + $0xd0] sm:$0x3] %vm955, %v1552
        %1946 = vst.msk [vmem:[%s1860 + $0xd2] sm:$0x3] %vm955, %v1560
        %1947 = vst.msk [vmem:[%s1860 + $0xd4] sm:$0x3] %vm955, %v1559
        %1948 = vst.msk [vmem:[%s1860 + $0xd6] sm:$0x3] %vm955, %v1561
        %1949 = vst.msk [vmem:[%s1860 + $0xdc] sm:$0x3] %vm955, %v1569
        %1950 = vst.msk [vmem:[%s1860 + $0xde] sm:$0x3] %vm955, %v1577
        %1951 = vst.msk [vmem:[%s1860 + $0xe0] sm:$0x3] %vm955, %v1576
        %1952 = vst.msk [vmem:[%s1860 + $0xe2] sm:$0x3] %vm955, %v1578
        %1953 = vst.msk [vmem:[%s1860 + $0xe4] sm:$0x3] %vm955, %v1586
        %1954 = vst.msk [vmem:[%s1860 + $0xe6] sm:$0x3] %vm955, %v1594
        %1955 = vst.msk [vmem:[%s1860 + $0xe8] sm:$0x3] %vm955, %v1593
        %1956 = vst.msk [vmem:[%s1860 + $0xea] sm:$0x3] %vm955, %v1595
        %1957 = vst.msk [vmem:[%s1860 + $0xf0] sm:$0x3] %vm955, %v1603
        %1958 = vst.msk [vmem:[%s1860 + $0xf2] sm:$0x3] %vm955, %v1611
        %1959 = vst.msk [vmem:[%s1860 + $0xf4] sm:$0x3] %vm955, %v1610
        %1960 = vst.msk [vmem:[%s1860 + $0xf6] sm:$0x3] %vm955, %v1612
        %1961 = vst.msk [vmem:[%s1860 + $0xf8] sm:$0x3] %vm955, %v1620
        %1962 = vst.msk [vmem:[%s1860 + $0xfa] sm:$0x3] %vm955, %v1628
        %1963 = vst.msk [vmem:[%s1860 + $0xfc] sm:$0x3] %vm955, %v1627
        %1964 = vst.msk [vmem:[%s1860 + $0xfe] sm:$0x3] %vm955, %v1629
        %1965 = vst.msk [vmem:[%s1860 + $0x104] sm:$0x3] %vm955, %v1637
        %1966 = vst.msk [vmem:[%s1860 + $0x106] sm:$0x3] %vm955, %v1645
        %1967 = vst.msk [vmem:[%s1860 + $0x108] sm:$0x3] %vm955, %v1644
        %1968 = vst.msk [vmem:[%s1860 + $0x10a] sm:$0x3] %vm955, %v1646
        %1969 = vst.msk [vmem:[%s1860 + $0x10c] sm:$0x3] %vm955, %v1654
        %1970 = vst.msk [vmem:[%s1860 + $0x10e] sm:$0x3] %vm955, %v1662
        %1971 = vst.msk [vmem:[%s1860 + $0x110] sm:$0x3] %vm955, %v1661
        %1972 = vst.msk [vmem:[%s1860 + $0x112] sm:$0x3] %vm955, %v1663
        %1973 = vst.msk [vmem:[%s1860 + $0x118] sm:$0x3] %vm955, %v1671
        %1974 = vst.msk [vmem:[%s1860 + $0x11a] sm:$0x3] %vm955, %v1679
        %1975 = vst.msk [vmem:[%s1860 + $0x11c] sm:$0x3] %vm955, %v1678
        %1976 = vst.msk [vmem:[%s1860 + $0x11e] sm:$0x3] %vm955, %v1680
        %1977 = vst.msk [vmem:[%s1860 + $0x120] sm:$0x3] %vm955, %v1688
        %1978 = vst.msk [vmem:[%s1860 + $0x122] sm:$0x3] %vm955, %v1696
        %1979 = vst.msk [vmem:[%s1860 + $0x124] sm:$0x3] %vm955, %v1695
        %1980 = vst.msk [vmem:[%s1860 + $0x126] sm:$0x3] %vm955, %v1697
        %1981 = vst.msk [vmem:[%s1860 + $0x12c] sm:$0x3] %vm955, %v1705
        %1982 = vst.msk [vmem:[%s1860 + $0x12e] sm:$0x3] %vm955, %v1713
        %1983 = vst.msk [vmem:[%s1860 + $0x130] sm:$0x3] %vm955, %v1712
        %1984 = vst.msk [vmem:[%s1860 + $0x132] sm:$0x3] %vm955, %v1714
        %1985 = vst.msk [vmem:[%s1860 + $0x134] sm:$0x3] %vm955, %v1722
        %1986 = vst.msk [vmem:[%s1860 + $0x136] sm:$0x3] %vm955, %v1730
        %1987 = vst.msk [vmem:[%s1860 + $0x138] sm:$0x3] %vm955, %v1729
        %1988 = vst.msk [vmem:[%s1860 + $0x13a] sm:$0x3] %vm955, %v1731
        %s1989 = scalar_lea.vmem [#allocation2], 20
        %v1990 = vld [vmem:[%s1989 + $0x1] sm:$0x1]
        %v1991 = vld [vmem:[%s1989 + $0x3] sm:$0x1]
        %v1992 = vld [vmem:[%s1989 + $0x5] sm:$0x1]
        %v1993 = vld [vmem:[%s1989 + $0x7] sm:$0x1]
        %v1994 = vld [vmem:[%s1989 + $0x9] sm:$0x1]
        %v1995 = vld [vmem:[%s1989 + $0xb] sm:$0x1]
        %v1996 = vld [vmem:[%s1989 + $0xd] sm:$0x1]
        %v1997 = vld [vmem:[%s1989 + $0xf] sm:$0x1]
        %v1998 = vld [vmem:[%s1989 + $0x29] sm:$0x1]
        %v1999 = vld [vmem:[%s1989 + $0x2b] sm:$0x1]
        %v2000 = vld [vmem:[%s1989 + $0x2d] sm:$0x1]
        %v2001 = vld [vmem:[%s1989 + $0x2f] sm:$0x1]
        %v2002 = vld [vmem:[%s1989 + $0x31] sm:$0x1]
        %v2003 = vld [vmem:[%s1989 + $0x33] sm:$0x1]
        %v2004 = vld [vmem:[%s1989 + $0x35] sm:$0x1]
        %v2005 = vld [vmem:[%s1989 + $0x37] sm:$0x1]
        %v2006 = vld [vmem:[%s1989 + $0x51] sm:$0x1]
        %v2007 = vld [vmem:[%s1989 + $0x53] sm:$0x1]
        %v2008 = vld [vmem:[%s1989 + $0x55] sm:$0x1]
        %v2009 = vld [vmem:[%s1989 + $0x57] sm:$0x1]
        %v2010 = vld [vmem:[%s1989 + $0x59] sm:$0x1]
        %v2011 = vld [vmem:[%s1989 + $0x5b] sm:$0x1]
        %v2012 = vld [vmem:[%s1989 + $0x5d] sm:$0x1]
        %v2013 = vld [vmem:[%s1989 + $0x5f] sm:$0x1]
        %v2014 = vld [vmem:[%s1989 + $0x79] sm:$0x1]
        %v2015 = vld [vmem:[%s1989 + $0x7b] sm:$0x1]
        %v2016 = vld [vmem:[%s1989 + $0x7d] sm:$0x1]
        %v2017 = vld [vmem:[%s1989 + $0x7f] sm:$0x1]
        %v2018 = vld [vmem:[%s1989 + $0x81] sm:$0x1]
        %v2019 = vld [vmem:[%s1989 + $0x83] sm:$0x1]
        %v2020 = vld [vmem:[%s1989 + $0x85] sm:$0x1]
        %v2021 = vld [vmem:[%s1989 + $0x87] sm:$0x1]
        %v2022 = vld [vmem:[%s1989 + $0xa1] sm:$0x1]
        %v2023 = vld [vmem:[%s1989 + $0xa3] sm:$0x1]
        %v2024 = vld [vmem:[%s1989 + $0xa5] sm:$0x1]
        %v2025 = vld [vmem:[%s1989 + $0xa7] sm:$0x1]
        %v2026 = vld [vmem:[%s1989 + $0xa9] sm:$0x1]
        %v2027 = vld [vmem:[%s1989 + $0xab] sm:$0x1]
        %v2028 = vld [vmem:[%s1989 + $0xad] sm:$0x1]
        %v2029 = vld [vmem:[%s1989 + $0xaf] sm:$0x1]
        %v2030 = vld [vmem:[%s1989 + $0xc9] sm:$0x1]
        %v2031 = vld [vmem:[%s1989 + $0xcb] sm:$0x1]
        %v2032 = vld [vmem:[%s1989 + $0xcd] sm:$0x1]
        %v2033 = vld [vmem:[%s1989 + $0xcf] sm:$0x1]
        %v2034 = vld [vmem:[%s1989 + $0xd1] sm:$0x1]
        %v2035 = vld [vmem:[%s1989 + $0xd3] sm:$0x1]
        %v2036 = vld [vmem:[%s1989 + $0xd5] sm:$0x1]
        %v2037 = vld [vmem:[%s1989 + $0xd7] sm:$0x1]
        %v2038 = vld [vmem:[%s1989 + $0xf1] sm:$0x1]
        %v2039 = vld [vmem:[%s1989 + $0xf3] sm:$0x1]
        %v2040 = vld [vmem:[%s1989 + $0xf5] sm:$0x1]
        %v2041 = vld [vmem:[%s1989 + $0xf7] sm:$0x1]
        %v2042 = vld [vmem:[%s1989 + $0xf9] sm:$0x1]
        %v2043 = vld [vmem:[%s1989 + $0xfb] sm:$0x1]
        %v2044 = vld [vmem:[%s1989 + $0xfd] sm:$0x1]
        %v2045 = vld [vmem:[%s1989 + $0xff] sm:$0x1]
        %v2046 = vld [vmem:[%s1989 + $0x119] sm:$0x1]
        %v2047 = vld [vmem:[%s1989 + $0x11b] sm:$0x1]
        %v2048 = vld [vmem:[%s1989 + $0x11d] sm:$0x1]
        %v2049 = vld [vmem:[%s1989 + $0x11f] sm:$0x1]
        %v2050 = vld [vmem:[%s1989 + $0x121] sm:$0x1]
        %v2051 = vld [vmem:[%s1989 + $0x123] sm:$0x1]
        %v2052 = vld [vmem:[%s1989 + $0x125] sm:$0x1]
        %v2053 = vld [vmem:[%s1989 + $0x127] sm:$0x1]
        %v2118 = vrot.slane %v1991, 7
        %vm2119 = vcmask 1041409
        %v2120 = vsel %vm2119, %v2118, %v1990
        %v2121 = vrot.slane %v1992, 6
        %vm2122 = vcmask 1042434
        %v2123 = vsel %vm2122, %v2121, %v2120
        %v2124 = vrot.slane %v1993, 5
        %vm2125 = vcmask 1043459
        %v2126 = vsel %vm2125, %v2124, %v2123
        %v2127 = vrot.slane %v1994, 4
        %vm2128 = vcmask 1044484
        %v2129 = vsel %vm2128, %v2127, %v2126
        %v2130 = vrot.slane %v1995, 3
        %vm2131 = vcmask 1045509
        %v2132 = vsel %vm2131, %v2130, %v2129
        %v2133 = vrot.slane %v1996, 2
        %vm2134 = vcmask 1046534
        %v2135 = vsel %vm2134, %v2133, %v2132
        %v2136 = vrot.slane %v1997, 1
        %vm2137 = vcmask 1047559
        %v2138 = vsel %vm2137, %v2136, %v2135
        %v2139 = vrot.slane %v1999, 7
        %v2140 = vsel %vm2119, %v2139, %v1998
        %v2141 = vrot.slane %v2000, 6
        %v2142 = vsel %vm2122, %v2141, %v2140
        %v2143 = vrot.slane %v2001, 5
        %v2144 = vsel %vm2125, %v2143, %v2142
        %v2145 = vrot.slane %v2002, 4
        %v2146 = vsel %vm2128, %v2145, %v2144
        %v2147 = vrot.slane %v2003, 3
        %v2148 = vsel %vm2131, %v2147, %v2146
        %v2149 = vrot.slane %v2004, 2
        %v2150 = vsel %vm2134, %v2149, %v2148
        %v2151 = vrot.slane %v2005, 1
        %v2152 = vsel %vm2137, %v2151, %v2150
        %v2153 = vrot.slane %v2007, 7
        %v2154 = vsel %vm2119, %v2153, %v2006
        %v2155 = vrot.slane %v2008, 6
        %v2156 = vsel %vm2122, %v2155, %v2154
        %v2157 = vrot.slane %v2009, 5
        %v2158 = vsel %vm2125, %v2157, %v2156
        %v2159 = vrot.slane %v2010, 4
        %v2160 = vsel %vm2128, %v2159, %v2158
        %v2161 = vrot.slane %v2011, 3
        %v2162 = vsel %vm2131, %v2161, %v2160
        %v2163 = vrot.slane %v2012, 2
        %v2164 = vsel %vm2134, %v2163, %v2162
        %v2165 = vrot.slane %v2013, 1
        %v2166 = vsel %vm2137, %v2165, %v2164
        %v2167 = vrot.slane %v2015, 7
        %v2168 = vsel %vm2119, %v2167, %v2014
        %v2169 = vrot.slane %v2016, 6
        %v2170 = vsel %vm2122, %v2169, %v2168
        %v2171 = vrot.slane %v2017, 5
        %v2172 = vsel %vm2125, %v2171, %v2170
        %v2173 = vrot.slane %v2018, 4
        %v2174 = vsel %vm2128, %v2173, %v2172
        %v2175 = vrot.slane %v2019, 3
        %v2176 = vsel %vm2131, %v2175, %v2174
        %v2177 = vrot.slane %v2020, 2
        %v2178 = vsel %vm2134, %v2177, %v2176
        %v2179 = vrot.slane %v2021, 1
        %v2180 = vsel %vm2137, %v2179, %v2178
        %v2181 = vrot.slane %v2023, 7
        %v2182 = vsel %vm2119, %v2181, %v2022
        %v2183 = vrot.slane %v2024, 6
        %v2184 = vsel %vm2122, %v2183, %v2182
        %v2185 = vrot.slane %v2025, 5
        %v2186 = vsel %vm2125, %v2185, %v2184
        %v2187 = vrot.slane %v2026, 4
        %v2188 = vsel %vm2128, %v2187, %v2186
        %v2189 = vrot.slane %v2027, 3
        %v2190 = vsel %vm2131, %v2189, %v2188
        %v2191 = vrot.slane %v2028, 2
        %v2192 = vsel %vm2134, %v2191, %v2190
        %v2193 = vrot.slane %v2029, 1
        %v2194 = vsel %vm2137, %v2193, %v2192
        %v2195 = vrot.slane %v2031, 7
        %v2196 = vsel %vm2119, %v2195, %v2030
        %v2197 = vrot.slane %v2032, 6
        %v2198 = vsel %vm2122, %v2197, %v2196
        %v2199 = vrot.slane %v2033, 5
        %v2200 = vsel %vm2125, %v2199, %v2198
        %v2201 = vrot.slane %v2034, 4
        %v2202 = vsel %vm2128, %v2201, %v2200
        %v2203 = vrot.slane %v2035, 3
        %v2204 = vsel %vm2131, %v2203, %v2202
        %v2205 = vrot.slane %v2036, 2
        %v2206 = vsel %vm2134, %v2205, %v2204
        %v2207 = vrot.slane %v2037, 1
        %v2208 = vsel %vm2137, %v2207, %v2206
        %v2209 = vrot.slane %v2039, 7
        %v2210 = vsel %vm2119, %v2209, %v2038
        %v2211 = vrot.slane %v2040, 6
        %v2212 = vsel %vm2122, %v2211, %v2210
        %v2213 = vrot.slane %v2041, 5
        %v2214 = vsel %vm2125, %v2213, %v2212
        %v2215 = vrot.slane %v2042, 4
        %v2216 = vsel %vm2128, %v2215, %v2214
        %v2217 = vrot.slane %v2043, 3
        %v2218 = vsel %vm2131, %v2217, %v2216
        %v2219 = vrot.slane %v2044, 2
        %v2220 = vsel %vm2134, %v2219, %v2218
        %v2221 = vrot.slane %v2045, 1
        %v2222 = vsel %vm2137, %v2221, %v2220
        %v2223 = vrot.slane %v2047, 7
        %v2224 = vsel %vm2119, %v2223, %v2046
        %v2225 = vrot.slane %v2048, 6
        %v2226 = vsel %vm2122, %v2225, %v2224
        %v2227 = vrot.slane %v2049, 5
        %v2228 = vsel %vm2125, %v2227, %v2226
        %v2229 = vrot.slane %v2050, 4
        %v2230 = vsel %vm2128, %v2229, %v2228
        %v2231 = vrot.slane %v2051, 3
        %v2232 = vsel %vm2131, %v2231, %v2230
        %v2233 = vrot.slane %v2052, 2
        %v2234 = vsel %vm2134, %v2233, %v2232
        %v2235 = vrot.slane %v2053, 1
        %v2236 = vsel %vm2137, %v2235, %v2234
        %2245 = vst.msk [vmem:[#allocation3] sm:$0xff] %vm635, %v2138
        %2246 = vst.msk [vmem:[#allocation3 + $0x18] sm:$0xff] %vm635, %v2152
        %2247 = vst.msk [vmem:[#allocation3 + $0x30] sm:$0xff] %vm635, %v2166
        %2248 = vst.msk [vmem:[#allocation3 + $0x48] sm:$0xff] %vm635, %v2180
        %2249 = vst.msk [vmem:[#allocation3 + $0x60] sm:$0xff] %vm635, %v2194
        %2250 = vst.msk [vmem:[#allocation3 + $0x78] sm:$0xff] %vm635, %v2208
        %2251 = vst.msk [vmem:[#allocation3 + $0x90] sm:$0xff] %vm635, %v2222
        %2252 = vst.msk [vmem:[#allocation3 + $0xa8] sm:$0xff] %vm635, %v2236
        %s2253 = scalar_lea.vmem [#allocation2], 22
        %v2254 = vld [vmem:[%s2253] sm:$0x1]
        %v2255 = vld [vmem:[%s2253 + $0x2] sm:$0x1]
        %v2256 = vld [vmem:[%s2253 + $0x4] sm:$0x1]
        %v2257 = vld [vmem:[%s2253 + $0x6] sm:$0x1]
        %v2258 = vld [vmem:[%s2253 + $0x8] sm:$0x1]
        %v2259 = vld [vmem:[%s2253 + $0xa] sm:$0x1]
        %v2260 = vld [vmem:[%s2253 + $0xc] sm:$0x1]
        %v2261 = vld [vmem:[%s2253 + $0xe] sm:$0x1]
        %v2262 = vld [vmem:[%s2253 + $0x28] sm:$0x1]
        %v2263 = vld [vmem:[%s2253 + $0x2a] sm:$0x1]
        %v2264 = vld [vmem:[%s2253 + $0x2c] sm:$0x1]
        %v2265 = vld [vmem:[%s2253 + $0x2e] sm:$0x1]
        %v2266 = vld [vmem:[%s2253 + $0x30] sm:$0x1]
        %v2267 = vld [vmem:[%s2253 + $0x32] sm:$0x1]
        %v2268 = vld [vmem:[%s2253 + $0x34] sm:$0x1]
        %v2269 = vld [vmem:[%s2253 + $0x36] sm:$0x1]
        %v2270 = vld [vmem:[%s2253 + $0x50] sm:$0x1]
        %v2271 = vld [vmem:[%s2253 + $0x52] sm:$0x1]
        %v2272 = vld [vmem:[%s2253 + $0x54] sm:$0x1]
        %v2273 = vld [vmem:[%s2253 + $0x56] sm:$0x1]
        %v2274 = vld [vmem:[%s2253 + $0x58] sm:$0x1]
        %v2275 = vld [vmem:[%s2253 + $0x5a] sm:$0x1]
        %v2276 = vld [vmem:[%s2253 + $0x5c] sm:$0x1]
        %v2277 = vld [vmem:[%s2253 + $0x5e] sm:$0x1]
        %v2278 = vld [vmem:[%s2253 + $0x78] sm:$0x1]
        %v2279 = vld [vmem:[%s2253 + $0x7a] sm:$0x1]
        %v2280 = vld [vmem:[%s2253 + $0x7c] sm:$0x1]
        %v2281 = vld [vmem:[%s2253 + $0x7e] sm:$0x1]
        %v2282 = vld [vmem:[%s2253 + $0x80] sm:$0x1]
        %v2283 = vld [vmem:[%s2253 + $0x82] sm:$0x1]
        %v2284 = vld [vmem:[%s2253 + $0x84] sm:$0x1]
        %v2285 = vld [vmem:[%s2253 + $0x86] sm:$0x1]
        %v2286 = vld [vmem:[%s2253 + $0xa0] sm:$0x1]
        %v2287 = vld [vmem:[%s2253 + $0xa2] sm:$0x1]
        %v2288 = vld [vmem:[%s2253 + $0xa4] sm:$0x1]
        %v2289 = vld [vmem:[%s2253 + $0xa6] sm:$0x1]
        %v2290 = vld [vmem:[%s2253 + $0xa8] sm:$0x1]
        %v2291 = vld [vmem:[%s2253 + $0xaa] sm:$0x1]
        %v2292 = vld [vmem:[%s2253 + $0xac] sm:$0x1]
        %v2293 = vld [vmem:[%s2253 + $0xae] sm:$0x1]
        %v2294 = vld [vmem:[%s2253 + $0xc8] sm:$0x1]
        %v2295 = vld [vmem:[%s2253 + $0xca] sm:$0x1]
        %v2296 = vld [vmem:[%s2253 + $0xcc] sm:$0x1]
        %v2297 = vld [vmem:[%s2253 + $0xce] sm:$0x1]
        %v2298 = vld [vmem:[%s2253 + $0xd0] sm:$0x1]
        %v2299 = vld [vmem:[%s2253 + $0xd2] sm:$0x1]
        %v2300 = vld [vmem:[%s2253 + $0xd4] sm:$0x1]
        %v2301 = vld [vmem:[%s2253 + $0xd6] sm:$0x1]
        %v2302 = vld [vmem:[%s2253 + $0xf0] sm:$0x1]
        %v2303 = vld [vmem:[%s2253 + $0xf2] sm:$0x1]
        %v2304 = vld [vmem:[%s2253 + $0xf4] sm:$0x1]
        %v2305 = vld [vmem:[%s2253 + $0xf6] sm:$0x1]
        %v2306 = vld [vmem:[%s2253 + $0xf8] sm:$0x1]
        %v2307 = vld [vmem:[%s2253 + $0xfa] sm:$0x1]
        %v2308 = vld [vmem:[%s2253 + $0xfc] sm:$0x1]
        %v2309 = vld [vmem:[%s2253 + $0xfe] sm:$0x1]
        %v2310 = vld [vmem:[%s2253 + $0x118] sm:$0x1]
        %v2311 = vld [vmem:[%s2253 + $0x11a] sm:$0x1]
        %v2312 = vld [vmem:[%s2253 + $0x11c] sm:$0x1]
        %v2313 = vld [vmem:[%s2253 + $0x11e] sm:$0x1]
        %v2314 = vld [vmem:[%s2253 + $0x120] sm:$0x1]
        %v2315 = vld [vmem:[%s2253 + $0x122] sm:$0x1]
        %v2316 = vld [vmem:[%s2253 + $0x124] sm:$0x1]
        %v2317 = vld [vmem:[%s2253 + $0x126] sm:$0x1]
        %v2382 = vrot.slane %v2255, 7
        %v2383 = vsel %vm2119, %v2382, %v2254
        %v2384 = vrot.slane %v2256, 6
        %v2385 = vsel %vm2122, %v2384, %v2383
        %v2386 = vrot.slane %v2257, 5
        %v2387 = vsel %vm2125, %v2386, %v2385
        %v2388 = vrot.slane %v2258, 4
        %v2389 = vsel %vm2128, %v2388, %v2387
        %v2390 = vrot.slane %v2259, 3
        %v2391 = vsel %vm2131, %v2390, %v2389
        %v2392 = vrot.slane %v2260, 2
        %v2393 = vsel %vm2134, %v2392, %v2391
        %v2394 = vrot.slane %v2261, 1
        %v2395 = vsel %vm2137, %v2394, %v2393
        %v2396 = vrot.slane %v2263, 7
        %v2397 = vsel %vm2119, %v2396, %v2262
        %v2398 = vrot.slane %v2264, 6
        %v2399 = vsel %vm2122, %v2398, %v2397
        %v2400 = vrot.slane %v2265, 5
        %v2401 = vsel %vm2125, %v2400, %v2399
        %v2402 = vrot.slane %v2266, 4
        %v2403 = vsel %vm2128, %v2402, %v2401
        %v2404 = vrot.slane %v2267, 3
        %v2405 = vsel %vm2131, %v2404, %v2403
        %v2406 = vrot.slane %v2268, 2
        %v2407 = vsel %vm2134, %v2406, %v2405
        %v2408 = vrot.slane %v2269, 1
        %v2409 = vsel %vm2137, %v2408, %v2407
        %v2410 = vrot.slane %v2271, 7
        %v2411 = vsel %vm2119, %v2410, %v2270
        %v2412 = vrot.slane %v2272, 6
        %v2413 = vsel %vm2122, %v2412, %v2411
        %v2414 = vrot.slane %v2273, 5
        %v2415 = vsel %vm2125, %v2414, %v2413
        %v2416 = vrot.slane %v2274, 4
        %v2417 = vsel %vm2128, %v2416, %v2415
        %v2418 = vrot.slane %v2275, 3
        %v2419 = vsel %vm2131, %v2418, %v2417
        %v2420 = vrot.slane %v2276, 2
        %v2421 = vsel %vm2134, %v2420, %v2419
        %v2422 = vrot.slane %v2277, 1
        %v2423 = vsel %vm2137, %v2422, %v2421
        %v2424 = vrot.slane %v2279, 7
        %v2425 = vsel %vm2119, %v2424, %v2278
        %v2426 = vrot.slane %v2280, 6
        %v2427 = vsel %vm2122, %v2426, %v2425
        %v2428 = vrot.slane %v2281, 5
        %v2429 = vsel %vm2125, %v2428, %v2427
        %v2430 = vrot.slane %v2282, 4
        %v2431 = vsel %vm2128, %v2430, %v2429
        %v2432 = vrot.slane %v2283, 3
        %v2433 = vsel %vm2131, %v2432, %v2431
        %v2434 = vrot.slane %v2284, 2
        %v2435 = vsel %vm2134, %v2434, %v2433
        %v2436 = vrot.slane %v2285, 1
        %v2437 = vsel %vm2137, %v2436, %v2435
        %v2438 = vrot.slane %v2287, 7
        %v2439 = vsel %vm2119, %v2438, %v2286
        %v2440 = vrot.slane %v2288, 6
        %v2441 = vsel %vm2122, %v2440, %v2439
        %v2442 = vrot.slane %v2289, 5
        %v2443 = vsel %vm2125, %v2442, %v2441
        %v2444 = vrot.slane %v2290, 4
        %v2445 = vsel %vm2128, %v2444, %v2443
        %v2446 = vrot.slane %v2291, 3
        %v2447 = vsel %vm2131, %v2446, %v2445
        %v2448 = vrot.slane %v2292, 2
        %v2449 = vsel %vm2134, %v2448, %v2447
        %v2450 = vrot.slane %v2293, 1
        %v2451 = vsel %vm2137, %v2450, %v2449
        %v2452 = vrot.slane %v2295, 7
        %v2453 = vsel %vm2119, %v2452, %v2294
        %v2454 = vrot.slane %v2296, 6
        %v2455 = vsel %vm2122, %v2454, %v2453
        %v2456 = vrot.slane %v2297, 5
        %v2457 = vsel %vm2125, %v2456, %v2455
        %v2458 = vrot.slane %v2298, 4
        %v2459 = vsel %vm2128, %v2458, %v2457
        %v2460 = vrot.slane %v2299, 3
        %v2461 = vsel %vm2131, %v2460, %v2459
        %v2462 = vrot.slane %v2300, 2
        %v2463 = vsel %vm2134, %v2462, %v2461
        %v2464 = vrot.slane %v2301, 1
        %v2465 = vsel %vm2137, %v2464, %v2463
        %v2466 = vrot.slane %v2303, 7
        %v2467 = vsel %vm2119, %v2466, %v2302
        %v2468 = vrot.slane %v2304, 6
        %v2469 = vsel %vm2122, %v2468, %v2467
        %v2470 = vrot.slane %v2305, 5
        %v2471 = vsel %vm2125, %v2470, %v2469
        %v2472 = vrot.slane %v2306, 4
        %v2473 = vsel %vm2128, %v2472, %v2471
        %v2474 = vrot.slane %v2307, 3
        %v2475 = vsel %vm2131, %v2474, %v2473
        %v2476 = vrot.slane %v2308, 2
        %v2477 = vsel %vm2134, %v2476, %v2475
        %v2478 = vrot.slane %v2309, 1
        %v2479 = vsel %vm2137, %v2478, %v2477
        %v2480 = vrot.slane %v2311, 7
        %v2481 = vsel %vm2119, %v2480, %v2310
        %v2482 = vrot.slane %v2312, 6
        %v2483 = vsel %vm2122, %v2482, %v2481
        %v2484 = vrot.slane %v2313, 5
        %v2485 = vsel %vm2125, %v2484, %v2483
        %v2486 = vrot.slane %v2314, 4
        %v2487 = vsel %vm2128, %v2486, %v2485
        %v2488 = vrot.slane %v2315, 3
        %v2489 = vsel %vm2131, %v2488, %v2487
        %v2490 = vrot.slane %v2316, 2
        %v2491 = vsel %vm2134, %v2490, %v2489
        %v2492 = vrot.slane %v2317, 1
        %v2493 = vsel %vm2137, %v2492, %v2491
        %2494 = vrot.lane.b32.xlu0 %v2395, 32
        %v2495 = vpop.permute.xlu0 %2494
        %2496 = vrot.lane.b32.xlu0 %v2409, 32
        %v2497 = vpop.permute.xlu0 %2496
        %2498 = vrot.lane.b32.xlu0 %v2423, 32
        %v2499 = vpop.permute.xlu0 %2498
        %2500 = vrot.lane.b32.xlu0 %v2437, 32
        %v2501 = vpop.permute.xlu0 %2500
        %2502 = vrot.lane.b32.xlu0 %v2451, 32
        %v2503 = vpop.permute.xlu0 %2502
        %2504 = vrot.lane.b32.xlu0 %v2465, 32
        %v2505 = vpop.permute.xlu0 %2504
        %2506 = vrot.lane.b32.xlu0 %v2479, 32
        %v2507 = vpop.permute.xlu0 %2506
        %2508 = vrot.lane.b32.xlu0 %v2493, 32
        %v2509 = vpop.permute.xlu0 %2508
        %vm2518 = vcmask 523520
        %2519 = vst.msk [vmem:[#allocation3] sm:$0xff] %vm2518, %v2495
        %2520 = vst.msk [vmem:[#allocation3 + $0x18] sm:$0xff] %vm2518, %v2497
        %2521 = vst.msk [vmem:[#allocation3 + $0x30] sm:$0xff] %vm2518, %v2499
        %2522 = vst.msk [vmem:[#allocation3 + $0x48] sm:$0xff] %vm2518, %v2501
        %2523 = vst.msk [vmem:[#allocation3 + $0x60] sm:$0xff] %vm2518, %v2503
        %2524 = vst.msk [vmem:[#allocation3 + $0x78] sm:$0xff] %vm2518, %v2505
        %2525 = vst.msk [vmem:[#allocation3 + $0x90] sm:$0xff] %vm2518, %v2507
        %2526 = vst.msk [vmem:[#allocation3 + $0xa8] sm:$0xff] %vm2518, %v2509
        %v2527 = vld [vmem:[%s2253 + $0x1] sm:$0x1]
        %v2528 = vld [vmem:[%s2253 + $0x3] sm:$0x1]
        %v2529 = vld [vmem:[%s2253 + $0x5] sm:$0x1]
        %v2530 = vld [vmem:[%s2253 + $0x7] sm:$0x1]
        %v2531 = vld [vmem:[%s2253 + $0x9] sm:$0x1]
        %v2532 = vld [vmem:[%s2253 + $0xb] sm:$0x1]
        %v2533 = vld [vmem:[%s2253 + $0xd] sm:$0x1]
        %v2534 = vld [vmem:[%s2253 + $0xf] sm:$0x1]
        %v2535 = vld [vmem:[%s2253 + $0x29] sm:$0x1]
        %v2536 = vld [vmem:[%s2253 + $0x2b] sm:$0x1]
        %v2537 = vld [vmem:[%s2253 + $0x2d] sm:$0x1]
        %v2538 = vld [vmem:[%s2253 + $0x2f] sm:$0x1]
        %v2539 = vld [vmem:[%s2253 + $0x31] sm:$0x1]
        %v2540 = vld [vmem:[%s2253 + $0x33] sm:$0x1]
        %v2541 = vld [vmem:[%s2253 + $0x35] sm:$0x1]
        %v2542 = vld [vmem:[%s2253 + $0x37] sm:$0x1]
        %v2543 = vld [vmem:[%s2253 + $0x51] sm:$0x1]
        %v2544 = vld [vmem:[%s2253 + $0x53] sm:$0x1]
        %v2545 = vld [vmem:[%s2253 + $0x55] sm:$0x1]
        %v2546 = vld [vmem:[%s2253 + $0x57] sm:$0x1]
        %v2547 = vld [vmem:[%s2253 + $0x59] sm:$0x1]
        %v2548 = vld [vmem:[%s2253 + $0x5b] sm:$0x1]
        %v2549 = vld [vmem:[%s2253 + $0x5d] sm:$0x1]
        %v2550 = vld [vmem:[%s2253 + $0x5f] sm:$0x1]
        %v2551 = vld [vmem:[%s2253 + $0x79] sm:$0x1]
        %v2552 = vld [vmem:[%s2253 + $0x7b] sm:$0x1]
        %v2553 = vld [vmem:[%s2253 + $0x7d] sm:$0x1]
        %v2554 = vld [vmem:[%s2253 + $0x7f] sm:$0x1]
        %v2555 = vld [vmem:[%s2253 + $0x81] sm:$0x1]
        %v2556 = vld [vmem:[%s2253 + $0x83] sm:$0x1]
        %v2557 = vld [vmem:[%s2253 + $0x85] sm:$0x1]
        %v2558 = vld [vmem:[%s2253 + $0x87] sm:$0x1]
        %v2559 = vld [vmem:[%s2253 + $0xa1] sm:$0x1]
        %v2560 = vld [vmem:[%s2253 + $0xa3] sm:$0x1]
        %v2561 = vld [vmem:[%s2253 + $0xa5] sm:$0x1]
        %v2562 = vld [vmem:[%s2253 + $0xa7] sm:$0x1]
        %v2563 = vld [vmem:[%s2253 + $0xa9] sm:$0x1]
        %v2564 = vld [vmem:[%s2253 + $0xab] sm:$0x1]
        %v2565 = vld [vmem:[%s2253 + $0xad] sm:$0x1]
        %v2566 = vld [vmem:[%s2253 + $0xaf] sm:$0x1]
        %v2567 = vld [vmem:[%s2253 + $0xc9] sm:$0x1]
        %v2568 = vld [vmem:[%s2253 + $0xcb] sm:$0x1]
        %v2569 = vld [vmem:[%s2253 + $0xcd] sm:$0x1]
        %v2570 = vld [vmem:[%s2253 + $0xcf] sm:$0x1]
        %v2571 = vld [vmem:[%s2253 + $0xd1] sm:$0x1]
        %v2572 = vld [vmem:[%s2253 + $0xd3] sm:$0x1]
        %v2573 = vld [vmem:[%s2253 + $0xd5] sm:$0x1]
        %v2574 = vld [vmem:[%s2253 + $0xd7] sm:$0x1]
        %v2575 = vld [vmem:[%s2253 + $0xf1] sm:$0x1]
        %v2576 = vld [vmem:[%s2253 + $0xf3] sm:$0x1]
        %v2577 = vld [vmem:[%s2253 + $0xf5] sm:$0x1]
        %v2578 = vld [vmem:[%s2253 + $0xf7] sm:$0x1]
        %v2579 = vld [vmem:[%s2253 + $0xf9] sm:$0x1]
        %v2580 = vld [vmem:[%s2253 + $0xfb] sm:$0x1]
        %v2581 = vld [vmem:[%s2253 + $0xfd] sm:$0x1]
        %v2582 = vld [vmem:[%s2253 + $0xff] sm:$0x1]
        %v2583 = vld [vmem:[%s2253 + $0x119] sm:$0x1]
        %v2584 = vld [vmem:[%s2253 + $0x11b] sm:$0x1]
        %v2585 = vld [vmem:[%s2253 + $0x11d] sm:$0x1]
        %v2586 = vld [vmem:[%s2253 + $0x11f] sm:$0x1]
        %v2587 = vld [vmem:[%s2253 + $0x121] sm:$0x1]
        %v2588 = vld [vmem:[%s2253 + $0x123] sm:$0x1]
        %v2589 = vld [vmem:[%s2253 + $0x125] sm:$0x1]
        %v2590 = vld [vmem:[%s2253 + $0x127] sm:$0x1]
        %v2655 = vrot.slane %v2528, 7
        %v2656 = vsel %vm2119, %v2655, %v2527
        %v2657 = vrot.slane %v2529, 6
        %v2658 = vsel %vm2122, %v2657, %v2656
        %v2659 = vrot.slane %v2530, 5
        %v2660 = vsel %vm2125, %v2659, %v2658
        %v2661 = vrot.slane %v2531, 4
        %v2662 = vsel %vm2128, %v2661, %v2660
        %v2663 = vrot.slane %v2532, 3
        %v2664 = vsel %vm2131, %v2663, %v2662
        %v2665 = vrot.slane %v2533, 2
        %v2666 = vsel %vm2134, %v2665, %v2664
        %v2667 = vrot.slane %v2534, 1
        %v2668 = vsel %vm2137, %v2667, %v2666
        %v2669 = vrot.slane %v2536, 7
        %v2670 = vsel %vm2119, %v2669, %v2535
        %v2671 = vrot.slane %v2537, 6
        %v2672 = vsel %vm2122, %v2671, %v2670
        %v2673 = vrot.slane %v2538, 5
        %v2674 = vsel %vm2125, %v2673, %v2672
        %v2675 = vrot.slane %v2539, 4
        %v2676 = vsel %vm2128, %v2675, %v2674
        %v2677 = vrot.slane %v2540, 3
        %v2678 = vsel %vm2131, %v2677, %v2676
        %v2679 = vrot.slane %v2541, 2
        %v2680 = vsel %vm2134, %v2679, %v2678
        %v2681 = vrot.slane %v2542, 1
        %v2682 = vsel %vm2137, %v2681, %v2680
        %v2683 = vrot.slane %v2544, 7
        %v2684 = vsel %vm2119, %v2683, %v2543
        %v2685 = vrot.slane %v2545, 6
        %v2686 = vsel %vm2122, %v2685, %v2684
        %v2687 = vrot.slane %v2546, 5
        %v2688 = vsel %vm2125, %v2687, %v2686
        %v2689 = vrot.slane %v2547, 4
        %v2690 = vsel %vm2128, %v2689, %v2688
        %v2691 = vrot.slane %v2548, 3
        %v2692 = vsel %vm2131, %v2691, %v2690
        %v2693 = vrot.slane %v2549, 2
        %v2694 = vsel %vm2134, %v2693, %v2692
        %v2695 = vrot.slane %v2550, 1
        %v2696 = vsel %vm2137, %v2695, %v2694
        %v2697 = vrot.slane %v2552, 7
        %v2698 = vsel %vm2119, %v2697, %v2551
        %v2699 = vrot.slane %v2553, 6
        %v2700 = vsel %vm2122, %v2699, %v2698
        %v2701 = vrot.slane %v2554, 5
        %v2702 = vsel %vm2125, %v2701, %v2700
        %v2703 = vrot.slane %v2555, 4
        %v2704 = vsel %vm2128, %v2703, %v2702
        %v2705 = vrot.slane %v2556, 3
        %v2706 = vsel %vm2131, %v2705, %v2704
        %v2707 = vrot.slane %v2557, 2
        %v2708 = vsel %vm2134, %v2707, %v2706
        %v2709 = vrot.slane %v2558, 1
        %v2710 = vsel %vm2137, %v2709, %v2708
        %v2711 = vrot.slane %v2560, 7
        %v2712 = vsel %vm2119, %v2711, %v2559
        %v2713 = vrot.slane %v2561, 6
        %v2714 = vsel %vm2122, %v2713, %v2712
        %v2715 = vrot.slane %v2562, 5
        %v2716 = vsel %vm2125, %v2715, %v2714
        %v2717 = vrot.slane %v2563, 4
        %v2718 = vsel %vm2128, %v2717, %v2716
        %v2719 = vrot.slane %v2564, 3
        %v2720 = vsel %vm2131, %v2719, %v2718
        %v2721 = vrot.slane %v2565, 2
        %v2722 = vsel %vm2134, %v2721, %v2720
        %v2723 = vrot.slane %v2566, 1
        %v2724 = vsel %vm2137, %v2723, %v2722
        %v2725 = vrot.slane %v2568, 7
        %v2726 = vsel %vm2119, %v2725, %v2567
        %v2727 = vrot.slane %v2569, 6
        %v2728 = vsel %vm2122, %v2727, %v2726
        %v2729 = vrot.slane %v2570, 5
        %v2730 = vsel %vm2125, %v2729, %v2728
        %v2731 = vrot.slane %v2571, 4
        %v2732 = vsel %vm2128, %v2731, %v2730
        %v2733 = vrot.slane %v2572, 3
        %v2734 = vsel %vm2131, %v2733, %v2732
        %v2735 = vrot.slane %v2573, 2
        %v2736 = vsel %vm2134, %v2735, %v2734
        %v2737 = vrot.slane %v2574, 1
        %v2738 = vsel %vm2137, %v2737, %v2736
        %v2739 = vrot.slane %v2576, 7
        %v2740 = vsel %vm2119, %v2739, %v2575
        %v2741 = vrot.slane %v2577, 6
        %v2742 = vsel %vm2122, %v2741, %v2740
        %v2743 = vrot.slane %v2578, 5
        %v2744 = vsel %vm2125, %v2743, %v2742
        %v2745 = vrot.slane %v2579, 4
        %v2746 = vsel %vm2128, %v2745, %v2744
        %v2747 = vrot.slane %v2580, 3
        %v2748 = vsel %vm2131, %v2747, %v2746
        %v2749 = vrot.slane %v2581, 2
        %v2750 = vsel %vm2134, %v2749, %v2748
        %v2751 = vrot.slane %v2582, 1
        %v2752 = vsel %vm2137, %v2751, %v2750
        %v2753 = vrot.slane %v2584, 7
        %v2754 = vsel %vm2119, %v2753, %v2583
        %v2755 = vrot.slane %v2585, 6
        %v2756 = vsel %vm2122, %v2755, %v2754
        %v2757 = vrot.slane %v2586, 5
        %v2758 = vsel %vm2125, %v2757, %v2756
        %v2759 = vrot.slane %v2587, 4
        %v2760 = vsel %vm2128, %v2759, %v2758
        %v2761 = vrot.slane %v2588, 3
        %v2762 = vsel %vm2131, %v2761, %v2760
        %v2763 = vrot.slane %v2589, 2
        %v2764 = vsel %vm2134, %v2763, %v2762
        %v2765 = vrot.slane %v2590, 1
        %v2766 = vsel %vm2137, %v2765, %v2764
        %2767 = vrot.lane.b32.xlu0 %v2668, 64
        %v2768 = vpop.permute.xlu0 %2767
        %2769 = vrot.lane.b32.xlu0 %v2682, 64
        %v2770 = vpop.permute.xlu0 %2769
        %2771 = vrot.lane.b32.xlu0 %v2696, 64
        %v2772 = vpop.permute.xlu0 %2771
        %2773 = vrot.lane.b32.xlu0 %v2710, 64
        %v2774 = vpop.permute.xlu0 %2773
        %2775 = vrot.lane.b32.xlu0 %v2724, 64
        %v2776 = vpop.permute.xlu0 %2775
        %2777 = vrot.lane.b32.xlu0 %v2738, 64
        %v2778 = vpop.permute.xlu0 %2777
        %2779 = vrot.lane.b32.xlu0 %v2752, 64
        %v2780 = vpop.permute.xlu0 %2779
        %2781 = vrot.lane.b32.xlu0 %v2766, 64
        %v2782 = vpop.permute.xlu0 %2781
        %vm2791 = vcmask 785920
        %2792 = vst.msk [vmem:[#allocation3] sm:$0xff] %vm2791, %v2768
        %2793 = vst.msk [vmem:[#allocation3 + $0x18] sm:$0xff] %vm2791, %v2770
        %2794 = vst.msk [vmem:[#allocation3 + $0x30] sm:$0xff] %vm2791, %v2772
        %2795 = vst.msk [vmem:[#allocation3 + $0x48] sm:$0xff] %vm2791, %v2774
        %2796 = vst.msk [vmem:[#allocation3 + $0x60] sm:$0xff] %vm2791, %v2776
        %2797 = vst.msk [vmem:[#allocation3 + $0x78] sm:$0xff] %vm2791, %v2778
        %2798 = vst.msk [vmem:[#allocation3 + $0x90] sm:$0xff] %vm2791, %v2780
        %2799 = vst.msk [vmem:[#allocation3 + $0xa8] sm:$0xff] %vm2791, %v2782
        %s2800 = scalar_lea.vmem [#allocation2], 40
        %v2801 = vld [vmem:[%s2800 + $0x1] sm:$0x1]
        %v2802 = vld [vmem:[%s2800 + $0x3] sm:$0x1]
        %v2803 = vld [vmem:[%s2800 + $0x5] sm:$0x1]
        %v2804 = vld [vmem:[%s2800 + $0x7] sm:$0x1]
        %v2805 = vld [vmem:[%s2800 + $0x9] sm:$0x1]
        %v2806 = vld [vmem:[%s2800 + $0xb] sm:$0x1]
        %v2807 = vld [vmem:[%s2800 + $0xd] sm:$0x1]
        %v2808 = vld [vmem:[%s2800 + $0xf] sm:$0x1]
        %v2809 = vld [vmem:[%s2800 + $0x29] sm:$0x1]
        %v2810 = vld [vmem:[%s2800 + $0x2b] sm:$0x1]
        %v2811 = vld [vmem:[%s2800 + $0x2d] sm:$0x1]
        %v2812 = vld [vmem:[%s2800 + $0x2f] sm:$0x1]
        %v2813 = vld [vmem:[%s2800 + $0x31] sm:$0x1]
        %v2814 = vld [vmem:[%s2800 + $0x33] sm:$0x1]
        %v2815 = vld [vmem:[%s2800 + $0x35] sm:$0x1]
        %v2816 = vld [vmem:[%s2800 + $0x37] sm:$0x1]
        %v2817 = vld [vmem:[%s2800 + $0x51] sm:$0x1]
        %v2818 = vld [vmem:[%s2800 + $0x53] sm:$0x1]
        %v2819 = vld [vmem:[%s2800 + $0x55] sm:$0x1]
        %v2820 = vld [vmem:[%s2800 + $0x57] sm:$0x1]
        %v2821 = vld [vmem:[%s2800 + $0x59] sm:$0x1]
        %v2822 = vld [vmem:[%s2800 + $0x5b] sm:$0x1]
        %v2823 = vld [vmem:[%s2800 + $0x5d] sm:$0x1]
        %v2824 = vld [vmem:[%s2800 + $0x5f] sm:$0x1]
        %v2825 = vld [vmem:[%s2800 + $0x79] sm:$0x1]
        %v2826 = vld [vmem:[%s2800 + $0x7b] sm:$0x1]
        %v2827 = vld [vmem:[%s2800 + $0x7d] sm:$0x1]
        %v2828 = vld [vmem:[%s2800 + $0x7f] sm:$0x1]
        %v2829 = vld [vmem:[%s2800 + $0x81] sm:$0x1]
        %v2830 = vld [vmem:[%s2800 + $0x83] sm:$0x1]
        %v2831 = vld [vmem:[%s2800 + $0x85] sm:$0x1]
        %v2832 = vld [vmem:[%s2800 + $0x87] sm:$0x1]
        %v2833 = vld [vmem:[%s2800 + $0xa1] sm:$0x1]
        %v2834 = vld [vmem:[%s2800 + $0xa3] sm:$0x1]
        %v2835 = vld [vmem:[%s2800 + $0xa5] sm:$0x1]
        %v2836 = vld [vmem:[%s2800 + $0xa7] sm:$0x1]
        %v2837 = vld [vmem:[%s2800 + $0xa9] sm:$0x1]
        %v2838 = vld [vmem:[%s2800 + $0xab] sm:$0x1]
        %v2839 = vld [vmem:[%s2800 + $0xad] sm:$0x1]
        %v2840 = vld [vmem:[%s2800 + $0xaf] sm:$0x1]
        %v2841 = vld [vmem:[%s2800 + $0xc9] sm:$0x1]
        %v2842 = vld [vmem:[%s2800 + $0xcb] sm:$0x1]
        %v2843 = vld [vmem:[%s2800 + $0xcd] sm:$0x1]
        %v2844 = vld [vmem:[%s2800 + $0xcf] sm:$0x1]
        %v2845 = vld [vmem:[%s2800 + $0xd1] sm:$0x1]
        %v2846 = vld [vmem:[%s2800 + $0xd3] sm:$0x1]
        %v2847 = vld [vmem:[%s2800 + $0xd5] sm:$0x1]
        %v2848 = vld [vmem:[%s2800 + $0xd7] sm:$0x1]
        %v2849 = vld [vmem:[%s2800 + $0xf1] sm:$0x1]
        %v2850 = vld [vmem:[%s2800 + $0xf3] sm:$0x1]
        %v2851 = vld [vmem:[%s2800 + $0xf5] sm:$0x1]
        %v2852 = vld [vmem:[%s2800 + $0xf7] sm:$0x1]
        %v2853 = vld [vmem:[%s2800 + $0xf9] sm:$0x1]
        %v2854 = vld [vmem:[%s2800 + $0xfb] sm:$0x1]
        %v2855 = vld [vmem:[%s2800 + $0xfd] sm:$0x1]
        %v2856 = vld [vmem:[%s2800 + $0xff] sm:$0x1]
        %v2857 = vld [vmem:[%s2800 + $0x119] sm:$0x1]
        %v2858 = vld [vmem:[%s2800 + $0x11b] sm:$0x1]
        %v2859 = vld [vmem:[%s2800 + $0x11d] sm:$0x1]
        %v2860 = vld [vmem:[%s2800 + $0x11f] sm:$0x1]
        %v2861 = vld [vmem:[%s2800 + $0x121] sm:$0x1]
        %v2862 = vld [vmem:[%s2800 + $0x123] sm:$0x1]
        %v2863 = vld [vmem:[%s2800 + $0x125] sm:$0x1]
        %v2864 = vld [vmem:[%s2800 + $0x127] sm:$0x1]
        %v2929 = vrot.slane %v2802, 7
        %v2930 = vsel %vm2119, %v2929, %v2801
        %v2931 = vrot.slane %v2803, 6
        %v2932 = vsel %vm2122, %v2931, %v2930
        %v2933 = vrot.slane %v2804, 5
        %v2934 = vsel %vm2125, %v2933, %v2932
        %v2935 = vrot.slane %v2805, 4
        %v2936 = vsel %vm2128, %v2935, %v2934
        %v2937 = vrot.slane %v2806, 3
        %v2938 = vsel %vm2131, %v2937, %v2936
        %v2939 = vrot.slane %v2807, 2
        %v2940 = vsel %vm2134, %v2939, %v2938
        %v2941 = vrot.slane %v2808, 1
        %v2942 = vsel %vm2137, %v2941, %v2940
        %v2943 = vrot.slane %v2810, 7
        %v2944 = vsel %vm2119, %v2943, %v2809
        %v2945 = vrot.slane %v2811, 6
        %v2946 = vsel %vm2122, %v2945, %v2944
        %v2947 = vrot.slane %v2812, 5
        %v2948 = vsel %vm2125, %v2947, %v2946
        %v2949 = vrot.slane %v2813, 4
        %v2950 = vsel %vm2128, %v2949, %v2948
        %v2951 = vrot.slane %v2814, 3
        %v2952 = vsel %vm2131, %v2951, %v2950
        %v2953 = vrot.slane %v2815, 2
        %v2954 = vsel %vm2134, %v2953, %v2952
        %v2955 = vrot.slane %v2816, 1
        %v2956 = vsel %vm2137, %v2955, %v2954
        %v2957 = vrot.slane %v2818, 7
        %v2958 = vsel %vm2119, %v2957, %v2817
        %v2959 = vrot.slane %v2819, 6
        %v2960 = vsel %vm2122, %v2959, %v2958
        %v2961 = vrot.slane %v2820, 5
        %v2962 = vsel %vm2125, %v2961, %v2960
        %v2963 = vrot.slane %v2821, 4
        %v2964 = vsel %vm2128, %v2963, %v2962
        %v2965 = vrot.slane %v2822, 3
        %v2966 = vsel %vm2131, %v2965, %v2964
        %v2967 = vrot.slane %v2823, 2
        %v2968 = vsel %vm2134, %v2967, %v2966
        %v2969 = vrot.slane %v2824, 1
        %v2970 = vsel %vm2137, %v2969, %v2968
        %v2971 = vrot.slane %v2826, 7
        %v2972 = vsel %vm2119, %v2971, %v2825
        %v2973 = vrot.slane %v2827, 6
        %v2974 = vsel %vm2122, %v2973, %v2972
        %v2975 = vrot.slane %v2828, 5
        %v2976 = vsel %vm2125, %v2975, %v2974
        %v2977 = vrot.slane %v2829, 4
        %v2978 = vsel %vm2128, %v2977, %v2976
        %v2979 = vrot.slane %v2830, 3
        %v2980 = vsel %vm2131, %v2979, %v2978
        %v2981 = vrot.slane %v2831, 2
        %v2982 = vsel %vm2134, %v2981, %v2980
        %v2983 = vrot.slane %v2832, 1
        %v2984 = vsel %vm2137, %v2983, %v2982
        %v2985 = vrot.slane %v2834, 7
        %v2986 = vsel %vm2119, %v2985, %v2833
        %v2987 = vrot.slane %v2835, 6
        %v2988 = vsel %vm2122, %v2987, %v2986
        %v2989 = vrot.slane %v2836, 5
        %v2990 = vsel %vm2125, %v2989, %v2988
        %v2991 = vrot.slane %v2837, 4
        %v2992 = vsel %vm2128, %v2991, %v2990
        %v2993 = vrot.slane %v2838, 3
        %v2994 = vsel %vm2131, %v2993, %v2992
        %v2995 = vrot.slane %v2839, 2
        %v2996 = vsel %vm2134, %v2995, %v2994
        %v2997 = vrot.slane %v2840, 1
        %v2998 = vsel %vm2137, %v2997, %v2996
        %v2999 = vrot.slane %v2842, 7
        %v3000 = vsel %vm2119, %v2999, %v2841
        %v3001 = vrot.slane %v2843, 6
        %v3002 = vsel %vm2122, %v3001, %v3000
        %v3003 = vrot.slane %v2844, 5
        %v3004 = vsel %vm2125, %v3003, %v3002
        %v3005 = vrot.slane %v2845, 4
        %v3006 = vsel %vm2128, %v3005, %v3004
        %v3007 = vrot.slane %v2846, 3
        %v3008 = vsel %vm2131, %v3007, %v3006
        %v3009 = vrot.slane %v2847, 2
        %v3010 = vsel %vm2134, %v3009, %v3008
        %v3011 = vrot.slane %v2848, 1
        %v3012 = vsel %vm2137, %v3011, %v3010
        %v3013 = vrot.slane %v2850, 7
        %v3014 = vsel %vm2119, %v3013, %v2849
        %v3015 = vrot.slane %v2851, 6
        %v3016 = vsel %vm2122, %v3015, %v3014
        %v3017 = vrot.slane %v2852, 5
        %v3018 = vsel %vm2125, %v3017, %v3016
        %v3019 = vrot.slane %v2853, 4
        %v3020 = vsel %vm2128, %v3019, %v3018
        %v3021 = vrot.slane %v2854, 3
        %v3022 = vsel %vm2131, %v3021, %v3020
        %v3023 = vrot.slane %v2855, 2
        %v3024 = vsel %vm2134, %v3023, %v3022
        %v3025 = vrot.slane %v2856, 1
        %v3026 = vsel %vm2137, %v3025, %v3024
        %v3027 = vrot.slane %v2858, 7
        %v3028 = vsel %vm2119, %v3027, %v2857
        %v3029 = vrot.slane %v2859, 6
        %v3030 = vsel %vm2122, %v3029, %v3028
        %v3031 = vrot.slane %v2860, 5
        %v3032 = vsel %vm2125, %v3031, %v3030
        %v3033 = vrot.slane %v2861, 4
        %v3034 = vsel %vm2128, %v3033, %v3032
        %v3035 = vrot.slane %v2862, 3
        %v3036 = vsel %vm2131, %v3035, %v3034
        %v3037 = vrot.slane %v2863, 2
        %v3038 = vsel %vm2134, %v3037, %v3036
        %v3039 = vrot.slane %v2864, 1
        %v3040 = vsel %vm2137, %v3039, %v3038
        %3041 = vrot.lane.b32.xlu0 %v2942, 96
        %v3042 = vpop.permute.xlu0 %3041
        %3043 = vrot.lane.b32.xlu0 %v2956, 96
        %v3044 = vpop.permute.xlu0 %3043
        %3045 = vrot.lane.b32.xlu0 %v2970, 96
        %v3046 = vpop.permute.xlu0 %3045
        %3047 = vrot.lane.b32.xlu0 %v2984, 96
        %v3048 = vpop.permute.xlu0 %3047
        %3049 = vrot.lane.b32.xlu0 %v2998, 96
        %v3050 = vpop.permute.xlu0 %3049
        %3051 = vrot.lane.b32.xlu0 %v3012, 96
        %v3052 = vpop.permute.xlu0 %3051
        %3053 = vrot.lane.b32.xlu0 %v3026, 96
        %v3054 = vpop.permute.xlu0 %3053
        %3055 = vrot.lane.b32.xlu0 %v3040, 96
        %v3056 = vpop.permute.xlu0 %3055
        %vm3065 = vcmask 1048320
        %3066 = vst.msk [vmem:[#allocation3] sm:$0xff] %vm3065, %v3042
        %3067 = vst.msk [vmem:[#allocation3 + $0x18] sm:$0xff] %vm3065, %v3044
        %3068 = vst.msk [vmem:[#allocation3 + $0x30] sm:$0xff] %vm3065, %v3046
        %3069 = vst.msk [vmem:[#allocation3 + $0x48] sm:$0xff] %vm3065, %v3048
        %3070 = vst.msk [vmem:[#allocation3 + $0x60] sm:$0xff] %vm3065, %v3050
        %3071 = vst.msk [vmem:[#allocation3 + $0x78] sm:$0xff] %vm3065, %v3052
        %3072 = vst.msk [vmem:[#allocation3 + $0x90] sm:$0xff] %vm3065, %v3054
        %3073 = vst.msk [vmem:[#allocation3 + $0xa8] sm:$0xff] %vm3065, %v3056
        %v3074 = vld [vmem:[%s1860] sm:$0x1]
        %v3075 = vld [vmem:[%s1860 + $0x2] sm:$0x1]
        %v3076 = vld [vmem:[%s1860 + $0x4] sm:$0x1]
        %v3077 = vld [vmem:[%s1860 + $0x6] sm:$0x1]
        %v3078 = vld [vmem:[%s1860 + $0x8] sm:$0x1]
        %v3079 = vld [vmem:[%s1860 + $0xa] sm:$0x1]
        %v3080 = vld [vmem:[%s1860 + $0xc] sm:$0x1]
        %v3081 = vld [vmem:[%s1860 + $0xe] sm:$0x1]
        %v3082 = vld [vmem:[%s1860 + $0x28] sm:$0x1]
        %v3083 = vld [vmem:[%s1860 + $0x2a] sm:$0x1]
        %v3084 = vld [vmem:[%s1860 + $0x2c] sm:$0x1]
        %v3085 = vld [vmem:[%s1860 + $0x2e] sm:$0x1]
        %v3086 = vld [vmem:[%s1860 + $0x30] sm:$0x1]
        %v3087 = vld [vmem:[%s1860 + $0x32] sm:$0x1]
        %v3088 = vld [vmem:[%s1860 + $0x34] sm:$0x1]
        %v3089 = vld [vmem:[%s1860 + $0x36] sm:$0x1]
        %v3090 = vld [vmem:[%s1860 + $0x50] sm:$0x1]
        %v3091 = vld [vmem:[%s1860 + $0x52] sm:$0x1]
        %v3092 = vld [vmem:[%s1860 + $0x54] sm:$0x1]
        %v3093 = vld [vmem:[%s1860 + $0x56] sm:$0x1]
        %v3094 = vld [vmem:[%s1860 + $0x58] sm:$0x1]
        %v3095 = vld [vmem:[%s1860 + $0x5a] sm:$0x1]
        %v3096 = vld [vmem:[%s1860 + $0x5c] sm:$0x1]
        %v3097 = vld [vmem:[%s1860 + $0x5e] sm:$0x1]
        %v3098 = vld [vmem:[%s1860 + $0x78] sm:$0x1]
        %v3099 = vld [vmem:[%s1860 + $0x7a] sm:$0x1]
        %v3100 = vld [vmem:[%s1860 + $0x7c] sm:$0x1]
        %v3101 = vld [vmem:[%s1860 + $0x7e] sm:$0x1]
        %v3102 = vld [vmem:[%s1860 + $0x80] sm:$0x1]
        %v3103 = vld [vmem:[%s1860 + $0x82] sm:$0x1]
        %v3104 = vld [vmem:[%s1860 + $0x84] sm:$0x1]
        %v3105 = vld [vmem:[%s1860 + $0x86] sm:$0x1]
        %v3106 = vld [vmem:[%s1860 + $0xa0] sm:$0x1]
        %v3107 = vld [vmem:[%s1860 + $0xa2] sm:$0x1]
        %v3108 = vld [vmem:[%s1860 + $0xa4] sm:$0x1]
        %v3109 = vld [vmem:[%s1860 + $0xa6] sm:$0x1]
        %v3110 = vld [vmem:[%s1860 + $0xa8] sm:$0x1]
        %v3111 = vld [vmem:[%s1860 + $0xaa] sm:$0x1]
        %v3112 = vld [vmem:[%s1860 + $0xac] sm:$0x1]
        %v3113 = vld [vmem:[%s1860 + $0xae] sm:$0x1]
        %v3114 = vld [vmem:[%s1860 + $0xc8] sm:$0x1]
        %v3115 = vld [vmem:[%s1860 + $0xca] sm:$0x1]
        %v3116 = vld [vmem:[%s1860 + $0xcc] sm:$0x1]
        %v3117 = vld [vmem:[%s1860 + $0xce] sm:$0x1]
        %v3118 = vld [vmem:[%s1860 + $0xd0] sm:$0x1]
        %v3119 = vld [vmem:[%s1860 + $0xd2] sm:$0x1]
        %v3120 = vld [vmem:[%s1860 + $0xd4] sm:$0x1]
        %v3121 = vld [vmem:[%s1860 + $0xd6] sm:$0x1]
        %v3122 = vld [vmem:[%s1860 + $0xf0] sm:$0x1]
        %v3123 = vld [vmem:[%s1860 + $0xf2] sm:$0x1]
        %v3124 = vld [vmem:[%s1860 + $0xf4] sm:$0x1]
        %v3125 = vld [vmem:[%s1860 + $0xf6] sm:$0x1]
        %v3126 = vld [vmem:[%s1860 + $0xf8] sm:$0x1]
        %v3127 = vld [vmem:[%s1860 + $0xfa] sm:$0x1]
        %v3128 = vld [vmem:[%s1860 + $0xfc] sm:$0x1]
        %v3129 = vld [vmem:[%s1860 + $0xfe] sm:$0x1]
        %v3130 = vld [vmem:[%s1860 + $0x118] sm:$0x1]
        %v3131 = vld [vmem:[%s1860 + $0x11a] sm:$0x1]
        %v3132 = vld [vmem:[%s1860 + $0x11c] sm:$0x1]
        %v3133 = vld [vmem:[%s1860 + $0x11e] sm:$0x1]
        %v3134 = vld [vmem:[%s1860 + $0x120] sm:$0x1]
        %v3135 = vld [vmem:[%s1860 + $0x122] sm:$0x1]
        %v3136 = vld [vmem:[%s1860 + $0x124] sm:$0x1]
        %v3137 = vld [vmem:[%s1860 + $0x126] sm:$0x1]
        %v3202 = vrot.slane %v3075, 7
        %v3203 = vsel %vm2119, %v3202, %v3074
        %v3204 = vrot.slane %v3076, 6
        %v3205 = vsel %vm2122, %v3204, %v3203
        %v3206 = vrot.slane %v3077, 5
        %v3207 = vsel %vm2125, %v3206, %v3205
        %v3208 = vrot.slane %v3078, 4
        %v3209 = vsel %vm2128, %v3208, %v3207
        %v3210 = vrot.slane %v3079, 3
        %v3211 = vsel %vm2131, %v3210, %v3209
        %v3212 = vrot.slane %v3080, 2
        %v3213 = vsel %vm2134, %v3212, %v3211
        %v3214 = vrot.slane %v3081, 1
        %v3215 = vsel %vm2137, %v3214, %v3213
        %v3216 = vrot.slane %v3083, 7
        %v3217 = vsel %vm2119, %v3216, %v3082
        %v3218 = vrot.slane %v3084, 6
        %v3219 = vsel %vm2122, %v3218, %v3217
        %v3220 = vrot.slane %v3085, 5
        %v3221 = vsel %vm2125, %v3220, %v3219
        %v3222 = vrot.slane %v3086, 4
        %v3223 = vsel %vm2128, %v3222, %v3221
        %v3224 = vrot.slane %v3087, 3
        %v3225 = vsel %vm2131, %v3224, %v3223
        %v3226 = vrot.slane %v3088, 2
        %v3227 = vsel %vm2134, %v3226, %v3225
        %v3228 = vrot.slane %v3089, 1
        %v3229 = vsel %vm2137, %v3228, %v3227
        %v3230 = vrot.slane %v3091, 7
        %v3231 = vsel %vm2119, %v3230, %v3090
        %v3232 = vrot.slane %v3092, 6
        %v3233 = vsel %vm2122, %v3232, %v3231
        %v3234 = vrot.slane %v3093, 5
        %v3235 = vsel %vm2125, %v3234, %v3233
        %v3236 = vrot.slane %v3094, 4
        %v3237 = vsel %vm2128, %v3236, %v3235
        %v3238 = vrot.slane %v3095, 3
        %v3239 = vsel %vm2131, %v3238, %v3237
        %v3240 = vrot.slane %v3096, 2
        %v3241 = vsel %vm2134, %v3240, %v3239
        %v3242 = vrot.slane %v3097, 1
        %v3243 = vsel %vm2137, %v3242, %v3241
        %v3244 = vrot.slane %v3099, 7
        %v3245 = vsel %vm2119, %v3244, %v3098
        %v3246 = vrot.slane %v3100, 6
        %v3247 = vsel %vm2122, %v3246, %v3245
        %v3248 = vrot.slane %v3101, 5
        %v3249 = vsel %vm2125, %v3248, %v3247
        %v3250 = vrot.slane %v3102, 4
        %v3251 = vsel %vm2128, %v3250, %v3249
        %v3252 = vrot.slane %v3103, 3
        %v3253 = vsel %vm2131, %v3252, %v3251
        %v3254 = vrot.slane %v3104, 2
        %v3255 = vsel %vm2134, %v3254, %v3253
        %v3256 = vrot.slane %v3105, 1
        %v3257 = vsel %vm2137, %v3256, %v3255
        %v3258 = vrot.slane %v3107, 7
        %v3259 = vsel %vm2119, %v3258, %v3106
        %v3260 = vrot.slane %v3108, 6
        %v3261 = vsel %vm2122, %v3260, %v3259
        %v3262 = vrot.slane %v3109, 5
        %v3263 = vsel %vm2125, %v3262, %v3261
        %v3264 = vrot.slane %v3110, 4
        %v3265 = vsel %vm2128, %v3264, %v3263
        %v3266 = vrot.slane %v3111, 3
        %v3267 = vsel %vm2131, %v3266, %v3265
        %v3268 = vrot.slane %v3112, 2
        %v3269 = vsel %vm2134, %v3268, %v3267
        %v3270 = vrot.slane %v3113, 1
        %v3271 = vsel %vm2137, %v3270, %v3269
        %v3272 = vrot.slane %v3115, 7
        %v3273 = vsel %vm2119, %v3272, %v3114
        %v3274 = vrot.slane %v3116, 6
        %v3275 = vsel %vm2122, %v3274, %v3273
        %v3276 = vrot.slane %v3117, 5
        %v3277 = vsel %vm2125, %v3276, %v3275
        %v3278 = vrot.slane %v3118, 4
        %v3279 = vsel %vm2128, %v3278, %v3277
        %v3280 = vrot.slane %v3119, 3
        %v3281 = vsel %vm2131, %v3280, %v3279
        %v3282 = vrot.slane %v3120, 2
        %v3283 = vsel %vm2134, %v3282, %v3281
        %v3284 = vrot.slane %v3121, 1
        %v3285 = vsel %vm2137, %v3284, %v3283
        %v3286 = vrot.slane %v3123, 7
        %v3287 = vsel %vm2119, %v3286, %v3122
        %v3288 = vrot.slane %v3124, 6
        %v3289 = vsel %vm2122, %v3288, %v3287
        %v3290 = vrot.slane %v3125, 5
        %v3291 = vsel %vm2125, %v3290, %v3289
        %v3292 = vrot.slane %v3126, 4
        %v3293 = vsel %vm2128, %v3292, %v3291
        %v3294 = vrot.slane %v3127, 3
        %v3295 = vsel %vm2131, %v3294, %v3293
        %v3296 = vrot.slane %v3128, 2
        %v3297 = vsel %vm2134, %v3296, %v3295
        %v3298 = vrot.slane %v3129, 1
        %v3299 = vsel %vm2137, %v3298, %v3297
        %v3300 = vrot.slane %v3131, 7
        %v3301 = vsel %vm2119, %v3300, %v3130
        %v3302 = vrot.slane %v3132, 6
        %v3303 = vsel %vm2122, %v3302, %v3301
        %v3304 = vrot.slane %v3133, 5
        %v3305 = vsel %vm2125, %v3304, %v3303
        %v3306 = vrot.slane %v3134, 4
        %v3307 = vsel %vm2128, %v3306, %v3305
        %v3308 = vrot.slane %v3135, 3
        %v3309 = vsel %vm2131, %v3308, %v3307
        %v3310 = vrot.slane %v3136, 2
        %v3311 = vsel %vm2134, %v3310, %v3309
        %v3312 = vrot.slane %v3137, 1
        %v3313 = vsel %vm2137, %v3312, %v3311
        %3322 = vst.msk [vmem:[#allocation3 + $0x8] sm:$0xff] %vm635, %v3215
        %3323 = vst.msk [vmem:[#allocation3 + $0x20] sm:$0xff] %vm635, %v3229
        %3324 = vst.msk [vmem:[#allocation3 + $0x38] sm:$0xff] %vm635, %v3243
        %3325 = vst.msk [vmem:[#allocation3 + $0x50] sm:$0xff] %vm635, %v3257
        %3326 = vst.msk [vmem:[#allocation3 + $0x68] sm:$0xff] %vm635, %v3271
        %3327 = vst.msk [vmem:[#allocation3 + $0x80] sm:$0xff] %vm635, %v3285
        %3328 = vst.msk [vmem:[#allocation3 + $0x98] sm:$0xff] %vm635, %v3299
        %3329 = vst.msk [vmem:[#allocation3 + $0xb0] sm:$0xff] %vm635, %v3313
        %v3330 = vld [vmem:[%s1860 + $0x1] sm:$0x1]
        %v3331 = vld [vmem:[%s1860 + $0x3] sm:$0x1]
        %v3332 = vld [vmem:[%s1860 + $0x5] sm:$0x1]
        %v3333 = vld [vmem:[%s1860 + $0x7] sm:$0x1]
        %v3334 = vld [vmem:[%s1860 + $0x9] sm:$0x1]
        %v3335 = vld [vmem:[%s1860 + $0xb] sm:$0x1]
        %v3336 = vld [vmem:[%s1860 + $0xd] sm:$0x1]
        %v3337 = vld [vmem:[%s1860 + $0xf] sm:$0x1]
        %v3338 = vld [vmem:[%s1860 + $0x29] sm:$0x1]
        %v3339 = vld [vmem:[%s1860 + $0x2b] sm:$0x1]
        %v3340 = vld [vmem:[%s1860 + $0x2d] sm:$0x1]
        %v3341 = vld [vmem:[%s1860 + $0x2f] sm:$0x1]
        %v3342 = vld [vmem:[%s1860 + $0x31] sm:$0x1]
        %v3343 = vld [vmem:[%s1860 + $0x33] sm:$0x1]
        %v3344 = vld [vmem:[%s1860 + $0x35] sm:$0x1]
        %v3345 = vld [vmem:[%s1860 + $0x37] sm:$0x1]
        %v3346 = vld [vmem:[%s1860 + $0x51] sm:$0x1]
        %v3347 = vld [vmem:[%s1860 + $0x53] sm:$0x1]
        %v3348 = vld [vmem:[%s1860 + $0x55] sm:$0x1]
        %v3349 = vld [vmem:[%s1860 + $0x57] sm:$0x1]
        %v3350 = vld [vmem:[%s1860 + $0x59] sm:$0x1]
        %v3351 = vld [vmem:[%s1860 + $0x5b] sm:$0x1]
        %v3352 = vld [vmem:[%s1860 + $0x5d] sm:$0x1]
        %v3353 = vld [vmem:[%s1860 + $0x5f] sm:$0x1]
        %v3354 = vld [vmem:[%s1860 + $0x79] sm:$0x1]
        %v3355 = vld [vmem:[%s1860 + $0x7b] sm:$0x1]
        %v3356 = vld [vmem:[%s1860 + $0x7d] sm:$0x1]
        %v3357 = vld [vmem:[%s1860 + $0x7f] sm:$0x1]
        %v3358 = vld [vmem:[%s1860 + $0x81] sm:$0x1]
        %v3359 = vld [vmem:[%s1860 + $0x83] sm:$0x1]
        %v3360 = vld [vmem:[%s1860 + $0x85] sm:$0x1]
        %v3361 = vld [vmem:[%s1860 + $0x87] sm:$0x1]
        %v3362 = vld [vmem:[%s1860 + $0xa1] sm:$0x1]
        %v3363 = vld [vmem:[%s1860 + $0xa3] sm:$0x1]
        %v3364 = vld [vmem:[%s1860 + $0xa5] sm:$0x1]
        %v3365 = vld [vmem:[%s1860 + $0xa7] sm:$0x1]
        %v3366 = vld [vmem:[%s1860 + $0xa9] sm:$0x1]
        %v3367 = vld [vmem:[%s1860 + $0xab] sm:$0x1]
        %v3368 = vld [vmem:[%s1860 + $0xad] sm:$0x1]
        %v3369 = vld [vmem:[%s1860 + $0xaf] sm:$0x1]
        %v3370 = vld [vmem:[%s1860 + $0xc9] sm:$0x1]
        %v3371 = vld [vmem:[%s1860 + $0xcb] sm:$0x1]
        %v3372 = vld [vmem:[%s1860 + $0xcd] sm:$0x1]
        %v3373 = vld [vmem:[%s1860 + $0xcf] sm:$0x1]
        %v3374 = vld [vmem:[%s1860 + $0xd1] sm:$0x1]
        %v3375 = vld [vmem:[%s1860 + $0xd3] sm:$0x1]
        %v3376 = vld [vmem:[%s1860 + $0xd5] sm:$0x1]
        %v3377 = vld [vmem:[%s1860 + $0xd7] sm:$0x1]
        %v3378 = vld [vmem:[%s1860 + $0xf1] sm:$0x1]
        %v3379 = vld [vmem:[%s1860 + $0xf3] sm:$0x1]
        %v3380 = vld [vmem:[%s1860 + $0xf5] sm:$0x1]
        %v3381 = vld [vmem:[%s1860 + $0xf7] sm:$0x1]
        %v3382 = vld [vmem:[%s1860 + $0xf9] sm:$0x1]
        %v3383 = vld [vmem:[%s1860 + $0xfb] sm:$0x1]
        %v3384 = vld [vmem:[%s1860 + $0xfd] sm:$0x1]
        %v3385 = vld [vmem:[%s1860 + $0xff] sm:$0x1]
        %v3386 = vld [vmem:[%s1860 + $0x119] sm:$0x1]
        %v3387 = vld [vmem:[%s1860 + $0x11b] sm:$0x1]
        %v3388 = vld [vmem:[%s1860 + $0x11d] sm:$0x1]
        %v3389 = vld [vmem:[%s1860 + $0x11f] sm:$0x1]
        %v3390 = vld [vmem:[%s1860 + $0x121] sm:$0x1]
        %v3391 = vld [vmem:[%s1860 + $0x123] sm:$0x1]
        %v3392 = vld [vmem:[%s1860 + $0x125] sm:$0x1]
        %v3393 = vld [vmem:[%s1860 + $0x127] sm:$0x1]
        %v3458 = vrot.slane %v3331, 7
        %v3459 = vsel %vm2119, %v3458, %v3330
        %v3460 = vrot.slane %v3332, 6
        %v3461 = vsel %vm2122, %v3460, %v3459
        %v3462 = vrot.slane %v3333, 5
        %v3463 = vsel %vm2125, %v3462, %v3461
        %v3464 = vrot.slane %v3334, 4
        %v3465 = vsel %vm2128, %v3464, %v3463
        %v3466 = vrot.slane %v3335, 3
        %v3467 = vsel %vm2131, %v3466, %v3465
        %v3468 = vrot.slane %v3336, 2
        %v3469 = vsel %vm2134, %v3468, %v3467
        %v3470 = vrot.slane %v3337, 1
        %v3471 = vsel %vm2137, %v3470, %v3469
        %v3472 = vrot.slane %v3339, 7
        %v3473 = vsel %vm2119, %v3472, %v3338
        %v3474 = vrot.slane %v3340, 6
        %v3475 = vsel %vm2122, %v3474, %v3473
        %v3476 = vrot.slane %v3341, 5
        %v3477 = vsel %vm2125, %v3476, %v3475
        %v3478 = vrot.slane %v3342, 4
        %v3479 = vsel %vm2128, %v3478, %v3477
        %v3480 = vrot.slane %v3343, 3
        %v3481 = vsel %vm2131, %v3480, %v3479
        %v3482 = vrot.slane %v3344, 2
        %v3483 = vsel %vm2134, %v3482, %v3481
        %v3484 = vrot.slane %v3345, 1
        %v3485 = vsel %vm2137, %v3484, %v3483
        %v3486 = vrot.slane %v3347, 7
        %v3487 = vsel %vm2119, %v3486, %v3346
        %v3488 = vrot.slane %v3348, 6
        %v3489 = vsel %vm2122, %v3488, %v3487
        %v3490 = vrot.slane %v3349, 5
        %v3491 = vsel %vm2125, %v3490, %v3489
        %v3492 = vrot.slane %v3350, 4
        %v3493 = vsel %vm2128, %v3492, %v3491
        %v3494 = vrot.slane %v3351, 3
        %v3495 = vsel %vm2131, %v3494, %v3493
        %v3496 = vrot.slane %v3352, 2
        %v3497 = vsel %vm2134, %v3496, %v3495
        %v3498 = vrot.slane %v3353, 1
        %v3499 = vsel %vm2137, %v3498, %v3497
        %v3500 = vrot.slane %v3355, 7
        %v3501 = vsel %vm2119, %v3500, %v3354
        %v3502 = vrot.slane %v3356, 6
        %v3503 = vsel %vm2122, %v3502, %v3501
        %v3504 = vrot.slane %v3357, 5
        %v3505 = vsel %vm2125, %v3504, %v3503
        %v3506 = vrot.slane %v3358, 4
        %v3507 = vsel %vm2128, %v3506, %v3505
        %v3508 = vrot.slane %v3359, 3
        %v3509 = vsel %vm2131, %v3508, %v3507
        %v3510 = vrot.slane %v3360, 2
        %v3511 = vsel %vm2134, %v3510, %v3509
        %v3512 = vrot.slane %v3361, 1
        %v3513 = vsel %vm2137, %v3512, %v3511
        %v3514 = vrot.slane %v3363, 7
        %v3515 = vsel %vm2119, %v3514, %v3362
        %v3516 = vrot.slane %v3364, 6
        %v3517 = vsel %vm2122, %v3516, %v3515
        %v3518 = vrot.slane %v3365, 5
        %v3519 = vsel %vm2125, %v3518, %v3517
        %v3520 = vrot.slane %v3366, 4
        %v3521 = vsel %vm2128, %v3520, %v3519
        %v3522 = vrot.slane %v3367, 3
        %v3523 = vsel %vm2131, %v3522, %v3521
        %v3524 = vrot.slane %v3368, 2
        %v3525 = vsel %vm2134, %v3524, %v3523
        %v3526 = vrot.slane %v3369, 1
        %v3527 = vsel %vm2137, %v3526, %v3525
        %v3528 = vrot.slane %v3371, 7
        %v3529 = vsel %vm2119, %v3528, %v3370
        %v3530 = vrot.slane %v3372, 6
        %v3531 = vsel %vm2122, %v3530, %v3529
        %v3532 = vrot.slane %v3373, 5
        %v3533 = vsel %vm2125, %v3532, %v3531
        %v3534 = vrot.slane %v3374, 4
        %v3535 = vsel %vm2128, %v3534, %v3533
        %v3536 = vrot.slane %v3375, 3
        %v3537 = vsel %vm2131, %v3536, %v3535
        %v3538 = vrot.slane %v3376, 2
        %v3539 = vsel %vm2134, %v3538, %v3537
        %v3540 = vrot.slane %v3377, 1
        %v3541 = vsel %vm2137, %v3540, %v3539
        %v3542 = vrot.slane %v3379, 7
        %v3543 = vsel %vm2119, %v3542, %v3378
        %v3544 = vrot.slane %v3380, 6
        %v3545 = vsel %vm2122, %v3544, %v3543
        %v3546 = vrot.slane %v3381, 5
        %v3547 = vsel %vm2125, %v3546, %v3545
        %v3548 = vrot.slane %v3382, 4
        %v3549 = vsel %vm2128, %v3548, %v3547
        %v3550 = vrot.slane %v3383, 3
        %v3551 = vsel %vm2131, %v3550, %v3549
        %v3552 = vrot.slane %v3384, 2
        %v3553 = vsel %vm2134, %v3552, %v3551
        %v3554 = vrot.slane %v3385, 1
        %v3555 = vsel %vm2137, %v3554, %v3553
        %v3556 = vrot.slane %v3387, 7
        %v3557 = vsel %vm2119, %v3556, %v3386
        %v3558 = vrot.slane %v3388, 6
        %v3559 = vsel %vm2122, %v3558, %v3557
        %v3560 = vrot.slane %v3389, 5
        %v3561 = vsel %vm2125, %v3560, %v3559
        %v3562 = vrot.slane %v3390, 4
        %v3563 = vsel %vm2128, %v3562, %v3561
        %v3564 = vrot.slane %v3391, 3
        %v3565 = vsel %vm2131, %v3564, %v3563
        %v3566 = vrot.slane %v3392, 2
        %v3567 = vsel %vm2134, %v3566, %v3565
        %v3568 = vrot.slane %v3393, 1
        %v3569 = vsel %vm2137, %v3568, %v3567
        %3570 = vrot.lane.b32.xlu0 %v3471, 32
        %v3571 = vpop.permute.xlu0 %3570
        %3572 = vrot.lane.b32.xlu0 %v3485, 32
        %v3573 = vpop.permute.xlu0 %3572
        %3574 = vrot.lane.b32.xlu0 %v3499, 32
        %v3575 = vpop.permute.xlu0 %3574
        %3576 = vrot.lane.b32.xlu0 %v3513, 32
        %v3577 = vpop.permute.xlu0 %3576
        %3578 = vrot.lane.b32.xlu0 %v3527, 32
        %v3579 = vpop.permute.xlu0 %3578
        %3580 = vrot.lane.b32.xlu0 %v3541, 32
        %v3581 = vpop.permute.xlu0 %3580
        %3582 = vrot.lane.b32.xlu0 %v3555, 32
        %v3583 = vpop.permute.xlu0 %3582
        %3584 = vrot.lane.b32.xlu0 %v3569, 32
        %v3585 = vpop.permute.xlu0 %3584
        %3594 = vst.msk [vmem:[#allocation3 + $0x8] sm:$0xff] %vm2518, %v3571
        %3595 = vst.msk [vmem:[#allocation3 + $0x20] sm:$0xff] %vm2518, %v3573
        %3596 = vst.msk [vmem:[#allocation3 + $0x38] sm:$0xff] %vm2518, %v3575
        %3597 = vst.msk [vmem:[#allocation3 + $0x50] sm:$0xff] %vm2518, %v3577
        %3598 = vst.msk [vmem:[#allocation3 + $0x68] sm:$0xff] %vm2518, %v3579
        %3599 = vst.msk [vmem:[#allocation3 + $0x80] sm:$0xff] %vm2518, %v3581
        %3600 = vst.msk [vmem:[#allocation3 + $0x98] sm:$0xff] %vm2518, %v3583
        %3601 = vst.msk [vmem:[#allocation3 + $0xb0] sm:$0xff] %vm2518, %v3585
        %s3602 = scalar_lea.vmem [#allocation2], 60
        %v3603 = vld [vmem:[%s3602 + $0x1] sm:$0x1]
        %v3604 = vld [vmem:[%s3602 + $0x3] sm:$0x1]
        %v3605 = vld [vmem:[%s3602 + $0x5] sm:$0x1]
        %v3606 = vld [vmem:[%s3602 + $0x7] sm:$0x1]
        %v3607 = vld [vmem:[%s3602 + $0x9] sm:$0x1]
        %v3608 = vld [vmem:[%s3602 + $0xb] sm:$0x1]
        %v3609 = vld [vmem:[%s3602 + $0xd] sm:$0x1]
        %v3610 = vld [vmem:[%s3602 + $0xf] sm:$0x1]
        %v3611 = vld [vmem:[%s3602 + $0x29] sm:$0x1]
        %v3612 = vld [vmem:[%s3602 + $0x2b] sm:$0x1]
        %v3613 = vld [vmem:[%s3602 + $0x2d] sm:$0x1]
        %v3614 = vld [vmem:[%s3602 + $0x2f] sm:$0x1]
        %v3615 = vld [vmem:[%s3602 + $0x31] sm:$0x1]
        %v3616 = vld [vmem:[%s3602 + $0x33] sm:$0x1]
        %v3617 = vld [vmem:[%s3602 + $0x35] sm:$0x1]
        %v3618 = vld [vmem:[%s3602 + $0x37] sm:$0x1]
        %v3619 = vld [vmem:[%s3602 + $0x51] sm:$0x1]
        %v3620 = vld [vmem:[%s3602 + $0x53] sm:$0x1]
        %v3621 = vld [vmem:[%s3602 + $0x55] sm:$0x1]
        %v3622 = vld [vmem:[%s3602 + $0x57] sm:$0x1]
        %v3623 = vld [vmem:[%s3602 + $0x59] sm:$0x1]
        %v3624 = vld [vmem:[%s3602 + $0x5b] sm:$0x1]
        %v3625 = vld [vmem:[%s3602 + $0x5d] sm:$0x1]
        %v3626 = vld [vmem:[%s3602 + $0x5f] sm:$0x1]
        %v3627 = vld [vmem:[%s3602 + $0x79] sm:$0x1]
        %v3628 = vld [vmem:[%s3602 + $0x7b] sm:$0x1]
        %v3629 = vld [vmem:[%s3602 + $0x7d] sm:$0x1]
        %v3630 = vld [vmem:[%s3602 + $0x7f] sm:$0x1]
        %v3631 = vld [vmem:[%s3602 + $0x81] sm:$0x1]
        %v3632 = vld [vmem:[%s3602 + $0x83] sm:$0x1]
        %v3633 = vld [vmem:[%s3602 + $0x85] sm:$0x1]
        %v3634 = vld [vmem:[%s3602 + $0x87] sm:$0x1]
        %v3635 = vld [vmem:[%s3602 + $0xa1] sm:$0x1]
        %v3636 = vld [vmem:[%s3602 + $0xa3] sm:$0x1]
        %v3637 = vld [vmem:[%s3602 + $0xa5] sm:$0x1]
        %v3638 = vld [vmem:[%s3602 + $0xa7] sm:$0x1]
        %v3639 = vld [vmem:[%s3602 + $0xa9] sm:$0x1]
        %v3640 = vld [vmem:[%s3602 + $0xab] sm:$0x1]
        %v3641 = vld [vmem:[%s3602 + $0xad] sm:$0x1]
        %v3642 = vld [vmem:[%s3602 + $0xaf] sm:$0x1]
        %v3643 = vld [vmem:[%s3602 + $0xc9] sm:$0x1]
        %v3644 = vld [vmem:[%s3602 + $0xcb] sm:$0x1]
        %v3645 = vld [vmem:[%s3602 + $0xcd] sm:$0x1]
        %v3646 = vld [vmem:[%s3602 + $0xcf] sm:$0x1]
        %v3647 = vld [vmem:[%s3602 + $0xd1] sm:$0x1]
        %v3648 = vld [vmem:[%s3602 + $0xd3] sm:$0x1]
        %v3649 = vld [vmem:[%s3602 + $0xd5] sm:$0x1]
        %v3650 = vld [vmem:[%s3602 + $0xd7] sm:$0x1]
        %v3651 = vld [vmem:[%s3602 + $0xf1] sm:$0x1]
        %v3652 = vld [vmem:[%s3602 + $0xf3] sm:$0x1]
        %v3653 = vld [vmem:[%s3602 + $0xf5] sm:$0x1]
        %v3654 = vld [vmem:[%s3602 + $0xf7] sm:$0x1]
        %v3655 = vld [vmem:[%s3602 + $0xf9] sm:$0x1]
        %v3656 = vld [vmem:[%s3602 + $0xfb] sm:$0x1]
        %v3657 = vld [vmem:[%s3602 + $0xfd] sm:$0x1]
        %v3658 = vld [vmem:[%s3602 + $0xff] sm:$0x1]
        %v3659 = vld [vmem:[%s3602 + $0x119] sm:$0x1]
        %v3660 = vld [vmem:[%s3602 + $0x11b] sm:$0x1]
        %v3661 = vld [vmem:[%s3602 + $0x11d] sm:$0x1]
        %v3662 = vld [vmem:[%s3602 + $0x11f] sm:$0x1]
        %v3663 = vld [vmem:[%s3602 + $0x121] sm:$0x1]
        %v3664 = vld [vmem:[%s3602 + $0x123] sm:$0x1]
        %v3665 = vld [vmem:[%s3602 + $0x125] sm:$0x1]
        %v3666 = vld [vmem:[%s3602 + $0x127] sm:$0x1]
        %v3731 = vrot.slane %v3604, 7
        %v3732 = vsel %vm2119, %v3731, %v3603
        %v3733 = vrot.slane %v3605, 6
        %v3734 = vsel %vm2122, %v3733, %v3732
        %v3735 = vrot.slane %v3606, 5
        %v3736 = vsel %vm2125, %v3735, %v3734
        %v3737 = vrot.slane %v3607, 4
        %v3738 = vsel %vm2128, %v3737, %v3736
        %v3739 = vrot.slane %v3608, 3
        %v3740 = vsel %vm2131, %v3739, %v3738
        %v3741 = vrot.slane %v3609, 2
        %v3742 = vsel %vm2134, %v3741, %v3740
        %v3743 = vrot.slane %v3610, 1
        %v3744 = vsel %vm2137, %v3743, %v3742
        %v3745 = vrot.slane %v3612, 7
        %v3746 = vsel %vm2119, %v3745, %v3611
        %v3747 = vrot.slane %v3613, 6
        %v3748 = vsel %vm2122, %v3747, %v3746
        %v3749 = vrot.slane %v3614, 5
        %v3750 = vsel %vm2125, %v3749, %v3748
        %v3751 = vrot.slane %v3615, 4
        %v3752 = vsel %vm2128, %v3751, %v3750
        %v3753 = vrot.slane %v3616, 3
        %v3754 = vsel %vm2131, %v3753, %v3752
        %v3755 = vrot.slane %v3617, 2
        %v3756 = vsel %vm2134, %v3755, %v3754
        %v3757 = vrot.slane %v3618, 1
        %v3758 = vsel %vm2137, %v3757, %v3756
        %v3759 = vrot.slane %v3620, 7
        %v3760 = vsel %vm2119, %v3759, %v3619
        %v3761 = vrot.slane %v3621, 6
        %v3762 = vsel %vm2122, %v3761, %v3760
        %v3763 = vrot.slane %v3622, 5
        %v3764 = vsel %vm2125, %v3763, %v3762
        %v3765 = vrot.slane %v3623, 4
        %v3766 = vsel %vm2128, %v3765, %v3764
        %v3767 = vrot.slane %v3624, 3
        %v3768 = vsel %vm2131, %v3767, %v3766
        %v3769 = vrot.slane %v3625, 2
        %v3770 = vsel %vm2134, %v3769, %v3768
        %v3771 = vrot.slane %v3626, 1
        %v3772 = vsel %vm2137, %v3771, %v3770
        %v3773 = vrot.slane %v3628, 7
        %v3774 = vsel %vm2119, %v3773, %v3627
        %v3775 = vrot.slane %v3629, 6
        %v3776 = vsel %vm2122, %v3775, %v3774
        %v3777 = vrot.slane %v3630, 5
        %v3778 = vsel %vm2125, %v3777, %v3776
        %v3779 = vrot.slane %v3631, 4
        %v3780 = vsel %vm2128, %v3779, %v3778
        %v3781 = vrot.slane %v3632, 3
        %v3782 = vsel %vm2131, %v3781, %v3780
        %v3783 = vrot.slane %v3633, 2
        %v3784 = vsel %vm2134, %v3783, %v3782
        %v3785 = vrot.slane %v3634, 1
        %v3786 = vsel %vm2137, %v3785, %v3784
        %v3787 = vrot.slane %v3636, 7
        %v3788 = vsel %vm2119, %v3787, %v3635
        %v3789 = vrot.slane %v3637, 6
        %v3790 = vsel %vm2122, %v3789, %v3788
        %v3791 = vrot.slane %v3638, 5
        %v3792 = vsel %vm2125, %v3791, %v3790
        %v3793 = vrot.slane %v3639, 4
        %v3794 = vsel %vm2128, %v3793, %v3792
        %v3795 = vrot.slane %v3640, 3
        %v3796 = vsel %vm2131, %v3795, %v3794
        %v3797 = vrot.slane %v3641, 2
        %v3798 = vsel %vm2134, %v3797, %v3796
        %v3799 = vrot.slane %v3642, 1
        %v3800 = vsel %vm2137, %v3799, %v3798
        %v3801 = vrot.slane %v3644, 7
        %v3802 = vsel %vm2119, %v3801, %v3643
        %v3803 = vrot.slane %v3645, 6
        %v3804 = vsel %vm2122, %v3803, %v3802
        %v3805 = vrot.slane %v3646, 5
        %v3806 = vsel %vm2125, %v3805, %v3804
        %v3807 = vrot.slane %v3647, 4
        %v3808 = vsel %vm2128, %v3807, %v3806
        %v3809 = vrot.slane %v3648, 3
        %v3810 = vsel %vm2131, %v3809, %v3808
        %v3811 = vrot.slane %v3649, 2
        %v3812 = vsel %vm2134, %v3811, %v3810
        %v3813 = vrot.slane %v3650, 1
        %v3814 = vsel %vm2137, %v3813, %v3812
        %v3815 = vrot.slane %v3652, 7
        %v3816 = vsel %vm2119, %v3815, %v3651
        %v3817 = vrot.slane %v3653, 6
        %v3818 = vsel %vm2122, %v3817, %v3816
        %v3819 = vrot.slane %v3654, 5
        %v3820 = vsel %vm2125, %v3819, %v3818
        %v3821 = vrot.slane %v3655, 4
        %v3822 = vsel %vm2128, %v3821, %v3820
        %v3823 = vrot.slane %v3656, 3
        %v3824 = vsel %vm2131, %v3823, %v3822
        %v3825 = vrot.slane %v3657, 2
        %v3826 = vsel %vm2134, %v3825, %v3824
        %v3827 = vrot.slane %v3658, 1
        %v3828 = vsel %vm2137, %v3827, %v3826
        %v3829 = vrot.slane %v3660, 7
        %v3830 = vsel %vm2119, %v3829, %v3659
        %v3831 = vrot.slane %v3661, 6
        %v3832 = vsel %vm2122, %v3831, %v3830
        %v3833 = vrot.slane %v3662, 5
        %v3834 = vsel %vm2125, %v3833, %v3832
        %v3835 = vrot.slane %v3663, 4
        %v3836 = vsel %vm2128, %v3835, %v3834
        %v3837 = vrot.slane %v3664, 3
        %v3838 = vsel %vm2131, %v3837, %v3836
        %v3839 = vrot.slane %v3665, 2
        %v3840 = vsel %vm2134, %v3839, %v3838
        %v3841 = vrot.slane %v3666, 1
        %v3842 = vsel %vm2137, %v3841, %v3840
        %3843 = vrot.lane.b32.xlu0 %v3744, 64
        %v3844 = vpop.permute.xlu0 %3843
        %3845 = vrot.lane.b32.xlu0 %v3758, 64
        %v3846 = vpop.permute.xlu0 %3845
        %3847 = vrot.lane.b32.xlu0 %v3772, 64
        %v3848 = vpop.permute.xlu0 %3847
        %3849 = vrot.lane.b32.xlu0 %v3786, 64
        %v3850 = vpop.permute.xlu0 %3849
        %3851 = vrot.lane.b32.xlu0 %v3800, 64
        %v3852 = vpop.permute.xlu0 %3851
        %3853 = vrot.lane.b32.xlu0 %v3814, 64
        %v3854 = vpop.permute.xlu0 %3853
        %3855 = vrot.lane.b32.xlu0 %v3828, 64
        %v3856 = vpop.permute.xlu0 %3855
        %3857 = vrot.lane.b32.xlu0 %v3842, 64
        %v3858 = vpop.permute.xlu0 %3857
        %3867 = vst.msk [vmem:[#allocation3 + $0x8] sm:$0xff] %vm2791, %v3844
        %3868 = vst.msk [vmem:[#allocation3 + $0x20] sm:$0xff] %vm2791, %v3846
        %3869 = vst.msk [vmem:[#allocation3 + $0x38] sm:$0xff] %vm2791, %v3848
        %3870 = vst.msk [vmem:[#allocation3 + $0x50] sm:$0xff] %vm2791, %v3850
        %3871 = vst.msk [vmem:[#allocation3 + $0x68] sm:$0xff] %vm2791, %v3852
        %3872 = vst.msk [vmem:[#allocation3 + $0x80] sm:$0xff] %vm2791, %v3854
        %3873 = vst.msk [vmem:[#allocation3 + $0x98] sm:$0xff] %vm2791, %v3856
        %3874 = vst.msk [vmem:[#allocation3 + $0xb0] sm:$0xff] %vm2791, %v3858
        %s3875 = scalar_lea.vmem [#allocation2], 62
        %v3876 = vld [vmem:[%s3875] sm:$0x1]
        %v3877 = vld [vmem:[%s3875 + $0x2] sm:$0x1]
        %v3878 = vld [vmem:[%s3875 + $0x4] sm:$0x1]
        %v3879 = vld [vmem:[%s3875 + $0x6] sm:$0x1]
        %v3880 = vld [vmem:[%s3875 + $0x8] sm:$0x1]
        %v3881 = vld [vmem:[%s3875 + $0xa] sm:$0x1]
        %v3882 = vld [vmem:[%s3875 + $0xc] sm:$0x1]
        %v3883 = vld [vmem:[%s3875 + $0xe] sm:$0x1]
        %v3884 = vld [vmem:[%s3875 + $0x28] sm:$0x1]
        %v3885 = vld [vmem:[%s3875 + $0x2a] sm:$0x1]
        %v3886 = vld [vmem:[%s3875 + $0x2c] sm:$0x1]
        %v3887 = vld [vmem:[%s3875 + $0x2e] sm:$0x1]
        %v3888 = vld [vmem:[%s3875 + $0x30] sm:$0x1]
        %v3889 = vld [vmem:[%s3875 + $0x32] sm:$0x1]
        %v3890 = vld [vmem:[%s3875 + $0x34] sm:$0x1]
        %v3891 = vld [vmem:[%s3875 + $0x36] sm:$0x1]
        %v3892 = vld [vmem:[%s3875 + $0x50] sm:$0x1]
        %v3893 = vld [vmem:[%s3875 + $0x52] sm:$0x1]
        %v3894 = vld [vmem:[%s3875 + $0x54] sm:$0x1]
        %v3895 = vld [vmem:[%s3875 + $0x56] sm:$0x1]
        %v3896 = vld [vmem:[%s3875 + $0x58] sm:$0x1]
        %v3897 = vld [vmem:[%s3875 + $0x5a] sm:$0x1]
        %v3898 = vld [vmem:[%s3875 + $0x5c] sm:$0x1]
        %v3899 = vld [vmem:[%s3875 + $0x5e] sm:$0x1]
        %v3900 = vld [vmem:[%s3875 + $0x78] sm:$0x1]
        %v3901 = vld [vmem:[%s3875 + $0x7a] sm:$0x1]
        %v3902 = vld [vmem:[%s3875 + $0x7c] sm:$0x1]
        %v3903 = vld [vmem:[%s3875 + $0x7e] sm:$0x1]
        %v3904 = vld [vmem:[%s3875 + $0x80] sm:$0x1]
        %v3905 = vld [vmem:[%s3875 + $0x82] sm:$0x1]
        %v3906 = vld [vmem:[%s3875 + $0x84] sm:$0x1]
        %v3907 = vld [vmem:[%s3875 + $0x86] sm:$0x1]
        %v3908 = vld [vmem:[%s3875 + $0xa0] sm:$0x1]
        %v3909 = vld [vmem:[%s3875 + $0xa2] sm:$0x1]
        %v3910 = vld [vmem:[%s3875 + $0xa4] sm:$0x1]
        %v3911 = vld [vmem:[%s3875 + $0xa6] sm:$0x1]
        %v3912 = vld [vmem:[%s3875 + $0xa8] sm:$0x1]
        %v3913 = vld [vmem:[%s3875 + $0xaa] sm:$0x1]
        %v3914 = vld [vmem:[%s3875 + $0xac] sm:$0x1]
        %v3915 = vld [vmem:[%s3875 + $0xae] sm:$0x1]
        %v3916 = vld [vmem:[%s3875 + $0xc8] sm:$0x1]
        %v3917 = vld [vmem:[%s3875 + $0xca] sm:$0x1]
        %v3918 = vld [vmem:[%s3875 + $0xcc] sm:$0x1]
        %v3919 = vld [vmem:[%s3875 + $0xce] sm:$0x1]
        %v3920 = vld [vmem:[%s3875 + $0xd0] sm:$0x1]
        %v3921 = vld [vmem:[%s3875 + $0xd2] sm:$0x1]
        %v3922 = vld [vmem:[%s3875 + $0xd4] sm:$0x1]
        %v3923 = vld [vmem:[%s3875 + $0xd6] sm:$0x1]
        %v3924 = vld [vmem:[%s3875 + $0xf0] sm:$0x1]
        %v3925 = vld [vmem:[%s3875 + $0xf2] sm:$0x1]
        %v3926 = vld [vmem:[%s3875 + $0xf4] sm:$0x1]
        %v3927 = vld [vmem:[%s3875 + $0xf6] sm:$0x1]
        %v3928 = vld [vmem:[%s3875 + $0xf8] sm:$0x1]
        %v3929 = vld [vmem:[%s3875 + $0xfa] sm:$0x1]
        %v3930 = vld [vmem:[%s3875 + $0xfc] sm:$0x1]
        %v3931 = vld [vmem:[%s3875 + $0xfe] sm:$0x1]
        %v3932 = vld [vmem:[%s3875 + $0x118] sm:$0x1]
        %v3933 = vld [vmem:[%s3875 + $0x11a] sm:$0x1]
        %v3934 = vld [vmem:[%s3875 + $0x11c] sm:$0x1]
        %v3935 = vld [vmem:[%s3875 + $0x11e] sm:$0x1]
        %v3936 = vld [vmem:[%s3875 + $0x120] sm:$0x1]
        %v3937 = vld [vmem:[%s3875 + $0x122] sm:$0x1]
        %v3938 = vld [vmem:[%s3875 + $0x124] sm:$0x1]
        %v3939 = vld [vmem:[%s3875 + $0x126] sm:$0x1]
        %v4004 = vrot.slane %v3877, 7
        %v4005 = vsel %vm2119, %v4004, %v3876
        %v4006 = vrot.slane %v3878, 6
        %v4007 = vsel %vm2122, %v4006, %v4005
        %v4008 = vrot.slane %v3879, 5
        %v4009 = vsel %vm2125, %v4008, %v4007
        %v4010 = vrot.slane %v3880, 4
        %v4011 = vsel %vm2128, %v4010, %v4009
        %v4012 = vrot.slane %v3881, 3
        %v4013 = vsel %vm2131, %v4012, %v4011
        %v4014 = vrot.slane %v3882, 2
        %v4015 = vsel %vm2134, %v4014, %v4013
        %v4016 = vrot.slane %v3883, 1
        %v4017 = vsel %vm2137, %v4016, %v4015
        %v4018 = vrot.slane %v3885, 7
        %v4019 = vsel %vm2119, %v4018, %v3884
        %v4020 = vrot.slane %v3886, 6
        %v4021 = vsel %vm2122, %v4020, %v4019
        %v4022 = vrot.slane %v3887, 5
        %v4023 = vsel %vm2125, %v4022, %v4021
        %v4024 = vrot.slane %v3888, 4
        %v4025 = vsel %vm2128, %v4024, %v4023
        %v4026 = vrot.slane %v3889, 3
        %v4027 = vsel %vm2131, %v4026, %v4025
        %v4028 = vrot.slane %v3890, 2
        %v4029 = vsel %vm2134, %v4028, %v4027
        %v4030 = vrot.slane %v3891, 1
        %v4031 = vsel %vm2137, %v4030, %v4029
        %v4032 = vrot.slane %v3893, 7
        %v4033 = vsel %vm2119, %v4032, %v3892
        %v4034 = vrot.slane %v3894, 6
        %v4035 = vsel %vm2122, %v4034, %v4033
        %v4036 = vrot.slane %v3895, 5
        %v4037 = vsel %vm2125, %v4036, %v4035
        %v4038 = vrot.slane %v3896, 4
        %v4039 = vsel %vm2128, %v4038, %v4037
        %v4040 = vrot.slane %v3897, 3
        %v4041 = vsel %vm2131, %v4040, %v4039
        %v4042 = vrot.slane %v3898, 2
        %v4043 = vsel %vm2134, %v4042, %v4041
        %v4044 = vrot.slane %v3899, 1
        %v4045 = vsel %vm2137, %v4044, %v4043
        %v4046 = vrot.slane %v3901, 7
        %v4047 = vsel %vm2119, %v4046, %v3900
        %v4048 = vrot.slane %v3902, 6
        %v4049 = vsel %vm2122, %v4048, %v4047
        %v4050 = vrot.slane %v3903, 5
        %v4051 = vsel %vm2125, %v4050, %v4049
        %v4052 = vrot.slane %v3904, 4
        %v4053 = vsel %vm2128, %v4052, %v4051
        %v4054 = vrot.slane %v3905, 3
        %v4055 = vsel %vm2131, %v4054, %v4053
        %v4056 = vrot.slane %v3906, 2
        %v4057 = vsel %vm2134, %v4056, %v4055
        %v4058 = vrot.slane %v3907, 1
        %v4059 = vsel %vm2137, %v4058, %v4057
        %v4060 = vrot.slane %v3909, 7
        %v4061 = vsel %vm2119, %v4060, %v3908
        %v4062 = vrot.slane %v3910, 6
        %v4063 = vsel %vm2122, %v4062, %v4061
        %v4064 = vrot.slane %v3911, 5
        %v4065 = vsel %vm2125, %v4064, %v4063
        %v4066 = vrot.slane %v3912, 4
        %v4067 = vsel %vm2128, %v4066, %v4065
        %v4068 = vrot.slane %v3913, 3
        %v4069 = vsel %vm2131, %v4068, %v4067
        %v4070 = vrot.slane %v3914, 2
        %v4071 = vsel %vm2134, %v4070, %v4069
        %v4072 = vrot.slane %v3915, 1
        %v4073 = vsel %vm2137, %v4072, %v4071
        %v4074 = vrot.slane %v3917, 7
        %v4075 = vsel %vm2119, %v4074, %v3916
        %v4076 = vrot.slane %v3918, 6
        %v4077 = vsel %vm2122, %v4076, %v4075
        %v4078 = vrot.slane %v3919, 5
        %v4079 = vsel %vm2125, %v4078, %v4077
        %v4080 = vrot.slane %v3920, 4
        %v4081 = vsel %vm2128, %v4080, %v4079
        %v4082 = vrot.slane %v3921, 3
        %v4083 = vsel %vm2131, %v4082, %v4081
        %v4084 = vrot.slane %v3922, 2
        %v4085 = vsel %vm2134, %v4084, %v4083
        %v4086 = vrot.slane %v3923, 1
        %v4087 = vsel %vm2137, %v4086, %v4085
        %v4088 = vrot.slane %v3925, 7
        %v4089 = vsel %vm2119, %v4088, %v3924
        %v4090 = vrot.slane %v3926, 6
        %v4091 = vsel %vm2122, %v4090, %v4089
        %v4092 = vrot.slane %v3927, 5
        %v4093 = vsel %vm2125, %v4092, %v4091
        %v4094 = vrot.slane %v3928, 4
        %v4095 = vsel %vm2128, %v4094, %v4093
        %v4096 = vrot.slane %v3929, 3
        %v4097 = vsel %vm2131, %v4096, %v4095
        %v4098 = vrot.slane %v3930, 2
        %v4099 = vsel %vm2134, %v4098, %v4097
        %v4100 = vrot.slane %v3931, 1
        %v4101 = vsel %vm2137, %v4100, %v4099
        %v4102 = vrot.slane %v3933, 7
        %v4103 = vsel %vm2119, %v4102, %v3932
        %v4104 = vrot.slane %v3934, 6
        %v4105 = vsel %vm2122, %v4104, %v4103
        %v4106 = vrot.slane %v3935, 5
        %v4107 = vsel %vm2125, %v4106, %v4105
        %v4108 = vrot.slane %v3936, 4
        %v4109 = vsel %vm2128, %v4108, %v4107
        %v4110 = vrot.slane %v3937, 3
        %v4111 = vsel %vm2131, %v4110, %v4109
        %v4112 = vrot.slane %v3938, 2
        %v4113 = vsel %vm2134, %v4112, %v4111
        %v4114 = vrot.slane %v3939, 1
        %v4115 = vsel %vm2137, %v4114, %v4113
        %4116 = vrot.lane.b32.xlu0 %v4017, 96
        %v4117 = vpop.permute.xlu0 %4116
        %4118 = vrot.lane.b32.xlu0 %v4031, 96
        %v4119 = vpop.permute.xlu0 %4118
        %4120 = vrot.lane.b32.xlu0 %v4045, 96
        %v4121 = vpop.permute.xlu0 %4120
        %4122 = vrot.lane.b32.xlu0 %v4059, 96
        %v4123 = vpop.permute.xlu0 %4122
        %4124 = vrot.lane.b32.xlu0 %v4073, 96
        %v4125 = vpop.permute.xlu0 %4124
        %4126 = vrot.lane.b32.xlu0 %v4087, 96
        %v4127 = vpop.permute.xlu0 %4126
        %4128 = vrot.lane.b32.xlu0 %v4101, 96
        %v4129 = vpop.permute.xlu0 %4128
        %4130 = vrot.lane.b32.xlu0 %v4115, 96
        %v4131 = vpop.permute.xlu0 %4130
        %4140 = vst.msk [vmem:[#allocation3 + $0x8] sm:$0xff] %vm3065, %v4117
        %4141 = vst.msk [vmem:[#allocation3 + $0x20] sm:$0xff] %vm3065, %v4119
        %4142 = vst.msk [vmem:[#allocation3 + $0x38] sm:$0xff] %vm3065, %v4121
        %4143 = vst.msk [vmem:[#allocation3 + $0x50] sm:$0xff] %vm3065, %v4123
        %4144 = vst.msk [vmem:[#allocation3 + $0x68] sm:$0xff] %vm3065, %v4125
        %4145 = vst.msk [vmem:[#allocation3 + $0x80] sm:$0xff] %vm3065, %v4127
        %4146 = vst.msk [vmem:[#allocation3 + $0x98] sm:$0xff] %vm3065, %v4129
        %4147 = vst.msk [vmem:[#allocation3 + $0xb0] sm:$0xff] %vm3065, %v4131
        %v4148 = vld [vmem:[%s3875 + $0x1] sm:$0x1]
        %v4149 = vld [vmem:[%s3875 + $0x3] sm:$0x1]
        %v4150 = vld [vmem:[%s3875 + $0x5] sm:$0x1]
        %v4151 = vld [vmem:[%s3875 + $0x7] sm:$0x1]
        %v4152 = vld [vmem:[%s3875 + $0x9] sm:$0x1]
        %v4153 = vld [vmem:[%s3875 + $0xb] sm:$0x1]
        %v4154 = vld [vmem:[%s3875 + $0xd] sm:$0x1]
        %v4155 = vld [vmem:[%s3875 + $0xf] sm:$0x1]
        %v4156 = vld [vmem:[%s3875 + $0x29] sm:$0x1]
        %v4157 = vld [vmem:[%s3875 + $0x2b] sm:$0x1]
        %v4158 = vld [vmem:[%s3875 + $0x2d] sm:$0x1]
        %v4159 = vld [vmem:[%s3875 + $0x2f] sm:$0x1]
        %v4160 = vld [vmem:[%s3875 + $0x31] sm:$0x1]
        %v4161 = vld [vmem:[%s3875 + $0x33] sm:$0x1]
        %v4162 = vld [vmem:[%s3875 + $0x35] sm:$0x1]
        %v4163 = vld [vmem:[%s3875 + $0x37] sm:$0x1]
        %v4164 = vld [vmem:[%s3875 + $0x51] sm:$0x1]
        %v4165 = vld [vmem:[%s3875 + $0x53] sm:$0x1]
        %v4166 = vld [vmem:[%s3875 + $0x55] sm:$0x1]
        %v4167 = vld [vmem:[%s3875 + $0x57] sm:$0x1]
        %v4168 = vld [vmem:[%s3875 + $0x59] sm:$0x1]
        %v4169 = vld [vmem:[%s3875 + $0x5b] sm:$0x1]
        %v4170 = vld [vmem:[%s3875 + $0x5d] sm:$0x1]
        %v4171 = vld [vmem:[%s3875 + $0x5f] sm:$0x1]
        %v4172 = vld [vmem:[%s3875 + $0x79] sm:$0x1]
        %v4173 = vld [vmem:[%s3875 + $0x7b] sm:$0x1]
        %v4174 = vld [vmem:[%s3875 + $0x7d] sm:$0x1]
        %v4175 = vld [vmem:[%s3875 + $0x7f] sm:$0x1]
        %v4176 = vld [vmem:[%s3875 + $0x81] sm:$0x1]
        %v4177 = vld [vmem:[%s3875 + $0x83] sm:$0x1]
        %v4178 = vld [vmem:[%s3875 + $0x85] sm:$0x1]
        %v4179 = vld [vmem:[%s3875 + $0x87] sm:$0x1]
        %v4180 = vld [vmem:[%s3875 + $0xa1] sm:$0x1]
        %v4181 = vld [vmem:[%s3875 + $0xa3] sm:$0x1]
        %v4182 = vld [vmem:[%s3875 + $0xa5] sm:$0x1]
        %v4183 = vld [vmem:[%s3875 + $0xa7] sm:$0x1]
        %v4184 = vld [vmem:[%s3875 + $0xa9] sm:$0x1]
        %v4185 = vld [vmem:[%s3875 + $0xab] sm:$0x1]
        %v4186 = vld [vmem:[%s3875 + $0xad] sm:$0x1]
        %v4187 = vld [vmem:[%s3875 + $0xaf] sm:$0x1]
        %v4188 = vld [vmem:[%s3875 + $0xc9] sm:$0x1]
        %v4189 = vld [vmem:[%s3875 + $0xcb] sm:$0x1]
        %v4190 = vld [vmem:[%s3875 + $0xcd] sm:$0x1]
        %v4191 = vld [vmem:[%s3875 + $0xcf] sm:$0x1]
        %v4192 = vld [vmem:[%s3875 + $0xd1] sm:$0x1]
        %v4193 = vld [vmem:[%s3875 + $0xd3] sm:$0x1]
        %v4194 = vld [vmem:[%s3875 + $0xd5] sm:$0x1]
        %v4195 = vld [vmem:[%s3875 + $0xd7] sm:$0x1]
        %v4196 = vld [vmem:[%s3875 + $0xf1] sm:$0x1]
        %v4197 = vld [vmem:[%s3875 + $0xf3] sm:$0x1]
        %v4198 = vld [vmem:[%s3875 + $0xf5] sm:$0x1]
        %v4199 = vld [vmem:[%s3875 + $0xf7] sm:$0x1]
        %v4200 = vld [vmem:[%s3875 + $0xf9] sm:$0x1]
        %v4201 = vld [vmem:[%s3875 + $0xfb] sm:$0x1]
        %v4202 = vld [vmem:[%s3875 + $0xfd] sm:$0x1]
        %v4203 = vld [vmem:[%s3875 + $0xff] sm:$0x1]
        %v4204 = vld [vmem:[%s3875 + $0x119] sm:$0x1]
        %v4205 = vld [vmem:[%s3875 + $0x11b] sm:$0x1]
        %v4206 = vld [vmem:[%s3875 + $0x11d] sm:$0x1]
        %v4207 = vld [vmem:[%s3875 + $0x11f] sm:$0x1]
        %v4208 = vld [vmem:[%s3875 + $0x121] sm:$0x1]
        %v4209 = vld [vmem:[%s3875 + $0x123] sm:$0x1]
        %v4210 = vld [vmem:[%s3875 + $0x125] sm:$0x1]
        %v4211 = vld [vmem:[%s3875 + $0x127] sm:$0x1]
        %v4276 = vrot.slane %v4149, 7
        %v4277 = vsel %vm2119, %v4276, %v4148
        %v4278 = vrot.slane %v4150, 6
        %v4279 = vsel %vm2122, %v4278, %v4277
        %v4280 = vrot.slane %v4151, 5
        %v4281 = vsel %vm2125, %v4280, %v4279
        %v4282 = vrot.slane %v4152, 4
        %v4283 = vsel %vm2128, %v4282, %v4281
        %v4284 = vrot.slane %v4153, 3
        %v4285 = vsel %vm2131, %v4284, %v4283
        %v4286 = vrot.slane %v4154, 2
        %v4287 = vsel %vm2134, %v4286, %v4285
        %v4288 = vrot.slane %v4155, 1
        %v4289 = vsel %vm2137, %v4288, %v4287
        %v4290 = vrot.slane %v4157, 7
        %v4291 = vsel %vm2119, %v4290, %v4156
        %v4292 = vrot.slane %v4158, 6
        %v4293 = vsel %vm2122, %v4292, %v4291
        %v4294 = vrot.slane %v4159, 5
        %v4295 = vsel %vm2125, %v4294, %v4293
        %v4296 = vrot.slane %v4160, 4
        %v4297 = vsel %vm2128, %v4296, %v4295
        %v4298 = vrot.slane %v4161, 3
        %v4299 = vsel %vm2131, %v4298, %v4297
        %v4300 = vrot.slane %v4162, 2
        %v4301 = vsel %vm2134, %v4300, %v4299
        %v4302 = vrot.slane %v4163, 1
        %v4303 = vsel %vm2137, %v4302, %v4301
        %v4304 = vrot.slane %v4165, 7
        %v4305 = vsel %vm2119, %v4304, %v4164
        %v4306 = vrot.slane %v4166, 6
        %v4307 = vsel %vm2122, %v4306, %v4305
        %v4308 = vrot.slane %v4167, 5
        %v4309 = vsel %vm2125, %v4308, %v4307
        %v4310 = vrot.slane %v4168, 4
        %v4311 = vsel %vm2128, %v4310, %v4309
        %v4312 = vrot.slane %v4169, 3
        %v4313 = vsel %vm2131, %v4312, %v4311
        %v4314 = vrot.slane %v4170, 2
        %v4315 = vsel %vm2134, %v4314, %v4313
        %v4316 = vrot.slane %v4171, 1
        %v4317 = vsel %vm2137, %v4316, %v4315
        %v4318 = vrot.slane %v4173, 7
        %v4319 = vsel %vm2119, %v4318, %v4172
        %v4320 = vrot.slane %v4174, 6
        %v4321 = vsel %vm2122, %v4320, %v4319
        %v4322 = vrot.slane %v4175, 5
        %v4323 = vsel %vm2125, %v4322, %v4321
        %v4324 = vrot.slane %v4176, 4
        %v4325 = vsel %vm2128, %v4324, %v4323
        %v4326 = vrot.slane %v4177, 3
        %v4327 = vsel %vm2131, %v4326, %v4325
        %v4328 = vrot.slane %v4178, 2
        %v4329 = vsel %vm2134, %v4328, %v4327
        %v4330 = vrot.slane %v4179, 1
        %v4331 = vsel %vm2137, %v4330, %v4329
        %v4332 = vrot.slane %v4181, 7
        %v4333 = vsel %vm2119, %v4332, %v4180
        %v4334 = vrot.slane %v4182, 6
        %v4335 = vsel %vm2122, %v4334, %v4333
        %v4336 = vrot.slane %v4183, 5
        %v4337 = vsel %vm2125, %v4336, %v4335
        %v4338 = vrot.slane %v4184, 4
        %v4339 = vsel %vm2128, %v4338, %v4337
        %v4340 = vrot.slane %v4185, 3
        %v4341 = vsel %vm2131, %v4340, %v4339
        %v4342 = vrot.slane %v4186, 2
        %v4343 = vsel %vm2134, %v4342, %v4341
        %v4344 = vrot.slane %v4187, 1
        %v4345 = vsel %vm2137, %v4344, %v4343
        %v4346 = vrot.slane %v4189, 7
        %v4347 = vsel %vm2119, %v4346, %v4188
        %v4348 = vrot.slane %v4190, 6
        %v4349 = vsel %vm2122, %v4348, %v4347
        %v4350 = vrot.slane %v4191, 5
        %v4351 = vsel %vm2125, %v4350, %v4349
        %v4352 = vrot.slane %v4192, 4
        %v4353 = vsel %vm2128, %v4352, %v4351
        %v4354 = vrot.slane %v4193, 3
        %v4355 = vsel %vm2131, %v4354, %v4353
        %v4356 = vrot.slane %v4194, 2
        %v4357 = vsel %vm2134, %v4356, %v4355
        %v4358 = vrot.slane %v4195, 1
        %v4359 = vsel %vm2137, %v4358, %v4357
        %v4360 = vrot.slane %v4197, 7
        %v4361 = vsel %vm2119, %v4360, %v4196
        %v4362 = vrot.slane %v4198, 6
        %v4363 = vsel %vm2122, %v4362, %v4361
        %v4364 = vrot.slane %v4199, 5
        %v4365 = vsel %vm2125, %v4364, %v4363
        %v4366 = vrot.slane %v4200, 4
        %v4367 = vsel %vm2128, %v4366, %v4365
        %v4368 = vrot.slane %v4201, 3
        %v4369 = vsel %vm2131, %v4368, %v4367
        %v4370 = vrot.slane %v4202, 2
        %v4371 = vsel %vm2134, %v4370, %v4369
        %v4372 = vrot.slane %v4203, 1
        %v4373 = vsel %vm2137, %v4372, %v4371
        %v4374 = vrot.slane %v4205, 7
        %v4375 = vsel %vm2119, %v4374, %v4204
        %v4376 = vrot.slane %v4206, 6
        %v4377 = vsel %vm2122, %v4376, %v4375
        %v4378 = vrot.slane %v4207, 5
        %v4379 = vsel %vm2125, %v4378, %v4377
        %v4380 = vrot.slane %v4208, 4
        %v4381 = vsel %vm2128, %v4380, %v4379
        %v4382 = vrot.slane %v4209, 3
        %v4383 = vsel %vm2131, %v4382, %v4381
        %v4384 = vrot.slane %v4210, 2
        %v4385 = vsel %vm2134, %v4384, %v4383
        %v4386 = vrot.slane %v4211, 1
        %v4387 = vsel %vm2137, %v4386, %v4385
        %4396 = vst.msk [vmem:[#allocation3 + $0x10] sm:$0xff] %vm635, %v4289
        %4397 = vst.msk [vmem:[#allocation3 + $0x28] sm:$0xff] %vm635, %v4303
        %4398 = vst.msk [vmem:[#allocation3 + $0x40] sm:$0xff] %vm635, %v4317
        %4399 = vst.msk [vmem:[#allocation3 + $0x58] sm:$0xff] %vm635, %v4331
        %4400 = vst.msk [vmem:[#allocation3 + $0x70] sm:$0xff] %vm635, %v4345
        %4401 = vst.msk [vmem:[#allocation3 + $0x88] sm:$0xff] %vm635, %v4359
        %4402 = vst.msk [vmem:[#allocation3 + $0xa0] sm:$0xff] %vm635, %v4373
        %4403 = vst.msk [vmem:[#allocation3 + $0xb8] sm:$0xff] %vm635, %v4387
        %v4404 = vld [vmem:[#allocation3] sm:$0xff]
        %v4405 = vld [vmem:[#allocation3 + $0x8] sm:$0xff]
        %v4406 = vld [vmem:[#allocation3 + $0x10] sm:$0xff]
        %v4407 = vld [vmem:[#allocation3 + $0x18] sm:$0xff]
        %v4408 = vld [vmem:[#allocation3 + $0x20] sm:$0xff]
        %v4409 = vld [vmem:[#allocation3 + $0x28] sm:$0xff]
        %v4410 = vld [vmem:[#allocation3 + $0x30] sm:$0xff]
        %v4411 = vld [vmem:[#allocation3 + $0x38] sm:$0xff]
        %v4412 = vld [vmem:[#allocation3 + $0x40] sm:$0xff]
        %v4413 = vld [vmem:[#allocation3 + $0x48] sm:$0xff]
        %v4414 = vld [vmem:[#allocation3 + $0x50] sm:$0xff]
        %v4415 = vld [vmem:[#allocation3 + $0x58] sm:$0xff]
        %v4416 = vld [vmem:[#allocation3 + $0x60] sm:$0xff]
        %v4417 = vld [vmem:[#allocation3 + $0x68] sm:$0xff]
        %v4418 = vld [vmem:[#allocation3 + $0x70] sm:$0xff]
        %v4419 = vld [vmem:[#allocation3 + $0x78] sm:$0xff]
        %v4420 = vld [vmem:[#allocation3 + $0x80] sm:$0xff]
        %v4421 = vld [vmem:[#allocation3 + $0x88] sm:$0xff]
        %v4422 = vld [vmem:[#allocation3 + $0x90] sm:$0xff]
        %v4423 = vld [vmem:[#allocation3 + $0x98] sm:$0xff]
        %v4424 = vld [vmem:[#allocation3 + $0xa0] sm:$0xff]
        %v4425 = vld [vmem:[#allocation3 + $0xa8] sm:$0xff]
        %v4426 = vld [vmem:[#allocation3 + $0xb0] sm:$0xff]
        %v4427 = vld [vmem:[#allocation3 + $0xb8] sm:$0xff]
        %v4428 = vpack.c.bf16 %v4407, %v4404
        %v4429 = vpack.c.bf16 %v4408, %v4405
        %v4430 = vpack.c.bf16 %v4409, %v4406
        %v4431 = vpack.c.bf16 %v4413, %v4410
        %v4432 = vpack.c.bf16 %v4414, %v4411
        %v4433 = vpack.c.bf16 %v4415, %v4412
        %v4434 = vpack.c.bf16 %v4419, %v4416
        %v4435 = vpack.c.bf16 %v4420, %v4417
        %v4436 = vpack.c.bf16 %v4421, %v4418
        %v4437 = vpack.c.bf16 %v4425, %v4422
        %v4438 = vpack.c.bf16 %v4426, %v4423
        %v4439 = vpack.c.bf16 %v4427, %v4424
        %v4440 = vld [vmem:[%s5] sm:$0xf]
        %v4441 = vld [vmem:[%s5 + $0x4] sm:$0xf]
        %v4442 = vld [vmem:[%s5 + $0x8] sm:$0xf]
        %v4443 = vld [vmem:[%s5 + $0xc] sm:$0xf]
        %v4444 = vld [vmem:[%s5 + $0x10] sm:$0xf]
        %v4445 = vld [vmem:[%s5 + $0x14] sm:$0xf]
        %v4446 = vld [vmem:[%s5 + $0x18] sm:$0xf]
        %v4447 = vld [vmem:[%s5 + $0x1c] sm:$0xf]
        %v4448 = vld [vmem:[%s5 + $0x20] sm:$0xf]
        %v4449 = vld [vmem:[%s5 + $0x24] sm:$0xf]
        %v4450 = vld [vmem:[%s5 + $0x28] sm:$0xf]
        %v4451 = vld [vmem:[%s5 + $0x2c] sm:$0xf]
        %v4452 = vld [vmem:[%s5 + $0x30] sm:$0xf]
        %v4453 = vld [vmem:[%s5 + $0x34] sm:$0xf]
        %v4454 = vld [vmem:[%s5 + $0x38] sm:$0xf]
        %v4455 = vld [vmem:[%s5 + $0x3c] sm:$0xf]
        %v4456 = vld [vmem:[%s5 + $0x40] sm:$0xf]
        %v4457 = vld [vmem:[%s5 + $0x44] sm:$0xf]
        %v4458 = vld [vmem:[%s5 + $0x48] sm:$0xf]
        %v4459 = vld [vmem:[%s5 + $0x4c] sm:$0xf]
        %v4460 = vld [vmem:[%s5 + $0x50] sm:$0xf]
        %v4461 = vld [vmem:[%s5 + $0x54] sm:$0xf]
        %v4462 = vld [vmem:[%s5 + $0x58] sm:$0xf]
        %v4463 = vld [vmem:[%s5 + $0x5c] sm:$0xf]
        %v4464 = vld [vmem:[%s5 + $0x60] sm:$0xf]
        %v4465 = vld [vmem:[%s5 + $0x64] sm:$0xf]
        %v4466 = vld [vmem:[%s5 + $0x68] sm:$0xf]
        %v4467 = vld [vmem:[%s5 + $0x6c] sm:$0xf]
        %v4468 = vld [vmem:[%s5 + $0x70] sm:$0xf]
        %v4469 = vld [vmem:[%s5 + $0x74] sm:$0xf]
        %v4470 = vld [vmem:[%s5 + $0x78] sm:$0xf]
        %v4471 = vld [vmem:[%s5 + $0x7c] sm:$0xf]
        %v4472 = vld [vmem:[%s5 + $0x80] sm:$0xf]
        %v4473 = vld [vmem:[%s5 + $0x84] sm:$0xf]
        %v4474 = vld [vmem:[%s5 + $0x88] sm:$0xf]
        %v4475 = vld [vmem:[%s5 + $0x8c] sm:$0xf]
        %v4512 = vunpack.c.l.b16 %v4440
        %v4513 = vunpack.c.l.b16 %v4441
        %v4514 = vunpack.c.l.b16 %v4442
        %v4515 = vunpack.c.l.b16 %v4443
        %v4516 = vunpack.c.l.b16 %v4444
        %v4517 = vunpack.c.l.b16 %v4445
        %v4518 = vunpack.c.l.b16 %v4446
        %v4519 = vunpack.c.l.b16 %v4447
        %v4520 = vunpack.c.l.b16 %v4448
        %v4521 = vunpack.c.l.b16 %v4449
        %v4522 = vunpack.c.l.b16 %v4450
        %v4523 = vunpack.c.l.b16 %v4451
        %v4524 = vunpack.c.l.b16 %v4452
        %v4525 = vunpack.c.l.b16 %v4453
        %v4526 = vunpack.c.l.b16 %v4454
        %v4527 = vunpack.c.l.b16 %v4455
        %v4528 = vunpack.c.l.b16 %v4456
        %v4529 = vunpack.c.l.b16 %v4457
        %v4530 = vunpack.c.l.b16 %v4458
        %v4531 = vunpack.c.l.b16 %v4459
        %v4532 = vunpack.c.l.b16 %v4460
        %v4533 = vunpack.c.l.b16 %v4461
        %v4534 = vunpack.c.l.b16 %v4462
        %v4535 = vunpack.c.l.b16 %v4463
        %v4536 = vunpack.c.l.b16 %v4464
        %v4537 = vunpack.c.l.b16 %v4465
        %v4538 = vunpack.c.l.b16 %v4466
        %v4539 = vunpack.c.l.b16 %v4467
        %v4540 = vunpack.c.l.b16 %v4468
        %v4541 = vunpack.c.l.b16 %v4469
        %v4542 = vunpack.c.l.b16 %v4470
        %v4543 = vunpack.c.l.b16 %v4471
        %v4544 = vunpack.c.l.b16 %v4472
        %v4545 = vunpack.c.l.b16 %v4473
        %v4546 = vunpack.c.l.b16 %v4474
        %v4547 = vunpack.c.l.b16 %v4475
        %v4548 = vpack.c.b16 %v4513, %v4512
        %v4549 = vpack.c.b16 %v4515, %v4514
        %v4550 = vpack.c.b16 %v4517, %v4516
        %v4551 = vpack.c.b16 %v4519, %v4518
        %v4552 = vpack.c.b16 %v4521, %v4520
        %v4553 = vpack.c.b16 %v4523, %v4522
        %v4554 = vpack.c.b16 %v4525, %v4524
        %v4555 = vpack.c.b16 %v4527, %v4526
        %v4556 = vpack.c.b16 %v4529, %v4528
        %v4557 = vpack.c.b16 %v4531, %v4530
        %v4558 = vpack.c.b16 %v4533, %v4532
        %v4559 = vpack.c.b16 %v4535, %v4534
        %v4560 = vpack.c.b16 %v4537, %v4536
        %v4561 = vpack.c.b16 %v4539, %v4538
        %v4562 = vpack.c.b16 %v4541, %v4540
        %v4563 = vpack.c.b16 %v4543, %v4542
        %v4564 = vpack.c.b16 %v4545, %v4544
        %v4565 = vpack.c.b16 %v4547, %v4546
        %v4585 = vsel %vm635, %v4430, 0
        %v4588 = vsel %vm635, %v4433, 0
        %v4591 = vsel %vm635, %v4436, 0
        %v4594 = vsel %vm635, %v4439, 0
        %4596 = vmatprep.subr.bf16.mxu0 0
        %4597 = vmatpush1.bf16.msra.mxu0 %v4555
        %4598 = vmatprep.subr.bf16.mxu0 0
        %4599 = vmatpush1.bf16.msra.mxu0 %v4554
        %4600 = vmatprep.subr.bf16.mxu0 0
        %4601 = vmatpush1.bf16.msra.mxu0 %v4553
        %4602 = vmatprep.subr.bf16.mxu0 0
        %4603 = vmatpush1.bf16.msra.mxu0 %v4552
        %4604 = vmatprep.subr.bf16.mxu0 0
        %4605 = vmatpush1.bf16.msra.mxu0 %v4551
        %4606 = vmatprep.subr.bf16.mxu0 0
        %4607 = vmatpush1.bf16.msra.mxu0 %v4550
        %4608 = vmatprep.subr.bf16.mxu0 0
        %4609 = vmatpush1.bf16.msra.mxu0 %v4549
        %4610 = vmatprep.subr.bf16.mxu0 0
        %4611 = vmatpush1.bf16.msra.mxu0 %v4548
        %4612 = vmatprep.subr.bf16.mxu0 0
        %4613 = vmatpush2.bf16.msra.mxu0 %v4563
        %4614 = vmatprep.subr.bf16.mxu0 0
        %4615 = vmatpush2.bf16.msra.mxu0 %v4562
        %4616 = vmatprep.subr.bf16.mxu0 0
        %4617 = vmatpush2.bf16.msra.mxu0 %v4561
        %4618 = vmatprep.subr.bf16.mxu0 0
        %4619 = vmatpush2.bf16.msra.mxu0 %v4560
        %4620 = vmatprep.subr.bf16.mxu0 0
        %4621 = vmatpush2.bf16.msra.mxu0 %v4559
        %4622 = vmatprep.subr.bf16.mxu0 0
        %4623 = vmatpush2.bf16.msra.mxu0 %v4558
        %4624 = vmatprep.subr.bf16.mxu0 0
        %4625 = vmatpush2.bf16.msra.mxu0 %v4557
        %4626 = vmatprep.subr.bf16.mxu0 0
        %4627 = vmatpush2.bf16.msra.mxu0 %v4556
        %4628 = vmatprep.mubr.bf16.mxu0 %v4429
        %4629 = vmatmul.mubr.bf16.gmra.mxu0 %v4428
        %v4630 = vpop.f32.mrf.mxu0
        %v4631 = vadd.f32 0.0, %v4630
        %v4632 = vpop.f32.mrf.mxu0
        %v4633 = vpop.f32.mrf.mxu0
        %v4634 = vadd.f32 0.0, %v4633
        %v4635 = vpop.f32.mrf.mxu0
        %4636 = vmatprep.mubr.bf16.mxu0 %v4432
        %4637 = vmatmul.mubr.bf16.gmra.mxu0 %v4431
        %v4638 = vpop.f32.mrf.mxu0
        %v4639 = vadd.f32 0.0, %v4638
        %v4640 = vpop.f32.mrf.mxu0
        %v4641 = vpop.f32.mrf.mxu0
        %v4642 = vadd.f32 0.0, %v4641
        %v4643 = vpop.f32.mrf.mxu0
        %4644 = vmatprep.mubr.bf16.mxu0 %v4435
        %4645 = vmatmul.mubr.bf16.gmra.mxu0 %v4434
        %v4646 = vpop.f32.mrf.mxu0
        %v4647 = vadd.f32 0.0, %v4646
        %v4648 = vpop.f32.mrf.mxu0
        %v4649 = vpop.f32.mrf.mxu0
        %v4650 = vadd.f32 0.0, %v4649
        %v4651 = vpop.f32.mrf.mxu0
        %4652 = vmatprep.mubr.bf16.mxu0 %v4438
        %4653 = vmatmul.mubr.bf16.gmra.mxu0 %v4437
        %v4654 = vpop.f32.mrf.mxu0
        %v4655 = vadd.f32 0.0, %v4654
        %v4656 = vpop.f32.mrf.mxu0
        %v4657 = vpop.f32.mrf.mxu0
        %v4658 = vadd.f32 0.0, %v4657
        %v4659 = vpop.f32.mrf.mxu0
        %4660 = vdwg.mxu0
        %4661 = vmatprep.subr.bf16.mxu0 0
        %4662 = vmatpush1.bf16.msra.mxu0 0
        %4663 = vmatprep.subr.bf16.mxu0 0
        %4664 = vmatpush1.bf16.msra.mxu0 0
        %4665 = vmatprep.subr.bf16.mxu0 0
        %4666 = vmatpush1.bf16.msra.mxu0 0
        %4667 = vmatprep.subr.bf16.mxu0 0
        %4668 = vmatpush1.bf16.msra.mxu0 0
        %4669 = vmatprep.subr.bf16.mxu0 0
        %4670 = vmatpush1.bf16.msra.mxu0 0
        %4671 = vmatprep.subr.bf16.mxu0 0
        %4672 = vmatpush1.bf16.msra.mxu0 0
        %4673 = vmatprep.subr.bf16.mxu0 0
        %4674 = vmatpush1.bf16.msra.mxu0 %v4565
        %4675 = vmatprep.subr.bf16.mxu0 0
        %4676 = vmatpush1.bf16.msra.mxu0 %v4564
        %4677 = vmatprep.subr.bf16.mxu0 0
        %4678 = vmatpush2.bf16.msra.mxu0 0
        %4679 = vmatprep.subr.bf16.mxu0 0
        %4680 = vmatpush2.bf16.msra.mxu0 0
        %4681 = vmatprep.subr.bf16.mxu0 0
        %4682 = vmatpush2.bf16.msra.mxu0 0
        %4683 = vmatprep.subr.bf16.mxu0 0
        %4684 = vmatpush2.bf16.msra.mxu0 0
        %4685 = vmatprep.subr.bf16.mxu0 0
        %4686 = vmatpush2.bf16.msra.mxu0 0
        %4687 = vmatprep.subr.bf16.mxu0 0
        %4688 = vmatpush2.bf16.msra.mxu0 0
        %4689 = vmatprep.subr.bf16.mxu0 0
        %4690 = vmatpush2.bf16.msra.mxu0 0
        %4691 = vmatprep.subr.bf16.mxu0 0
        %4692 = vmatpush2.bf16.msra.mxu0 0
        %4693 = vmatprep.mubr.bf16.mxu0 0
        %4694 = vmatmul.mubr.bf16.gmra.mxu0 %v4585
        %v4695 = vpop.f32.mrf.mxu0
        %v4696 = vadd.f32 %v4631, %v4695
        %v4697 = vpop.f32.mrf.mxu0
        %v4698 = vpop.f32.mrf.mxu0
        %v4699 = vadd.f32 %v4634, %v4698
        %v4700 = vpop.f32.mrf.mxu0
        %4701 = vmatprep.mubr.bf16.mxu0 0
        %4702 = vmatmul.mubr.bf16.gmra.mxu0 %v4588
        %v4703 = vpop.f32.mrf.mxu0
        %v4704 = vadd.f32 %v4639, %v4703
        %v4705 = vpop.f32.mrf.mxu0
        %v4706 = vpop.f32.mrf.mxu0
        %v4707 = vadd.f32 %v4642, %v4706
        %v4708 = vpop.f32.mrf.mxu0
        %4709 = vmatprep.mubr.bf16.mxu0 0
        %4710 = vmatmul.mubr.bf16.gmra.mxu0 %v4591
        %v4711 = vpop.f32.mrf.mxu0
        %v4712 = vadd.f32 %v4647, %v4711
        %v4713 = vpop.f32.mrf.mxu0
        %v4714 = vpop.f32.mrf.mxu0
        %v4715 = vadd.f32 %v4650, %v4714
        %v4716 = vpop.f32.mrf.mxu0
        %4717 = vmatprep.mubr.bf16.mxu0 0
        %4718 = vmatmul.mubr.bf16.gmra.mxu0 %v4594
        %v4719 = vpop.f32.mrf.mxu0
        %v4720 = vadd.f32 %v4655, %v4719
        %v4721 = vpop.f32.mrf.mxu0
        %v4722 = vpop.f32.mrf.mxu0
        %v4723 = vadd.f32 %v4658, %v4722
        %v4724 = vpop.f32.mrf.mxu0
        %4725 = vdwg.mxu0
        %v4726 = vld [vmem:[%s6] sm:$0x1]
        %v4728 = vlaneseq
        %v4729 = vshrl.u32 %v4728, 7
        %v4730 = vsub.s32 0, %v4729
        %v4731 = vrot.slane %v4726, %v4730
        %v4733 = vmul.f32 %v4696, %v4731
        %v4734 = vmul.f32 %v4699, %v4731
        %v4735 = vmul.f32 %v4704, %v4731
        %v4736 = vmul.f32 %v4707, %v4731
        %v4737 = vmul.f32 %v4712, %v4731
        %v4738 = vmul.f32 %v4715, %v4731
        %v4739 = vmul.f32 %v4720, %v4731
        %v4740 = vmul.f32 %v4723, %v4731
        %v4741 = vld [vmem:[%s7] sm:$0x1]
        %v4743 = vlaneseq
        %v4744 = vshrl.u32 %v4743, 7
        %v4745 = vsub.s32 0, %v4744
        %v4746 = vrot.slane %v4741, %v4745
        %v4748 = vadd.f32 %v4733, %v4746
        %v4749 = vadd.f32 %v4734, %v4746
        %v4750 = vadd.f32 %v4735, %v4746
        %v4751 = vadd.f32 %v4736, %v4746
        %v4752 = vadd.f32 %v4737, %v4746
        %v4753 = vadd.f32 %v4738, %v4746
        %v4754 = vadd.f32 %v4739, %v4746
        %v4755 = vadd.f32 %v4740, %v4746
        %v4756 = vmax.f32 %v4748, 0.0
        %v4757 = vmax.f32 %v4749, 0.0
        %v4758 = vmax.f32 %v4750, 0.0
        %v4759 = vmax.f32 %v4751, 0.0
        %v4760 = vmax.f32 %v4752, 0.0
        %v4761 = vmax.f32 %v4753, 0.0
        %v4762 = vmax.f32 %v4754, 0.0
        %v4763 = vmax.f32 %v4755, 0.0
        %v4764 = vpack.c.bf16 %v4757, %v4756
        %v4765 = vpack.c.bf16 %v4759, %v4758
        %v4766 = vpack.c.bf16 %v4761, %v4760
        %v4767 = vpack.c.bf16 %v4763, %v4762
        %v4768 = vld [vmem:[%s8] sm:$0xf]
        %v4769 = vld [vmem:[%s8 + $0x4] sm:$0xf]
        %v4770 = vld [vmem:[%s8 + $0x8] sm:$0xf]
        %v4771 = vld [vmem:[%s8 + $0xc] sm:$0xf]
        %v4776 = vunpack.c.l.b16 %v4768
        %v4777 = vunpack.c.l.b16 %v4769
        %v4778 = vunpack.c.l.b16 %v4770
        %v4779 = vunpack.c.l.b16 %v4771
        %v4780 = vpack.c.b16 %v4777, %v4776
        %v4781 = vpack.c.b16 %v4779, %v4778
        %v4785 = vsel %vm635, %v4764, 0
        %v4788 = vsel %vm635, %v4765, 0
        %v4791 = vsel %vm635, %v4766, 0
        %v4794 = vsel %vm635, %v4767, 0
        %4796 = vmatprep.subr.bf16.mxu0 0
        %4797 = vmatpush1.bf16.msra.mxu0 0
        %4798 = vmatprep.subr.bf16.mxu0 0
        %4799 = vmatpush1.bf16.msra.mxu0 0
        %4800 = vmatprep.subr.bf16.mxu0 0
        %4801 = vmatpush1.bf16.msra.mxu0 0
        %4802 = vmatprep.subr.bf16.mxu0 0
        %4803 = vmatpush1.bf16.msra.mxu0 0
        %4804 = vmatprep.subr.bf16.mxu0 0
        %4805 = vmatpush1.bf16.msra.mxu0 0
        %4806 = vmatprep.subr.bf16.mxu0 0
        %4807 = vmatpush1.bf16.msra.mxu0 0
        %4808 = vmatprep.subr.bf16.mxu0 0
        %4809 = vmatpush1.bf16.msra.mxu0 %v4781
        %4810 = vmatprep.subr.bf16.mxu0 0
        %4811 = vmatpush1.bf16.msra.mxu0 %v4780
        %4812 = vmatprep.subr.bf16.mxu0 0
        %4813 = vmatpush2.bf16.msra.mxu0 0
        %4814 = vmatprep.subr.bf16.mxu0 0
        %4815 = vmatpush2.bf16.msra.mxu0 0
        %4816 = vmatprep.subr.bf16.mxu0 0
        %4817 = vmatpush2.bf16.msra.mxu0 0
        %4818 = vmatprep.subr.bf16.mxu0 0
        %4819 = vmatpush2.bf16.msra.mxu0 0
        %4820 = vmatprep.subr.bf16.mxu0 0
        %4821 = vmatpush2.bf16.msra.mxu0 0
        %4822 = vmatprep.subr.bf16.mxu0 0
        %4823 = vmatpush2.bf16.msra.mxu0 0
        %4824 = vmatprep.subr.bf16.mxu0 0
        %4825 = vmatpush2.bf16.msra.mxu0 0
        %4826 = vmatprep.subr.bf16.mxu0 0
        %4827 = vmatpush2.bf16.msra.mxu0 0
        %4828 = vmatprep.mubr.bf16.mxu0 0
        %4829 = vmatmul.mubr.bf16.gmra.mxu0 %v4785
        %v4830 = vpop.f32.mrf.mxu0
        %v4831 = vadd.f32 0.0, %v4830
        %v4832 = vpop.f32.mrf.mxu0
        %v4833 = vpop.f32.mrf.mxu0
        %v4834 = vadd.f32 0.0, %v4833
        %v4835 = vpop.f32.mrf.mxu0
        %4836 = vmatprep.mubr.bf16.mxu0 0
        %4837 = vmatmul.mubr.bf16.gmra.mxu0 %v4788
        %v4838 = vpop.f32.mrf.mxu0
        %v4839 = vadd.f32 0.0, %v4838
        %v4840 = vpop.f32.mrf.mxu0
        %v4841 = vpop.f32.mrf.mxu0
        %v4842 = vadd.f32 0.0, %v4841
        %v4843 = vpop.f32.mrf.mxu0
        %4844 = vmatprep.mubr.bf16.mxu0 0
        %4845 = vmatmul.mubr.bf16.gmra.mxu0 %v4791
        %v4846 = vpop.f32.mrf.mxu0
        %v4847 = vadd.f32 0.0, %v4846
        %v4848 = vpop.f32.mrf.mxu0
        %v4849 = vpop.f32.mrf.mxu0
        %v4850 = vadd.f32 0.0, %v4849
        %v4851 = vpop.f32.mrf.mxu0
        %4852 = vmatprep.mubr.bf16.mxu0 0
        %4853 = vmatmul.mubr.bf16.gmra.mxu0 %v4794
        %v4854 = vpop.f32.mrf.mxu0
        %v4855 = vadd.f32 0.0, %v4854
        %v4856 = vpop.f32.mrf.mxu0
        %v4857 = vpop.f32.mrf.mxu0
        %v4858 = vadd.f32 0.0, %v4857
        %v4859 = vpop.f32.mrf.mxu0
        %4860 = vdwg.mxu0
        %v4861 = vld [vmem:[%s9] sm:$0x1]
        %v4863 = vlaneseq
        %v4864 = vshrl.u32 %v4863, 7
        %v4865 = vsub.s32 0, %v4864
        %v4866 = vrot.slane %v4861, %v4865
        %v4868 = vmul.f32 %v4831, %v4866
        %v4869 = vmul.f32 %v4834, %v4866
        %v4870 = vmul.f32 %v4839, %v4866
        %v4871 = vmul.f32 %v4842, %v4866
        %v4872 = vmul.f32 %v4847, %v4866
        %v4873 = vmul.f32 %v4850, %v4866
        %v4874 = vmul.f32 %v4855, %v4866
        %v4875 = vmul.f32 %v4858, %v4866
        %v4876 = vld [vmem:[%s10] sm:$0x1]
        %v4878 = vlaneseq
        %v4879 = vshrl.u32 %v4878, 7
        %v4880 = vsub.s32 0, %v4879
        %v4881 = vrot.slane %v4876, %v4880
        %v4883 = vadd.f32 %v4868, %v4881
        %v4884 = vadd.f32 %v4869, %v4881
        %v4885 = vadd.f32 %v4870, %v4881
        %v4886 = vadd.f32 %v4871, %v4881
        %v4887 = vadd.f32 %v4872, %v4881
        %v4888 = vadd.f32 %v4873, %v4881
        %v4889 = vadd.f32 %v4874, %v4881
        %v4890 = vadd.f32 %v4875, %v4881
        %v4891 = vld [vmem:[%s505] sm:$0xf]
        %v4892 = vld [vmem:[%s505 + $0x4] sm:$0xf]
        %v4893 = vld [vmem:[%s505 + $0x8] sm:$0xf]
        %v4894 = vld [vmem:[%s505 + $0xc] sm:$0xf]
        %v4895 = vld [vmem:[%s505 + $0x10] sm:$0xf]
        %v4896 = vld [vmem:[%s505 + $0x14] sm:$0xf]
        %v4897 = vld [vmem:[%s505 + $0x18] sm:$0xf]
        %v4898 = vld [vmem:[%s505 + $0x1c] sm:$0xf]
        %v4899 = vld [vmem:[%s11] sm:$0xf]
        %v4900 = vld [vmem:[%s11 + $0x4] sm:$0xf]
        %v4901 = vld [vmem:[%s11 + $0x8] sm:$0xf]
        %v4902 = vld [vmem:[%s11 + $0xc] sm:$0xf]
        %v4911 = vunpack.c.l.b16 %v4891
        %v4912 = vunpack.c.l.b16 %v4892
        %v4913 = vunpack.c.l.b16 %v4893
        %v4914 = vunpack.c.l.b16 %v4894
        %v4915 = vunpack.c.l.b16 %v4895
        %v4916 = vunpack.c.l.b16 %v4896
        %v4917 = vunpack.c.l.b16 %v4897
        %v4918 = vunpack.c.l.b16 %v4898
        %v4919 = vpack.c.b16 %v4912, %v4911
        %v4920 = vpack.c.b16 %v4914, %v4913
        %v4921 = vpack.c.b16 %v4916, %v4915
        %v4922 = vpack.c.b16 %v4918, %v4917
        %v4927 = vunpack.c.l.b16 %v4899
        %v4928 = vunpack.c.l.b16 %v4900
        %v4929 = vunpack.c.l.b16 %v4901
        %v4930 = vunpack.c.l.b16 %v4902
        %v4931 = vpack.c.b16 %v4928, %v4927
        %v4932 = vpack.c.b16 %v4930, %v4929
        %v4936 = vsel %vm635, %v4919, 0
        %v4939 = vsel %vm635, %v4920, 0
        %v4942 = vsel %vm635, %v4921, 0
        %v4945 = vsel %vm635, %v4922, 0
        %4947 = vmatprep.subr.bf16.mxu0 0
        %4948 = vmatpush1.bf16.msra.mxu0 0
        %4949 = vmatprep.subr.bf16.mxu0 0
        %4950 = vmatpush1.bf16.msra.mxu0 0
        %4951 = vmatprep.subr.bf16.mxu0 0
        %4952 = vmatpush1.bf16.msra.mxu0 0
        %4953 = vmatprep.subr.bf16.mxu0 0
        %4954 = vmatpush1.bf16.msra.mxu0 0
        %4955 = vmatprep.subr.bf16.mxu0 0
        %4956 = vmatpush1.bf16.msra.mxu0 0
        %4957 = vmatprep.subr.bf16.mxu0 0
        %4958 = vmatpush1.bf16.msra.mxu0 0
        %4959 = vmatprep.subr.bf16.mxu0 0
        %4960 = vmatpush1.bf16.msra.mxu0 %v4932
        %4961 = vmatprep.subr.bf16.mxu0 0
        %4962 = vmatpush1.bf16.msra.mxu0 %v4931
        %4963 = vmatprep.subr.bf16.mxu0 0
        %4964 = vmatpush2.bf16.msra.mxu0 0
        %4965 = vmatprep.subr.bf16.mxu0 0
        %4966 = vmatpush2.bf16.msra.mxu0 0
        %4967 = vmatprep.subr.bf16.mxu0 0
        %4968 = vmatpush2.bf16.msra.mxu0 0
        %4969 = vmatprep.subr.bf16.mxu0 0
        %4970 = vmatpush2.bf16.msra.mxu0 0
        %4971 = vmatprep.subr.bf16.mxu0 0
        %4972 = vmatpush2.bf16.msra.mxu0 0
        %4973 = vmatprep.subr.bf16.mxu0 0
        %4974 = vmatpush2.bf16.msra.mxu0 0
        %4975 = vmatprep.subr.bf16.mxu0 0
        %4976 = vmatpush2.bf16.msra.mxu0 0
        %4977 = vmatprep.subr.bf16.mxu0 0
        %4978 = vmatpush2.bf16.msra.mxu0 0
        %4979 = vmatprep.mubr.bf16.mxu0 0
        %4980 = vmatmul.mubr.bf16.gmra.mxu0 %v4936
        %v4981 = vpop.f32.mrf.mxu0
        %v4982 = vadd.f32 0.0, %v4981
        %v4983 = vpop.f32.mrf.mxu0
        %v4984 = vpop.f32.mrf.mxu0
        %v4985 = vadd.f32 0.0, %v4984
        %v4986 = vpop.f32.mrf.mxu0
        %4987 = vmatprep.mubr.bf16.mxu0 0
        %4988 = vmatmul.mubr.bf16.gmra.mxu0 %v4939
        %v4989 = vpop.f32.mrf.mxu0
        %v4990 = vadd.f32 0.0, %v4989
        %v4991 = vpop.f32.mrf.mxu0
        %v4992 = vpop.f32.mrf.mxu0
        %v4993 = vadd.f32 0.0, %v4992
        %v4994 = vpop.f32.mrf.mxu0
        %4995 = vmatprep.mubr.bf16.mxu0 0
        %4996 = vmatmul.mubr.bf16.gmra.mxu0 %v4942
        %v4997 = vpop.f32.mrf.mxu0
        %v4998 = vadd.f32 0.0, %v4997
        %v4999 = vpop.f32.mrf.mxu0
        %v5000 = vpop.f32.mrf.mxu0
        %v5001 = vadd.f32 0.0, %v5000
        %v5002 = vpop.f32.mrf.mxu0
        %5003 = vmatprep.mubr.bf16.mxu0 0
        %5004 = vmatmul.mubr.bf16.gmra.mxu0 %v4945
        %v5005 = vpop.f32.mrf.mxu0
        %v5006 = vadd.f32 0.0, %v5005
        %v5007 = vpop.f32.mrf.mxu0
        %v5008 = vpop.f32.mrf.mxu0
        %v5009 = vadd.f32 0.0, %v5008
        %v5010 = vpop.f32.mrf.mxu0
        %5011 = vdwg.mxu0
        %v5012 = vld [vmem:[%s12] sm:$0x1]
        %v5014 = vlaneseq
        %v5015 = vshrl.u32 %v5014, 7
        %v5016 = vsub.s32 0, %v5015
        %v5017 = vrot.slane %v5012, %v5016
        %v5019 = vmul.f32 %v4982, %v5017
        %v5020 = vmul.f32 %v4985, %v5017
        %v5021 = vmul.f32 %v4990, %v5017
        %v5022 = vmul.f32 %v4993, %v5017
        %v5023 = vmul.f32 %v4998, %v5017
        %v5024 = vmul.f32 %v5001, %v5017
        %v5025 = vmul.f32 %v5006, %v5017
        %v5026 = vmul.f32 %v5009, %v5017
        %v5027 = vld [vmem:[%s13] sm:$0x1]
        %v5029 = vlaneseq
        %v5030 = vshrl.u32 %v5029, 7
        %v5031 = vsub.s32 0, %v5030
        %v5032 = vrot.slane %v5027, %v5031
        %v5034 = vadd.f32 %v5019, %v5032
        %v5035 = vadd.f32 %v5020, %v5032
        %v5036 = vadd.f32 %v5021, %v5032
        %v5037 = vadd.f32 %v5022, %v5032
        %v5038 = vadd.f32 %v5023, %v5032
        %v5039 = vadd.f32 %v5024, %v5032
        %v5040 = vadd.f32 %v5025, %v5032
        %v5041 = vadd.f32 %v5026, %v5032
        %v5042 = vadd.f32 %v4883, %v5034
        %v5043 = vadd.f32 %v4884, %v5035
        %v5044 = vadd.f32 %v4885, %v5036
        %v5045 = vadd.f32 %v4886, %v5037
        %v5046 = vadd.f32 %v4887, %v5038
        %v5047 = vadd.f32 %v4888, %v5039
        %v5048 = vadd.f32 %v4889, %v5040
        %v5049 = vadd.f32 %v4890, %v5041
        %v5050 = vmax.f32 %v5042, 0.0
        %v5051 = vmax.f32 %v5043, 0.0
        %v5052 = vmax.f32 %v5044, 0.0
        %v5053 = vmax.f32 %v5045, 0.0
        %v5054 = vmax.f32 %v5046, 0.0
        %v5055 = vmax.f32 %v5047, 0.0
        %v5056 = vmax.f32 %v5048, 0.0
        %v5057 = vmax.f32 %v5049, 0.0
        %5058 = vst [vmem:[%s500] sm:$0xff] %v5050
        %5059 = vst [vmem:[%s500 + $0x8] sm:$0xff] %v5051
        %5060 = vst [vmem:[%s500 + $0x10] sm:$0xff] %v5052
        %5061 = vst [vmem:[%s500 + $0x18] sm:$0xff] %v5053
        %5062 = vst [vmem:[%s500 + $0x20] sm:$0xff] %v5054
        %5063 = vst [vmem:[%s500 + $0x28] sm:$0xff] %v5055
        %5064 = vst [vmem:[%s500 + $0x30] sm:$0xff] %v5056
        %5065 = vst [vmem:[%s500 + $0x38] sm:$0xff] %v5057
        %s5066 = sand.u32 %s343, 1
        %s5067 = scalar_lea.sflag [#allocation6], %s5066
        %s5068 = sand.u32 %s343, 1
        %s5069 = smul.addr %s5068, 64
        %s5070 = scalar_lea.vmem [#allocation7], %s5069
        // Predicated region
        $region81: #{tpu_custom_call.1} parent=75 // pred_check
          %p5071 = pneg %p353
        $region82: #{tpu_custom_call.1} parent=75 // pred_check_branch
          %5073 = sbr.rel (%p5071) target = $region84
        $region83: #{tpu_custom_call.1} parent=75 // pred_region
          %s5075 = ssub.s32 1024, 1024
          %5076 = vsyncadd %s5067, %s5075
          %s5077 = smul.addr %s31, 8
          %s5078 = smul.addr %s5077, 128
          %s5079 = scalar_lea.hbm %s14, %s5078
          %s5080 = sshll.u32 %s5070, 4
          %s5081 = int_to_ptr.vmem [resolvable:$true] %s5080
          %5086 = dma.vmem_to_hbm [thread:$0]  %s5081, 1024, %s5079, %s5067, 128, 128, 8
        $region84: #{tpu_custom_call.1} parent=75 // pred_fallthru
          _
      $region76: #{tpu_custom_call.1} parent=5 // pred_fallthru
        _
      %p5087 = scmp.le.s32.totalorder 2, %s26
      // Predicated region
      $region85: #{tpu_custom_call.1} parent=5 // pred_check
        %p5088 = pneg %p5087
      $region86: #{tpu_custom_call.1} parent=5 // pred_check_branch
        %5090 = sbr.rel (%p5088) target = $region88
      $region87: #{tpu_custom_call.1} parent=5 // pred_region
        %s5091 = ssub.s32 %s26, 2
        // Predicated region
        $region89: #{tpu_custom_call.1} parent=87 // pred_check
          %p5092 = pneg %p359
        $region90: #{tpu_custom_call.1} parent=87 // pred_check_branch
          %5094 = sbr.rel (%p5092) target = $region92
        $region91: #{tpu_custom_call.1} parent=87 // pred_region
          %s5095 = sand.u32 %s344, 1
          %s5096 = scalar_lea.sflag [#allocation6], %s5095
          %s5097 = sand.u32 %s344, 1
          %s5098 = smul.addr %s5097, 64
          %s5099 = scalar_lea.vmem [#allocation7], %s5098
          %5100 = dma.done %s5096, 1024
        $region92: #{tpu_custom_call.1} parent=87 // pred_fallthru
          _
      $region88: #{tpu_custom_call.1} parent=5 // pred_fallthru
        _
    $region6: #{tpu_custom_call.1} parent=1 // loop_footer
      %s30 = sadd.s32 1, %s26
    $region7: #{tpu_custom_call.1} parent=1 // loop_footer_branch
      %25 = sbr.rel target = $region3
    $region8: #{tpu_custom_call.1} parent=1 // loop_exit
      _
    %5101 = vsyncpa [#allocation5], 1
    %s5102 = scalar_lea.sflag [#allocation5], 1
    %5103 = vsyncpa %s5102, 1
    %5104 = vsyncpa [#allocation6], 1
    %s5105 = scalar_lea.sflag [#allocation6], 1
    %5106 = vsyncpa %s5105, 1

</llo_original>
